<compile_context>
chip_gen: v7x
topology: tpu7x:2x2x1
jax: 0.10.0
libtpu: 0.0.40
codegen_flags: <defaults>
</compile_context>

<pallas_src>
import functools

import jax
import jax.numpy as jnp
from jax import lax
from jax.experimental import pallas as pl
from jax.experimental.pallas import tpu as pltpu

_NEG_BIG = 1e30          # additive mask for non-edges (exp underflows to exactly 0)
_LEAKY_SLOPE = 0.2       # GATConv default negative_slope
_VMEM_LIMIT = 48 * 1024 * 1024


def _compiler_params(semantics):
    return pltpu.CompilerParams(dimension_semantics=semantics,
                                vmem_limit_bytes=_VMEM_LIMIT)


# -----------------------------------------------------------------------------
# Shared in-kernel math: masked multi-head softmax + aggregation
# -----------------------------------------------------------------------------
def _attend(mask_bias, asrc_t, adst, xw_b, bias, *, num_heads, head_dim, apply_relu):
    """mask_bias: (TM, N) f32, 0 on edges / -1e30 on non-edges
       asrc_t:    (H, N)  f32 source-side attention logits (one row per head)
       adst:      (TM, H) f32 destination-side attention logits
       xw_b:      (N, D)  bf16 projected source features, D = H*head_dim
       bias:      (1, D)  f32
    """
    out_dim = num_heads * head_dim
    col = None
    if num_heads > 1:
        col = lax.broadcasted_iota(jnp.int32, (1, out_dim), 1)

    out = None
    for h in range(num_heads):                       # static unroll, H is small
        s = adst[:, h:h + 1] + asrc_t[h:h + 1, :]    # (TM, N) broadcast add
        s = jnp.where(s > 0, s, _LEAKY_SLOPE * s)    # LeakyReLU (edges only matter)
        s = s + mask_bias                            # mask non-edges (additive)
        m = jnp.max(s, axis=1, keepdims=True)        # XLU reduce
        e = jnp.exp(s - m)                           # EUP
        denom = jnp.sum(e, axis=1, keepdims=True)    # XLU reduce
        attn = (e * pl.reciprocal(denom, approx=True)).astype(jnp.bfloat16)
        # Full-width MXU aggregation; select this head's column block afterwards.
        ph = jnp.dot(attn, xw_b, preferred_element_type=jnp.float32)   # (TM, D)
        if out is None:
            out = ph
        else:
            in_head = (col >= h * head_dim) & (col < (h + 1) * head_dim)
            out = jnp.where(in_head, ph, out)

    out = out + bias
    if apply_relu:
        out = jnp.maximum(out, 0.0)
    return out


# -----------------------------------------------------------------------------
# Fused path (small graphs): both GAT layers in one kernel, grid=(1,)
# -----------------------------------------------------------------------------
def _fused_gat2_kernel(x_ref, adj_ref, w0_ref, a0_ref, b0_ref,
                       w1_ref, a1_ref, b1_ref, out_ref,
                       *, heads0, dim0, heads1, dim1):
    adjf = adj_ref[...].astype(jnp.float32)          # int8 0/1 -> f32 (once)
    mask_bias = (adjf - 1.0) * _NEG_BIG              # 0 on edges, -1e30 off-edges

    def layer(x_f32, w_ref, a_ref, b_ref, heads, dim, relu):
        # projection + attention logits: two MXU matmuls, bf16 in / f32 accumulate
        xw = jnp.dot(x_f32.astype(jnp.bfloat16), w_ref[...].astype(jnp.bfloat16),
                     preferred_element_type=jnp.float32)                 # (N, D)
        al = jnp.dot(xw.astype(jnp.bfloat16), a_ref[...].astype(jnp.bfloat16),
                     preferred_element_type=jnp.float32)                 # (N, 2H)
        asrc_t = jnp.transpose(al[:, :heads])        # single transpose per layer
        return _attend(mask_bias, asrc_t, al[:, heads:],
                       xw.astype(jnp.bfloat16), b_ref[...],
                       num_heads=heads, head_dim=dim, apply_relu=relu)

    h0 = layer(x_ref[...], w0_ref, a0_ref, b0_ref, heads0, dim0, True)   # stays in VMEM
    out_ref[...] = layer(h0, w1_ref, a1_ref, b1_ref, heads1, dim1, False)


def gat2_forward_fused(x, adj_i8, p):
    n = x.shape[0]
    d1 = p["b1_2d"].shape[1]
    kernel = functools.partial(_fused_gat2_kernel,
                               heads0=p["heads0"], dim0=p["dim0"],
                               heads1=p["heads1"], dim1=p["dim1"])
    args = (x, adj_i8, p["w0"], p["A0"], p["b0_2d"], p["w1"], p["A1"], p["b1_2d"])

    def full_spec(arr):
        nd = arr.ndim
        return pl.BlockSpec(arr.shape, lambda i, nd=nd: (0,) * nd)

    return pl.pallas_call(
        kernel,
        out_shape=jax.ShapeDtypeStruct((n, d1), jnp.float32),
        grid=(1,),
        in_specs=[full_spec(a) for a in args],
        out_specs=pl.BlockSpec((n, d1), lambda i: (0, 0)),
        compiler_params=_compiler_params(("arbitrary",)),
    )(*args)


# -----------------------------------------------------------------------------
# Tiled path (large graphs): per-layer projection kernel + dst-row-tiled attention
# -----------------------------------------------------------------------------
def _project_kernel(x_ref, w_ref, a_ref, xw_ref, al_ref):
    xw = jnp.dot(x_ref[...].astype(jnp.bfloat16), w_ref[...].astype(jnp.bfloat16),
                 preferred_element_type=jnp.float32)
    al_ref[...] = jnp.dot(xw.astype(jnp.bfloat16), a_ref[...].astype(jnp.bfloat16),
                          preferred_element_type=jnp.float32)
    xw_ref[...] = xw.astype(jnp.bfloat16)


def _attend_kernel(adj_ref, asrct_ref, adst_ref, xw_ref, b_ref, out_ref,
                   *, num_heads, head_dim, apply_relu):
    adjf = adj_ref[...].astype(jnp.float32)
    mask_bias = (adjf - 1.0) * _NEG_BIG
    out_ref[...] = _attend(mask_bias, asrct_ref[...], adst_ref[...], xw_ref[...],
                           b_ref[...], num_heads=num_heads, head_dim=head_dim,
                           apply_relu=apply_relu)


def _gat_layer_tiled(x, adj_i8, w, a_mat, bias_2d, *, num_heads, head_dim,
                     apply_relu, tile_m):
    n_pad, f_in = x.shape
    d = num_heads * head_dim
    n_tiles = n_pad // tile_m

    # Stage 1: projection + attention logits (row-tiled, fully parallel).
    xw_b, al = pl.pallas_call(
        _project_kernel,
        out_shape=(jax.ShapeDtypeStruct((n_pad, d), jnp.bfloat16),
                   jax.ShapeDtypeStruct((n_pad, 2 * num_heads), jnp.float32)),
        grid=(n_tiles,),
        in_specs=[pl.BlockSpec((tile_m, f_in), lambda t: (t, 0)),
                  pl.BlockSpec(w.shape, lambda t: (0, 0)),
                  pl.BlockSpec(a_mat.shape, lambda t: (0, 0))],
        out_specs=(pl.BlockSpec((tile_m, d), lambda t: (t, 0)),
                   pl.BlockSpec((tile_m, 2 * num_heads), lambda t: (t, 0))),
        compiler_params=_compiler_params(("parallel",)),
    )(x, w, a_mat)

    # Wrapper-side layout plumbing (XLA): source logits lane-dense as (H, N).
    asrc_t = jnp.transpose(al[:, :num_heads])        # (H, N_pad)
    adst = al[:, num_heads:]                         # (N_pad, H)

    # Stage 2: masked softmax + aggregation, adjacency streamed per dst tile.
    kernel = functools.partial(_attend_kernel, num_heads=num_heads,
                               head_dim=head_dim, apply_relu=apply_relu)
    return pl.pallas_call(
        kernel,
        out_shape=jax.ShapeDtypeStruct((n_pad, d), jnp.float32),
        grid=(n_tiles,),
        in_specs=[pl.BlockSpec((tile_m, n_pad), lambda t: (t, 0)),       # adj (int8)
                  pl.BlockSpec((num_heads, n_pad), lambda t: (0, 0)),    # asrc_t
                  pl.BlockSpec((tile_m, num_heads), lambda t: (t, 0)),   # adst tile
                  pl.BlockSpec((n_pad, d), lambda t: (0, 0)),            # xw (bf16)
                  pl.BlockSpec((1, d), lambda t: (0, 0))],               # bias
        out_specs=pl.BlockSpec((tile_m, d), lambda t: (t, 0)),
        compiler_params=_compiler_params(("parallel",)),
    )(adj_i8, asrc_t, adst, xw_b, bias_2d)


def gat2_forward_tiled(x, adj_i8, p, *, tile_m=128):
    n = x.shape[0]
    n_pad = pl.cdiv(n, tile_m) * tile_m
    if n_pad != n:          # padded rows have zero adjacency; sliced off at the end
        x = jnp.pad(x, ((0, n_pad - n), (0, 0)))
        adj_i8 = jnp.pad(adj_i8, ((0, n_pad - n), (0, n_pad - n)))
    h0 = _gat_layer_tiled(x, adj_i8, p["w0"], p["A0"], p["b0_2d"],
                          num_heads=p["heads0"], head_dim=p["dim0"],
                          apply_relu=True, tile_m=tile_m)
    h1 = _gat_layer_tiled(h0, adj_i8, p["w1"], p["A1"], p["b1_2d"],
                          num_heads=p["heads1"], head_dim=p["dim1"],
                          apply_relu=False, tile_m=tile_m)
    return h1[:n]


# -----------------------------------------------------------------------------
# Parameter packing + top-level forward
# -----------------------------------------------------------------------------
def prepare_params(raw):
    """Build the block-diagonal (D, 2H) attention matrices so per-head alphas come
    out of ONE MXU matmul: columns [0:H] -> alpha_src, [H:2H] -> alpha_dst."""
    def att_matrix(att_src, att_dst):
        h, f = att_src.shape
        a = jnp.zeros((h * f, 2 * h), jnp.float32)
        for i in range(h):
            a = a.at[i * f:(i + 1) * f, i].set(att_src[i])
            a = a.at[i * f:(i + 1) * f, h + i].set(att_dst[i])
        return a

    h0, f0 = raw["att_src0"].shape
    h1, f1 = raw["att_src1"].shape
    return dict(
        w0=raw["w0"], A0=att_matrix(raw["att_src0"], raw["att_dst0"]),
        b0_2d=raw["b0"].reshape(1, -1),
        w1=raw["w1"], A1=att_matrix(raw["att_src1"], raw["att_dst1"]),
        b1_2d=raw["b1"].reshape(1, -1),
        heads0=h0, dim0=f0, heads1=h1, dim1=f1)


def link_level_gat_forward(x, adj_i8, raw_params, *, mode="auto",
                           fused_max_nodes=1024, tile_m=128):
    """adj_i8[i, j] = 1 iff there is a message edge j -> i (self-loops included,
    matching GATConv's add_self_loops=True); edge_type is ignored by GATConv;
    dropout is identity in eval."""
    p = prepare_params(raw_params)
    n = x.shape[0]
    if mode == "auto":
        mode = "fused" if n <= fused_max_nodes else "tiled"
    if mode == "fused":
        return gat2_forward_fused(x, adj_i8, p)
    return gat2_forward_tiled(x, adj_i8, p, tile_m=tile_m)


# -----------------------------------------------------------------------------
# Numerics-matched pure-JAX reference (same bf16 MXU policy, exact divide)
# -----------------------------------------------------------------------------
def _gat_layer_ref(x, adj_i8, w, att_src, att_dst, bias, *, apply_relu):
    num_heads, head_dim = att_src.shape
    bf16 = jnp.bfloat16
    xw = jnp.dot(x.astype(bf16), w.astype(bf16), preferred_element_type=jnp.float32)
    adjf = adj_i8.astype(jnp.float32)
    mask_bias = (adjf - 1.0) * _NEG_BIG
    xw_b = xw.astype(bf16)
    cols = []
    for h in range(num_heads):
        xh = xw[:, h * head_dim:(h + 1) * head_dim]
        a_src = jnp.dot(xh.astype(bf16), att_src[h].astype(bf16),
                        preferred_element_type=jnp.float32)
        a_dst = jnp.dot(xh.astype(bf16), att_dst[h].astype(bf16),
                        preferred_element_type=jnp.float32)
        s = a_dst[:, None] + a_src[None, :]
        s = jnp.where(s > 0, s, _LEAKY_SLOPE * s)
        s = s + mask_bias
        m = jnp.max(s, axis=1, keepdims=True)
        e = jnp.exp(s - m)
        attn = (e / jnp.sum(e, axis=1, keepdims=True)).astype(bf16)
        ph = jnp.dot(attn, xw_b, preferred_element_type=jnp.float32)
        cols.append(ph[:, h * head_dim:(h + 1) * head_dim])
    out = jnp.concatenate(cols, axis=1) + bias[None, :]
    return jnp.maximum(out, 0.0) if apply_relu else out


def gat2_forward_ref(x, adj_i8, raw):
    h0 = _gat_layer_ref(x, adj_i8, raw["w0"], raw["att_src0"], raw["att_dst0"],
                        raw["b0"], apply_relu=True)
    return _gat_layer_ref(h0, adj_i8, raw["w1"], raw["att_src1"], raw["att_dst1"],
                          raw["b1"], apply_relu=False)


# -----------------------------------------------------------------------------
if __name__ == "__main__":
    IN_CHANNELS = 64      # scaled-down node-embedding dim
    HIDDEN = 32           # scaled-down hidden_channels
    NUM_HEADS = 4
    HEAD_DIM0 = HIDDEN // NUM_HEADS

    key = jax.random.PRNGKey(0)
    kp = jax.random.split(key, 10)

    def glorot(k, shape):
        fan_in, fan_out = shape[-2], shape[-1]
        s = jnp.sqrt(6.0 / (fan_in + fan_out))
        return jax.random.uniform(k, shape, jnp.float32, -s, s)

    raw_params = {
        # Layer 0: GATConv(IN_CHANNELS, HIDDEN // HEADS, heads=HEADS)
        "w0": glorot(kp[0], (IN_CHANNELS, HIDDEN)),
        "att_src0": glorot(kp[1], (NUM_HEADS, HEAD_DIM0)),
        "att_dst0": glorot(kp[2], (NUM_HEADS, HEAD_DIM0)),
        "b0": 0.1 * jax.random.normal(kp[3], (HIDDEN,), jnp.float32),
        # Layer 1 (final): GATConv(HIDDEN, HIDDEN, heads=1), no activation
        "w1": glorot(kp[4], (HIDDEN, HIDDEN)),
        "att_src1": glorot(kp[5], (1, HIDDEN)),
        "att_dst1": glorot(kp[6], (1, HIDDEN)),
        "b1": 0.1 * jax.random.normal(kp[7], (HIDDEN,), jnp.float32),
    }

    def make_graph(k, n, num_edges):
        k1, k2, k3 = jax.random.split(k, 3)
        xg = jax.random.normal(k1, (n, IN_CHANNELS), dtype=jnp.float32)
        src = jax.random.randint(k2, (num_edges,), 0, n)
        dst = jax.random.randint(k3, (num_edges,), 0, n)
        adj = jnp.zeros((n, n), jnp.int8)
        adj = adj.at[dst, src].set(1)                        # message j -> i
        adj = adj.at[jnp.arange(n), jnp.arange(n)].set(1)    # self-loops
        return xg, adj

    # Small graph -> fused single-kernel path (adjacency DMA'd once, h0 stays in VMEM).
    x_s, adj_s = make_graph(kp[8], 128, 512)
    out_s = jax.block_until_ready(
        link_level_gat_forward(x_s, adj_s, raw_params, mode="auto"))
    ref_s = gat2_forward_ref(x_s, adj_s, raw_params)
    assert out_s.shape == (128, HIDDEN)
    assert jnp.allclose(out_s, ref_s, rtol=3e-2, atol=3e-2), \
        float(jnp.max(jnp.abs(out_s - ref_s)))

    # Larger graph -> per-layer dst-tiled path (adjacency streamed as int8 tiles,
    # N padded 320 -> 384 for TM=128; padded rows are masked out and sliced off).
    x_l, adj_l = make_graph(kp[9], 320, 1280)
    out_l = jax.block_until_ready(
        link_level_gat_forward(x_l, adj_l, raw_params, mode="tiled", tile_m=128))
    ref_l = gat2_forward_ref(x_l, adj_l, raw_params)
    assert out_l.shape == (320, HIDDEN)
    assert jnp.allclose(out_l, ref_l, rtol=3e-2, atol=3e-2), \
        float(jnp.max(jnp.abs(out_l - ref_l)))

    print("KERNEL_OK")
</pallas_src>

<mosaic_0001>
module attributes {stable_mosaic.version = 11 : i64} {
  func.func @_fused_gat2_kernel(%arg0: i32, %arg1: memref<128x64xf32, #tpu.memory_space<vmem>>, %arg2: memref<128x128xi8, #tpu.memory_space<vmem>>, %arg3: memref<64x32xf32, #tpu.memory_space<vmem>>, %arg4: memref<32x8xf32, #tpu.memory_space<vmem>>, %arg5: memref<1x32xf32, #tpu.memory_space<vmem>>, %arg6: memref<32x32xf32, #tpu.memory_space<vmem>>, %arg7: memref<32x2xf32, #tpu.memory_space<vmem>>, %arg8: memref<1x32xf32, #tpu.memory_space<vmem>>, %arg9: memref<128x32xf32, #tpu.memory_space<vmem>>) attributes {dimension_semantics = [#tpu.dimension_semantics<arbitrary>], iteration_bounds = array<i64: 1>, scalar_prefetch = 0 : i64, scratch_operands = 0 : i64, tpu.core_type = #tpu.core_type<tc>, window_params = [{pipeline_mode = #tpu.pipeline_mode<synchronous>, transform_indices = @transform_0, window_bounds = array<i64: 128, 64>}, {pipeline_mode = #tpu.pipeline_mode<synchronous>, transform_indices = @transform_1, window_bounds = array<i64: 128, 128>}, {pipeline_mode = #tpu.pipeline_mode<synchronous>, transform_indices = @transform_2, window_bounds = array<i64: 64, 32>}, {pipeline_mode = #tpu.pipeline_mode<synchronous>, transform_indices = @transform_3, window_bounds = array<i64: 32, 8>}, {pipeline_mode = #tpu.pipeline_mode<synchronous>, transform_indices = @transform_4, window_bounds = array<i64: 1, 32>}, {pipeline_mode = #tpu.pipeline_mode<synchronous>, transform_indices = @transform_5, window_bounds = array<i64: 32, 32>}, {pipeline_mode = #tpu.pipeline_mode<synchronous>, transform_indices = @transform_6, window_bounds = array<i64: 32, 2>}, {pipeline_mode = #tpu.pipeline_mode<synchronous>, transform_indices = @transform_7, window_bounds = array<i64: 1, 32>}, {pipeline_mode = #tpu.pipeline_mode<synchronous>, transform_indices = @transform_8, window_bounds = array<i64: 128, 32>}]} {
    %c0 = arith.constant 0 : index
    %c0_0 = arith.constant 0 : index
    %0 = vector.load %arg2[%c0, %c0_0] : memref<128x128xi8, #tpu.memory_space<vmem>>, vector<128x128xi8>
    %1 = arith.sitofp %0 : vector<128x128xi8> to vector<128x128xf32>
    %cst = arith.constant 1.000000e+00 : f32
    %2 = vector.broadcast %cst : f32 to vector<128x128xf32>
    %3 = arith.subf %1, %2 : vector<128x128xf32>
    %cst_1 = arith.constant 1.000000e+30 : f32
    %4 = vector.broadcast %cst_1 : f32 to vector<128x128xf32>
    %5 = arith.mulf %3, %4 : vector<128x128xf32>
    %c0_2 = arith.constant 0 : index
    %c0_3 = arith.constant 0 : index
    %6 = vector.load %arg1[%c0_2, %c0_3] : memref<128x64xf32, #tpu.memory_space<vmem>>, vector<128x64xf32>
    %7 = arith.truncf %6 : vector<128x64xf32> to vector<128x64xbf16>
    %c0_4 = arith.constant 0 : index
    %c0_5 = arith.constant 0 : index
    %8 = vector.load %arg3[%c0_4, %c0_5] : memref<64x32xf32, #tpu.memory_space<vmem>>, vector<64x32xf32>
    %9 = arith.truncf %8 : vector<64x32xf32> to vector<64x32xbf16>
    %cst_6 = arith.constant dense<0.000000e+00> : vector<128x32xf32>
    %10 = tpu.matmul %7, %9, %cst_6 {dimension_numbers = #tpu.dot_dimension_numbers<[1], [0], [0], [1], [0, 0, 1, 1], [], []>} : vector<128x64xbf16>, vector<64x32xbf16>, vector<128x32xf32> -> vector<128x32xf32>
    %11 = arith.truncf %10 : vector<128x32xf32> to vector<128x32xbf16>
    %c0_7 = arith.constant 0 : index
    %c0_8 = arith.constant 0 : index
    %12 = vector.load %arg4[%c0_7, %c0_8] : memref<32x8xf32, #tpu.memory_space<vmem>>, vector<32x8xf32>
    %13 = arith.truncf %12 : vector<32x8xf32> to vector<32x8xbf16>
    %cst_9 = arith.constant dense<0.000000e+00> : vector<128x8xf32>
    %14 = tpu.matmul %11, %13, %cst_9 {dimension_numbers = #tpu.dot_dimension_numbers<[1], [0], [0], [1], [0, 0, 1, 1], [], []>} : vector<128x32xbf16>, vector<32x8xbf16>, vector<128x8xf32> -> vector<128x8xf32>
    %15 = vector.extract_strided_slice %14 {offsets = [0, 0], sizes = [128, 4], strides = [1, 1]} : vector<128x8xf32> to vector<128x4xf32>
    %16 = tpu.transpose %15, [1, 0] : vector<128x4xf32> -> vector<4x128xf32>
    %17 = vector.extract_strided_slice %14 {offsets = [0, 4], sizes = [128, 4], strides = [1, 1]} : vector<128x8xf32> to vector<128x4xf32>
    %18 = arith.truncf %10 : vector<128x32xf32> to vector<128x32xbf16>
    %c0_10 = arith.constant 0 : index
    %c0_11 = arith.constant 0 : index
    %19 = vector.load %arg5[%c0_10, %c0_11] : memref<1x32xf32, #tpu.memory_space<vmem>>, vector<1x32xf32>
    %20 = tpu.iota {dimensions = array<i32: 1>} : vector<1x32xi32>
    %21 = vector.extract_strided_slice %17 {offsets = [0, 0], sizes = [128, 1], strides = [1, 1]} : vector<128x4xf32> to vector<128x1xf32>
    %22 = vector.extract_strided_slice %16 {offsets = [0, 0], sizes = [1, 128], strides = [1, 1]} : vector<4x128xf32> to vector<1x128xf32>
    %23 = vector.broadcast %21 : vector<128x1xf32> to vector<128x128xf32>
    %24 = vector.broadcast %22 : vector<1x128xf32> to vector<128x128xf32>
    %25 = arith.addf %23, %24 : vector<128x128xf32>
    %cst_12 = arith.constant 0.000000e+00 : f32
    %26 = vector.broadcast %cst_12 : f32 to vector<128x128xf32>
    %27 = arith.cmpf ogt, %25, %26 : vector<128x128xf32>
    %cst_13 = arith.constant 2.000000e-01 : f32
    %28 = vector.broadcast %cst_13 : f32 to vector<128x128xf32>
    %29 = arith.mulf %28, %25 : vector<128x128xf32>
    %30 = arith.select %27, %25, %29 : vector<128x128xi1>, vector<128x128xf32>
    %31 = arith.addf %30, %5 : vector<128x128xf32>
    %cst_14 = arith.constant dense<0xFF800000> : vector<128xf32>
    %32 = vector.multi_reduction <maximumf>, %31, %cst_14 [1] : vector<128x128xf32> to vector<128xf32>
    %33 = vector.shape_cast %32 : vector<128xf32> to vector<128x1xf32>
    %34 = vector.broadcast %33 : vector<128x1xf32> to vector<128x128xf32>
    %35 = arith.subf %31, %34 : vector<128x128xf32>
    %36 = math.exp %35 : vector<128x128xf32>
    %cst_15 = arith.constant dense<0.000000e+00> : vector<128xf32>
    %37 = vector.multi_reduction <add>, %36, %cst_15 [1] : vector<128x128xf32> to vector<128xf32>
    %38 = vector.shape_cast %37 : vector<128xf32> to vector<128x1xf32>
    %39 = tpu.reciprocal %38 {approx = true} : vector<128x1xf32> -> vector<128x1xf32>
    %40 = vector.broadcast %39 : vector<128x1xf32> to vector<128x128xf32>
    %41 = arith.mulf %36, %40 : vector<128x128xf32>
    %42 = arith.truncf %41 : vector<128x128xf32> to vector<128x128xbf16>
    %cst_16 = arith.constant dense<0.000000e+00> : vector<128x32xf32>
    %43 = tpu.matmul %42, %18, %cst_16 {dimension_numbers = #tpu.dot_dimension_numbers<[1], [0], [0], [1], [0, 0, 1, 1], [], []>} : vector<128x128xbf16>, vector<128x32xbf16>, vector<128x32xf32> -> vector<128x32xf32>
    %44 = vector.extract_strided_slice %17 {offsets = [0, 1], sizes = [128, 1], strides = [1, 1]} : vector<128x4xf32> to vector<128x1xf32>
    %45 = vector.extract_strided_slice %16 {offsets = [1, 0], sizes = [1, 128], strides = [1, 1]} : vector<4x128xf32> to vector<1x128xf32>
    %46 = vector.broadcast %44 : vector<128x1xf32> to vector<128x128xf32>
    %47 = vector.broadcast %45 : vector<1x128xf32> to vector<128x128xf32>
    %48 = arith.addf %46, %47 : vector<128x128xf32>
    %cst_17 = arith.constant 0.000000e+00 : f32
    %49 = vector.broadcast %cst_17 : f32 to vector<128x128xf32>
    %50 = arith.cmpf ogt, %48, %49 : vector<128x128xf32>
    %cst_18 = arith.constant 2.000000e-01 : f32
    %51 = vector.broadcast %cst_18 : f32 to vector<128x128xf32>
    %52 = arith.mulf %51, %48 : vector<128x128xf32>
    %53 = arith.select %50, %48, %52 : vector<128x128xi1>, vector<128x128xf32>
    %54 = arith.addf %53, %5 : vector<128x128xf32>
    %cst_19 = arith.constant dense<0xFF800000> : vector<128xf32>
    %55 = vector.multi_reduction <maximumf>, %54, %cst_19 [1] : vector<128x128xf32> to vector<128xf32>
    %56 = vector.shape_cast %55 : vector<128xf32> to vector<128x1xf32>
    %57 = vector.broadcast %56 : vector<128x1xf32> to vector<128x128xf32>
    %58 = arith.subf %54, %57 : vector<128x128xf32>
    %59 = math.exp %58 : vector<128x128xf32>
    %cst_20 = arith.constant dense<0.000000e+00> : vector<128xf32>
    %60 = vector.multi_reduction <add>, %59, %cst_20 [1] : vector<128x128xf32> to vector<128xf32>
    %61 = vector.shape_cast %60 : vector<128xf32> to vector<128x1xf32>
    %62 = tpu.reciprocal %61 {approx = true} : vector<128x1xf32> -> vector<128x1xf32>
    %63 = vector.broadcast %62 : vector<128x1xf32> to vector<128x128xf32>
    %64 = arith.mulf %59, %63 : vector<128x128xf32>
    %65 = arith.truncf %64 : vector<128x128xf32> to vector<128x128xbf16>
    %cst_21 = arith.constant dense<0.000000e+00> : vector<128x32xf32>
    %66 = tpu.matmul %65, %18, %cst_21 {dimension_numbers = #tpu.dot_dimension_numbers<[1], [0], [0], [1], [0, 0, 1, 1], [], []>} : vector<128x128xbf16>, vector<128x32xbf16>, vector<128x32xf32> -> vector<128x32xf32>
    %c8_i32 = arith.constant 8 : i32
    %67 = vector.broadcast %c8_i32 : i32 to vector<1x32xi32>
    %68 = arith.cmpi sge, %20, %67 : vector<1x32xi32>
    %c16_i32 = arith.constant 16 : i32
    %69 = vector.broadcast %c16_i32 : i32 to vector<1x32xi32>
    %70 = arith.cmpi slt, %20, %69 : vector<1x32xi32>
    %71 = arith.andi %68, %70 : vector<1x32xi1>
    %72 = vector.shape_cast %71 : vector<1x32xi1> to vector<1x32xi1>
    %73 = vector.broadcast %72 : vector<1x32xi1> to vector<128x32xi1>
    %74 = arith.select %73, %66, %43 : vector<128x32xi1>, vector<128x32xf32>
    %75 = vector.extract_strided_slice %17 {offsets = [0, 2], sizes = [128, 1], strides = [1, 1]} : vector<128x4xf32> to vector<128x1xf32>
    %76 = vector.extract_strided_slice %16 {offsets = [2, 0], sizes = [1, 128], strides = [1, 1]} : vector<4x128xf32> to vector<1x128xf32>
    %77 = vector.broadcast %75 : vector<128x1xf32> to vector<128x128xf32>
    %78 = vector.broadcast %76 : vector<1x128xf32> to vector<128x128xf32>
    %79 = arith.addf %77, %78 : vector<128x128xf32>
    %cst_22 = arith.constant 0.000000e+00 : f32
    %80 = vector.broadcast %cst_22 : f32 to vector<128x128xf32>
    %81 = arith.cmpf ogt, %79, %80 : vector<128x128xf32>
    %cst_23 = arith.constant 2.000000e-01 : f32
    %82 = vector.broadcast %cst_23 : f32 to vector<128x128xf32>
    %83 = arith.mulf %82, %79 : vector<128x128xf32>
    %84 = arith.select %81, %79, %83 : vector<128x128xi1>, vector<128x128xf32>
    %85 = arith.addf %84, %5 : vector<128x128xf32>
    %cst_24 = arith.constant dense<0xFF800000> : vector<128xf32>
    %86 = vector.multi_reduction <maximumf>, %85, %cst_24 [1] : vector<128x128xf32> to vector<128xf32>
    %87 = vector.shape_cast %86 : vector<128xf32> to vector<128x1xf32>
    %88 = vector.broadcast %87 : vector<128x1xf32> to vector<128x128xf32>
    %89 = arith.subf %85, %88 : vector<128x128xf32>
    %90 = math.exp %89 : vector<128x128xf32>
    %cst_25 = arith.constant dense<0.000000e+00> : vector<128xf32>
    %91 = vector.multi_reduction <add>, %90, %cst_25 [1] : vector<128x128xf32> to vector<128xf32>
    %92 = vector.shape_cast %91 : vector<128xf32> to vector<128x1xf32>
    %93 = tpu.reciprocal %92 {approx = true} : vector<128x1xf32> -> vector<128x1xf32>
    %94 = vector.broadcast %93 : vector<128x1xf32> to vector<128x128xf32>
    %95 = arith.mulf %90, %94 : vector<128x128xf32>
    %96 = arith.truncf %95 : vector<128x128xf32> to vector<128x128xbf16>
    %cst_26 = arith.constant dense<0.000000e+00> : vector<128x32xf32>
    %97 = tpu.matmul %96, %18, %cst_26 {dimension_numbers = #tpu.dot_dimension_numbers<[1], [0], [0], [1], [0, 0, 1, 1], [], []>} : vector<128x128xbf16>, vector<128x32xbf16>, vector<128x32xf32> -> vector<128x32xf32>
    %c16_i32_27 = arith.constant 16 : i32
    %98 = vector.broadcast %c16_i32_27 : i32 to vector<1x32xi32>
    %99 = arith.cmpi sge, %20, %98 : vector<1x32xi32>
    %c24_i32 = arith.constant 24 : i32
    %100 = vector.broadcast %c24_i32 : i32 to vector<1x32xi32>
    %101 = arith.cmpi slt, %20, %100 : vector<1x32xi32>
    %102 = arith.andi %99, %101 : vector<1x32xi1>
    %103 = vector.shape_cast %102 : vector<1x32xi1> to vector<1x32xi1>
    %104 = vector.broadcast %103 : vector<1x32xi1> to vector<128x32xi1>
    %105 = arith.select %104, %97, %74 : vector<128x32xi1>, vector<128x32xf32>
    %106 = vector.extract_strided_slice %17 {offsets = [0, 3], sizes = [128, 1], strides = [1, 1]} : vector<128x4xf32> to vector<128x1xf32>
    %107 = vector.extract_strided_slice %16 {offsets = [3, 0], sizes = [1, 128], strides = [1, 1]} : vector<4x128xf32> to vector<1x128xf32>
    %108 = vector.broadcast %106 : vector<128x1xf32> to vector<128x128xf32>
    %109 = vector.broadcast %107 : vector<1x128xf32> to vector<128x128xf32>
    %110 = arith.addf %108, %109 : vector<128x128xf32>
    %cst_28 = arith.constant 0.000000e+00 : f32
    %111 = vector.broadcast %cst_28 : f32 to vector<128x128xf32>
    %112 = arith.cmpf ogt, %110, %111 : vector<128x128xf32>
    %cst_29 = arith.constant 2.000000e-01 : f32
    %113 = vector.broadcast %cst_29 : f32 to vector<128x128xf32>
    %114 = arith.mulf %113, %110 : vector<128x128xf32>
    %115 = arith.select %112, %110, %114 : vector<128x128xi1>, vector<128x128xf32>
    %116 = arith.addf %115, %5 : vector<128x128xf32>
    %cst_30 = arith.constant dense<0xFF800000> : vector<128xf32>
    %117 = vector.multi_reduction <maximumf>, %116, %cst_30 [1] : vector<128x128xf32> to vector<128xf32>
    %118 = vector.shape_cast %117 : vector<128xf32> to vector<128x1xf32>
    %119 = vector.broadcast %118 : vector<128x1xf32> to vector<128x128xf32>
    %120 = arith.subf %116, %119 : vector<128x128xf32>
    %121 = math.exp %120 : vector<128x128xf32>
    %cst_31 = arith.constant dense<0.000000e+00> : vector<128xf32>
    %122 = vector.multi_reduction <add>, %121, %cst_31 [1] : vector<128x128xf32> to vector<128xf32>
    %123 = vector.shape_cast %122 : vector<128xf32> to vector<128x1xf32>
    %124 = tpu.reciprocal %123 {approx = true} : vector<128x1xf32> -> vector<128x1xf32>
    %125 = vector.broadcast %124 : vector<128x1xf32> to vector<128x128xf32>
    %126 = arith.mulf %121, %125 : vector<128x128xf32>
    %127 = arith.truncf %126 : vector<128x128xf32> to vector<128x128xbf16>
    %cst_32 = arith.constant dense<0.000000e+00> : vector<128x32xf32>
    %128 = tpu.matmul %127, %18, %cst_32 {dimension_numbers = #tpu.dot_dimension_numbers<[1], [0], [0], [1], [0, 0, 1, 1], [], []>} : vector<128x128xbf16>, vector<128x32xbf16>, vector<128x32xf32> -> vector<128x32xf32>
    %c24_i32_33 = arith.constant 24 : i32
    %129 = vector.broadcast %c24_i32_33 : i32 to vector<1x32xi32>
    %130 = arith.cmpi sge, %20, %129 : vector<1x32xi32>
    %c32_i32 = arith.constant 32 : i32
    %131 = vector.broadcast %c32_i32 : i32 to vector<1x32xi32>
    %132 = arith.cmpi slt, %20, %131 : vector<1x32xi32>
    %133 = arith.andi %130, %132 : vector<1x32xi1>
    %134 = vector.shape_cast %133 : vector<1x32xi1> to vector<1x32xi1>
    %135 = vector.broadcast %134 : vector<1x32xi1> to vector<128x32xi1>
    %136 = arith.select %135, %128, %105 : vector<128x32xi1>, vector<128x32xf32>
    %137 = vector.broadcast %19 : vector<1x32xf32> to vector<128x32xf32>
    %138 = arith.addf %136, %137 : vector<128x32xf32>
    %cst_34 = arith.constant 0.000000e+00 : f32
    %139 = vector.broadcast %cst_34 : f32 to vector<128x32xf32>
    %140 = arith.maximumf %138, %139 : vector<128x32xf32>
    %141 = arith.truncf %140 : vector<128x32xf32> to vector<128x32xbf16>
    %c0_35 = arith.constant 0 : index
    %c0_36 = arith.constant 0 : index
    %142 = vector.load %arg6[%c0_35, %c0_36] : memref<32x32xf32, #tpu.memory_space<vmem>>, vector<32x32xf32>
    %143 = arith.truncf %142 : vector<32x32xf32> to vector<32x32xbf16>
    %cst_37 = arith.constant dense<0.000000e+00> : vector<128x32xf32>
    %144 = tpu.matmul %141, %143, %cst_37 {dimension_numbers = #tpu.dot_dimension_numbers<[1], [0], [0], [1], [0, 0, 1, 1], [], []>} : vector<128x32xbf16>, vector<32x32xbf16>, vector<128x32xf32> -> vector<128x32xf32>
    %145 = arith.truncf %144 : vector<128x32xf32> to vector<128x32xbf16>
    %c0_38 = arith.constant 0 : index
    %c0_39 = arith.constant 0 : index
    %146 = vector.load %arg7[%c0_38, %c0_39] : memref<32x2xf32, #tpu.memory_space<vmem>>, vector<32x2xf32>
    %147 = arith.truncf %146 : vector<32x2xf32> to vector<32x2xbf16>
    %cst_40 = arith.constant dense<0.000000e+00> : vector<128x2xf32>
    %148 = tpu.matmul %145, %147, %cst_40 {dimension_numbers = #tpu.dot_dimension_numbers<[1], [0], [0], [1], [0, 0, 1, 1], [], []>} : vector<128x32xbf16>, vector<32x2xbf16>, vector<128x2xf32> -> vector<128x2xf32>
    %149 = vector.extract_strided_slice %148 {offsets = [0, 0], sizes = [128, 1], strides = [1, 1]} : vector<128x2xf32> to vector<128x1xf32>
    %150 = tpu.transpose %149, [1, 0] : vector<128x1xf32> -> vector<1x128xf32>
    %151 = vector.extract_strided_slice %148 {offsets = [0, 1], sizes = [128, 1], strides = [1, 1]} : vector<128x2xf32> to vector<128x1xf32>
    %152 = arith.truncf %144 : vector<128x32xf32> to vector<128x32xbf16>
    %c0_41 = arith.constant 0 : index
    %c0_42 = arith.constant 0 : index
    %153 = vector.load %arg8[%c0_41, %c0_42] : memref<1x32xf32, #tpu.memory_space<vmem>>, vector<1x32xf32>
    %154 = vector.broadcast %151 : vector<128x1xf32> to vector<128x128xf32>
    %155 = vector.broadcast %150 : vector<1x128xf32> to vector<128x128xf32>
    %156 = arith.addf %154, %155 : vector<128x128xf32>
    %cst_43 = arith.constant 0.000000e+00 : f32
    %157 = vector.broadcast %cst_43 : f32 to vector<128x128xf32>
    %158 = arith.cmpf ogt, %156, %157 : vector<128x128xf32>
    %cst_44 = arith.constant 2.000000e-01 : f32
    %159 = vector.broadcast %cst_44 : f32 to vector<128x128xf32>
    %160 = arith.mulf %159, %156 : vector<128x128xf32>
    %161 = arith.select %158, %156, %160 : vector<128x128xi1>, vector<128x128xf32>
    %162 = arith.addf %161, %5 : vector<128x128xf32>
    %cst_45 = arith.constant dense<0xFF800000> : vector<128xf32>
    %163 = vector.multi_reduction <maximumf>, %162, %cst_45 [1] : vector<128x128xf32> to vector<128xf32>
    %164 = vector.shape_cast %163 : vector<128xf32> to vector<128x1xf32>
    %165 = vector.broadcast %164 : vector<128x1xf32> to vector<128x128xf32>
    %166 = arith.subf %162, %165 : vector<128x128xf32>
    %167 = math.exp %166 : vector<128x128xf32>
    %cst_46 = arith.constant dense<0.000000e+00> : vector<128xf32>
    %168 = vector.multi_reduction <add>, %167, %cst_46 [1] : vector<128x128xf32> to vector<128xf32>
    %169 = vector.shape_cast %168 : vector<128xf32> to vector<128x1xf32>
    %170 = tpu.reciprocal %169 {approx = true} : vector<128x1xf32> -> vector<128x1xf32>
    %171 = vector.broadcast %170 : vector<128x1xf32> to vector<128x128xf32>
    %172 = arith.mulf %167, %171 : vector<128x128xf32>
    %173 = arith.truncf %172 : vector<128x128xf32> to vector<128x128xbf16>
    %cst_47 = arith.constant dense<0.000000e+00> : vector<128x32xf32>
    %174 = tpu.matmul %173, %152, %cst_47 {dimension_numbers = #tpu.dot_dimension_numbers<[1], [0], [0], [1], [0, 0, 1, 1], [], []>} : vector<128x128xbf16>, vector<128x32xbf16>, vector<128x32xf32> -> vector<128x32xf32>
    %175 = vector.broadcast %153 : vector<1x32xf32> to vector<128x32xf32>
    %176 = arith.addf %174, %175 : vector<128x32xf32>
    %c0_48 = arith.constant 0 : index
    %c0_49 = arith.constant 0 : index
    %177 = vector.load %arg9[%c0_48, %c0_49] : memref<128x32xf32, #tpu.memory_space<vmem>>, vector<128x32xf32>
    tpu.vector_store %arg9[%c0_48, %c0_49], %176 {strides = array<i32>} : memref<128x32xf32, #tpu.memory_space<vmem>>, vector<128x32xf32>,
    return
  }
  func.func @transform_0(%arg0: i32) -> (i32, i32) {
    %c0_i32 = arith.constant 0 : i32
    %c0_i32_0 = arith.constant 0 : i32
    %c0_i32_1 = arith.constant 0 : i32
    return %c0_i32, %c0_i32_0 : i32, i32
  }
  func.func @transform_1(%arg0: i32) -> (i32, i32) {
    %c0_i32 = arith.constant 0 : i32
    %c0_i32_0 = arith.constant 0 : i32
    %c0_i32_1 = arith.constant 0 : i32
    return %c0_i32, %c0_i32_0 : i32, i32
  }
  func.func @transform_2(%arg0: i32) -> (i32, i32) {
    %c0_i32 = arith.constant 0 : i32
    %c0_i32_0 = arith.constant 0 : i32
    %c0_i32_1 = arith.constant 0 : i32
    return %c0_i32, %c0_i32_0 : i32, i32
  }
  func.func @transform_3(%arg0: i32) -> (i32, i32) {
    %c0_i32 = arith.constant 0 : i32
    %c0_i32_0 = arith.constant 0 : i32
    %c0_i32_1 = arith.constant 0 : i32
    return %c0_i32, %c0_i32_0 : i32, i32
  }
  func.func @transform_4(%arg0: i32) -> (i32, i32) {
    %c0_i32 = arith.constant 0 : i32
    %c0_i32_0 = arith.constant 0 : i32
    %c0_i32_1 = arith.constant 0 : i32
    return %c0_i32, %c0_i32_0 : i32, i32
  }
  func.func @transform_5(%arg0: i32) -> (i32, i32) {
    %c0_i32 = arith.constant 0 : i32
    %c0_i32_0 = arith.constant 0 : i32
    %c0_i32_1 = arith.constant 0 : i32
    return %c0_i32, %c0_i32_0 : i32, i32
  }
  func.func @transform_6(%arg0: i32) -> (i32, i32) {
    %c0_i32 = arith.constant 0 : i32
    %c0_i32_0 = arith.constant 0 : i32
    %c0_i32_1 = arith.constant 0 : i32
    return %c0_i32, %c0_i32_0 : i32, i32
  }
  func.func @transform_7(%arg0: i32) -> (i32, i32) {
    %c0_i32 = arith.constant 0 : i32
    %c0_i32_0 = arith.constant 0 : i32
    %c0_i32_1 = arith.constant 0 : i32
    return %c0_i32, %c0_i32_0 : i32, i32
  }
  func.func @transform_8(%arg0: i32) -> (i32, i32) {
    %c0_i32 = arith.constant 0 : i32
    %c0_i32_0 = arith.constant 0 : i32
    %c0_i32_1 = arith.constant 0 : i32
    return %c0_i32, %c0_i32_0 : i32, i32
  }
}

</mosaic_0001>

<llo_original>
// kernel: tpu_custom_call.1
$region0: #{tpu_custom_call.1}
  #allocation0 [shape = 'u32[]', space=smem, size = 0x4, offset = 0x4, fixed_abs, tag = 'smem constant byte address 0x4 - core index']
  #allocation1 [shape = 'u32[144,128]{1,0:T(1,128)}', space=vmem, size = 0x12000, scoped, tag = 'internal scratch']
  %s0 = inlined_call_operand.vmem [shape: f32[128,64], index: 0, kind: input, shape index: {}]
  %s1 = inlined_call_operand.vmem [shape: s8[128,128], index: 1, kind: input, shape index: {}]
  %s2 = inlined_call_operand.vmem [shape: f32[64,32], index: 2, kind: input, shape index: {}]
  %s3 = inlined_call_operand.vmem [shape: f32[32,8], index: 3, kind: input, shape index: {}]
  %s4 = inlined_call_operand.vmem [shape: f32[1,32], index: 4, kind: input, shape index: {}]
  %s5 = inlined_call_operand.vmem [shape: f32[32,32], index: 5, kind: input, shape index: {}]
  %s6 = inlined_call_operand.vmem [shape: f32[32,2], index: 6, kind: input, shape index: {}]
  %s7 = inlined_call_operand.vmem [shape: f32[1,32], index: 7, kind: input, shape index: {}]
  %s8 = inlined_call_operand.vmem [shape: f32[128,32], index: 8, kind: output, shape index: {}]
  %s9 = sld [smem:[#allocation0]]
  $region42: #{tpu_custom_call.1} parent=0
    _
  %s11 = ssub.s32 1, %s9
  %s12 = scalar_select 0, %s11, %s9
  // Predicated region
  $region2: #{tpu_custom_call.1} parent=0 // pred_check
    _
  $region3: #{tpu_custom_call.1} parent=0 // pred_check_branch
    %14 = sbr.rel (0) target = $region5
  $region4: #{tpu_custom_call.1} parent=0 // pred_region
    _
  $region5: #{tpu_custom_call.1} parent=0 // pred_fallthru
    _
  // Predicated region
  $region6: #{tpu_custom_call.1} parent=0 // pred_check
    _
  $region7: #{tpu_custom_call.1} parent=0 // pred_check_branch
    %16 = sbr.rel (0) target = $region9
  $region8: #{tpu_custom_call.1} parent=0 // pred_region
    _
  $region9: #{tpu_custom_call.1} parent=0 // pred_fallthru
    _
  // Predicated region
  $region10: #{tpu_custom_call.1} parent=0 // pred_check
    _
  $region11: #{tpu_custom_call.1} parent=0 // pred_check_branch
    %18 = sbr.rel (0) target = $region13
  $region12: #{tpu_custom_call.1} parent=0 // pred_region
    _
  $region13: #{tpu_custom_call.1} parent=0 // pred_fallthru
    _
  // Predicated region
  $region14: #{tpu_custom_call.1} parent=0 // pred_check
    _
  $region15: #{tpu_custom_call.1} parent=0 // pred_check_branch
    %20 = sbr.rel (0) target = $region17
  $region16: #{tpu_custom_call.1} parent=0 // pred_region
    _
  $region17: #{tpu_custom_call.1} parent=0 // pred_fallthru
    _
  // Predicated region
  $region18: #{tpu_custom_call.1} parent=0 // pred_check
    _
  $region19: #{tpu_custom_call.1} parent=0 // pred_check_branch
    %22 = sbr.rel (0) target = $region21
  $region20: #{tpu_custom_call.1} parent=0 // pred_region
    _
  $region21: #{tpu_custom_call.1} parent=0 // pred_fallthru
    _
  // Predicated region
  $region22: #{tpu_custom_call.1} parent=0 // pred_check
    _
  $region23: #{tpu_custom_call.1} parent=0 // pred_check_branch
    %24 = sbr.rel (0) target = $region25
  $region24: #{tpu_custom_call.1} parent=0 // pred_region
    _
  $region25: #{tpu_custom_call.1} parent=0 // pred_fallthru
    _
  // Predicated region
  $region26: #{tpu_custom_call.1} parent=0 // pred_check
    _
  $region27: #{tpu_custom_call.1} parent=0 // pred_check_branch
    %26 = sbr.rel (0) target = $region29
  $region28: #{tpu_custom_call.1} parent=0 // pred_region
    _
  $region29: #{tpu_custom_call.1} parent=0 // pred_fallthru
    _
  // Predicated region
  $region30: #{tpu_custom_call.1} parent=0 // pred_check
    _
  $region31: #{tpu_custom_call.1} parent=0 // pred_check_branch
    %28 = sbr.rel (0) target = $region33
  $region32: #{tpu_custom_call.1} parent=0 // pred_region
    _
  $region33: #{tpu_custom_call.1} parent=0 // pred_fallthru
    _
  %v30 = vld [vmem:[%s1] sm:$0xff]
  %v31 = vld [vmem:[%s1 + $0x8] sm:$0xff]
  %v32 = vld [vmem:[%s1 + $0x10] sm:$0xff]
  %v33 = vld [vmem:[%s1 + $0x18] sm:$0xff]
  %v34 = vunpack.c.0.s8 %v30
  %v35 = vunpack.c.1.s8 %v30
  %v36 = vunpack.c.2.s8 %v30
  %v37 = vunpack.c.3.s8 %v30
  %v38 = vunpack.c.0.s8 %v31
  %v39 = vunpack.c.1.s8 %v31
  %v40 = vunpack.c.2.s8 %v31
  %v41 = vunpack.c.3.s8 %v31
  %v42 = vunpack.c.0.s8 %v32
  %v43 = vunpack.c.1.s8 %v32
  %v44 = vunpack.c.2.s8 %v32
  %v45 = vunpack.c.3.s8 %v32
  %v46 = vunpack.c.0.s8 %v33
  %v47 = vunpack.c.1.s8 %v33
  %v48 = vunpack.c.2.s8 %v33
  %v49 = vunpack.c.3.s8 %v33
  %v50 = vcvt.s32.f32 %v34
  %v51 = vcvt.s32.f32 %v35
  %v52 = vcvt.s32.f32 %v36
  %v53 = vcvt.s32.f32 %v37
  %v54 = vcvt.s32.f32 %v38
  %v55 = vcvt.s32.f32 %v39
  %v56 = vcvt.s32.f32 %v40
  %v57 = vcvt.s32.f32 %v41
  %v58 = vcvt.s32.f32 %v42
  %v59 = vcvt.s32.f32 %v43
  %v60 = vcvt.s32.f32 %v44
  %v61 = vcvt.s32.f32 %v45
  %v62 = vcvt.s32.f32 %v46
  %v63 = vcvt.s32.f32 %v47
  %v64 = vcvt.s32.f32 %v48
  %v65 = vcvt.s32.f32 %v49
  %v66 = vsub.f32 %v50, 1.0
  %v67 = vsub.f32 %v51, 1.0
  %v68 = vsub.f32 %v52, 1.0
  %v69 = vsub.f32 %v53, 1.0
  %v70 = vsub.f32 %v54, 1.0
  %v71 = vsub.f32 %v55, 1.0
  %v72 = vsub.f32 %v56, 1.0
  %v73 = vsub.f32 %v57, 1.0
  %v74 = vsub.f32 %v58, 1.0
  %v75 = vsub.f32 %v59, 1.0
  %v76 = vsub.f32 %v60, 1.0
  %v77 = vsub.f32 %v61, 1.0
  %v78 = vsub.f32 %v62, 1.0
  %v79 = vsub.f32 %v63, 1.0
  %v80 = vsub.f32 %v64, 1.0
  %v81 = vsub.f32 %v65, 1.0
  %v82 = vmul.f32 %v66, 1e+30
  %v83 = vmul.f32 %v67, 1e+30
  %v84 = vmul.f32 %v68, 1e+30
  %v85 = vmul.f32 %v69, 1e+30
  %v86 = vmul.f32 %v70, 1e+30
  %v87 = vmul.f32 %v71, 1e+30
  %v88 = vmul.f32 %v72, 1e+30
  %v89 = vmul.f32 %v73, 1e+30
  %v90 = vmul.f32 %v74, 1e+30
  %v91 = vmul.f32 %v75, 1e+30
  %v92 = vmul.f32 %v76, 1e+30
  %v93 = vmul.f32 %v77, 1e+30
  %v94 = vmul.f32 %v78, 1e+30
  %v95 = vmul.f32 %v79, 1e+30
  %v96 = vmul.f32 %v80, 1e+30
  %v97 = vmul.f32 %v81, 1e+30
  %v98 = vld [vmem:[%s0] sm:$0xff]
  %v99 = vld [vmem:[%s0 + $0x8] sm:$0xff]
  %v100 = vld [vmem:[%s0 + $0x10] sm:$0xff]
  %v101 = vld [vmem:[%s0 + $0x18] sm:$0xff]
  %v102 = vld [vmem:[%s0 + $0x20] sm:$0xff]
  %v103 = vld [vmem:[%s0 + $0x28] sm:$0xff]
  %v104 = vld [vmem:[%s0 + $0x30] sm:$0xff]
  %v105 = vld [vmem:[%s0 + $0x38] sm:$0xff]
  %v106 = vld [vmem:[%s0 + $0x40] sm:$0xff]
  %v107 = vld [vmem:[%s0 + $0x48] sm:$0xff]
  %v108 = vld [vmem:[%s0 + $0x50] sm:$0xff]
  %v109 = vld [vmem:[%s0 + $0x58] sm:$0xff]
  %v110 = vld [vmem:[%s0 + $0x60] sm:$0xff]
  %v111 = vld [vmem:[%s0 + $0x68] sm:$0xff]
  %v112 = vld [vmem:[%s0 + $0x70] sm:$0xff]
  %v113 = vld [vmem:[%s0 + $0x78] sm:$0xff]
  %v114 = vpack.c.bf16 %v99, %v98
  %v115 = vpack.c.bf16 %v101, %v100
  %v116 = vpack.c.bf16 %v103, %v102
  %v117 = vpack.c.bf16 %v105, %v104
  %v118 = vpack.c.bf16 %v107, %v106
  %v119 = vpack.c.bf16 %v109, %v108
  %v120 = vpack.c.bf16 %v111, %v110
  %v121 = vpack.c.bf16 %v113, %v112
  %v122 = vld [vmem:[%s2] sm:$0xff]
  %v123 = vld [vmem:[%s2 + $0x8] sm:$0xff]
  %v124 = vld [vmem:[%s2 + $0x10] sm:$0xff]
  %v125 = vld [vmem:[%s2 + $0x18] sm:$0xff]
  %v126 = vld [vmem:[%s2 + $0x20] sm:$0xff]
  %v127 = vld [vmem:[%s2 + $0x28] sm:$0xff]
  %v128 = vld [vmem:[%s2 + $0x30] sm:$0xff]
  %v129 = vld [vmem:[%s2 + $0x38] sm:$0xff]
  %v130 = vpack.c.bf16 %v123, %v122
  %v131 = vpack.c.bf16 %v125, %v124
  %v132 = vpack.c.bf16 %v127, %v126
  %v133 = vpack.c.bf16 %v129, %v128
  %vm134 = vcmask 523264
  %v136 = vsel %vm134, %v114, 0
  %v139 = vsel %vm134, %v115, 0
  %v142 = vsel %vm134, %v116, 0
  %v145 = vsel %vm134, %v117, 0
  %v148 = vsel %vm134, %v118, 0
  %v151 = vsel %vm134, %v119, 0
  %v154 = vsel %vm134, %v120, 0
  %v157 = vsel %vm134, %v121, 0
  %159 = vmatprep.subr.bf16.mxu0 0
  %160 = vmatpush1.bf16.msra.mxu0 %v130
  %161 = vmatprep.subr.bf16.mxu0 0
  %162 = vmatpush1.bf16.msra.mxu0 %v131
  %163 = vmatprep.subr.bf16.mxu0 0
  %164 = vmatpush1.bf16.msra.mxu0 %v132
  %165 = vmatprep.subr.bf16.mxu0 0
  %166 = vmatpush1.bf16.msra.mxu0 %v133
  %167 = vmatprep.subr.bf16.mxu0 0
  %168 = vmatpush1.bf16.msra.mxu0 0
  %169 = vmatprep.subr.bf16.mxu0 0
  %170 = vmatpush1.bf16.msra.mxu0 0
  %171 = vmatprep.subr.bf16.mxu0 0
  %172 = vmatpush1.bf16.msra.mxu0 0
  %173 = vmatprep.subr.bf16.mxu0 0
  %174 = vmatpush1.bf16.msra.mxu0 0
  %175 = vmatprep.subr.bf16.mxu0 0
  %176 = vmatpush1.bf16.msra.mxu0 0
  %177 = vmatprep.subr.bf16.mxu0 0
  %178 = vmatpush1.bf16.msra.mxu0 0
  %179 = vmatprep.subr.bf16.mxu0 0
  %180 = vmatpush1.bf16.msra.mxu0 0
  %181 = vmatprep.subr.bf16.mxu0 0
  %182 = vmatpush1.bf16.msra.mxu0 0
  %183 = vmatprep.subr.bf16.mxu0 0
  %184 = vmatpush1.bf16.msra.mxu0 0
  %185 = vmatprep.subr.bf16.mxu0 0
  %186 = vmatpush1.bf16.msra.mxu0 0
  %187 = vmatprep.subr.bf16.mxu0 0
  %188 = vmatpush1.bf16.msra.mxu0 0
  %189 = vmatprep.subr.bf16.mxu0 0
  %190 = vmatpush1.bf16.msra.mxu0 0
  %191 = vmatprep.mubr.bf16.mxu0 0
  %192 = vmatmul.mubr.bf16.gmra.mrb[0].mxu0 %v136
  %v193 = vpop.f32.mrb[0].mxu0
  %v194 = vadd.f32 0.0, %v193
  %v195 = vpop.f32.mrb[0].mxu0
  %v196 = vpop.f32.mrb[0].mxu0
  %v197 = vadd.f32 0.0, %v196
  %v198 = vpop.f32.mrb[0].mxu0
  %199 = vmatprep.mubr.bf16.mxu0 0
  %200 = vmatmul.mubr.bf16.gmra.mrb[0].mxu0 %v139
  %v201 = vpop.f32.mrb[0].mxu0
  %v202 = vadd.f32 0.0, %v201
  %v203 = vpop.f32.mrb[0].mxu0
  %v204 = vpop.f32.mrb[0].mxu0
  %v205 = vadd.f32 0.0, %v204
  %v206 = vpop.f32.mrb[0].mxu0
  %207 = vmatprep.mubr.bf16.mxu0 0
  %208 = vmatmul.mubr.bf16.gmra.mrb[0].mxu0 %v142
  %v209 = vpop.f32.mrb[0].mxu0
  %v210 = vadd.f32 0.0, %v209
  %v211 = vpop.f32.mrb[0].mxu0
  %v212 = vpop.f32.mrb[0].mxu0
  %v213 = vadd.f32 0.0, %v212
  %v214 = vpop.f32.mrb[0].mxu0
  %215 = vmatprep.mubr.bf16.mxu0 0
  %216 = vmatmul.mubr.bf16.gmra.mrb[0].mxu0 %v145
  %v217 = vpop.f32.mrb[0].mxu0
  %v218 = vadd.f32 0.0, %v217
  %v219 = vpop.f32.mrb[0].mxu0
  %v220 = vpop.f32.mrb[0].mxu0
  %v221 = vadd.f32 0.0, %v220
  %v222 = vpop.f32.mrb[0].mxu0
  %223 = vmatprep.mubr.bf16.mxu0 0
  %224 = vmatmul.mubr.bf16.gmra.mrb[0].mxu0 %v148
  %v225 = vpop.f32.mrb[0].mxu0
  %v226 = vadd.f32 0.0, %v225
  %v227 = vpop.f32.mrb[0].mxu0
  %v228 = vpop.f32.mrb[0].mxu0
  %v229 = vadd.f32 0.0, %v228
  %v230 = vpop.f32.mrb[0].mxu0
  %231 = vmatprep.mubr.bf16.mxu0 0
  %232 = vmatmul.mubr.bf16.gmra.mrb[0].mxu0 %v151
  %v233 = vpop.f32.mrb[0].mxu0
  %v234 = vadd.f32 0.0, %v233
  %v235 = vpop.f32.mrb[0].mxu0
  %v236 = vpop.f32.mrb[0].mxu0
  %v237 = vadd.f32 0.0, %v236
  %v238 = vpop.f32.mrb[0].mxu0
  %239 = vmatprep.mubr.bf16.mxu0 0
  %240 = vmatmul.mubr.bf16.gmra.mrb[0].mxu0 %v154
  %v241 = vpop.f32.mrb[0].mxu0
  %v242 = vadd.f32 0.0, %v241
  %v243 = vpop.f32.mrb[0].mxu0
  %v244 = vpop.f32.mrb[0].mxu0
  %v245 = vadd.f32 0.0, %v244
  %v246 = vpop.f32.mrb[0].mxu0
  %247 = vmatprep.mubr.bf16.mxu0 0
  %248 = vmatmul.mubr.bf16.gmra.mrb[0].mxu0 %v157
  %v249 = vpop.f32.mrb[0].mxu0
  %v250 = vadd.f32 0.0, %v249
  %v251 = vpop.f32.mrb[0].mxu0
  %v252 = vpop.f32.mrb[0].mxu0
  %v253 = vadd.f32 0.0, %v252
  %v254 = vpop.f32.mrb[0].mxu0
  %255 = vdwg.mxu0
  %v256 = vpack.c.bf16 %v197, %v194
  %v257 = vpack.c.bf16 %v205, %v202
  %v258 = vpack.c.bf16 %v213, %v210
  %v259 = vpack.c.bf16 %v221, %v218
  %v260 = vpack.c.bf16 %v229, %v226
  %v261 = vpack.c.bf16 %v237, %v234
  %v262 = vpack.c.bf16 %v245, %v242
  %v263 = vpack.c.bf16 %v253, %v250
  %v264 = vld [vmem:[%s3] sm:$0xff]
  %v265 = vld [vmem:[%s3 + $0x8] sm:$0xff]
  %v266 = vld [vmem:[%s3 + $0x10] sm:$0xff]
  %v267 = vld [vmem:[%s3 + $0x18] sm:$0xff]
  %v268 = vpack.c.bf16 %v265, %v264
  %v269 = vpack.c.bf16 %v267, %v266
  %vm270 = vcmask 261120
  %v272 = vsel %vm270, %v256, 0
  %v275 = vsel %vm270, %v257, 0
  %v278 = vsel %vm270, %v258, 0
  %v281 = vsel %vm270, %v259, 0
  %v284 = vsel %vm270, %v260, 0
  %v287 = vsel %vm270, %v261, 0
  %v290 = vsel %vm270, %v262, 0
  %v293 = vsel %vm270, %v263, 0
  %295 = vmatprep.subr.bf16.mxu0 0
  %296 = vmatpush1.bf16.msra.mxu0 %v268
  %297 = vmatprep.subr.bf16.mxu0 0
  %298 = vmatpush1.bf16.msra.mxu0 %v269
  %299 = vmatprep.subr.bf16.mxu0 0
  %300 = vmatpush1.bf16.msra.mxu0 0
  %301 = vmatprep.subr.bf16.mxu0 0
  %302 = vmatpush1.bf16.msra.mxu0 0
  %303 = vmatprep.subr.bf16.mxu0 0
  %304 = vmatpush1.bf16.msra.mxu0 0
  %305 = vmatprep.subr.bf16.mxu0 0
  %306 = vmatpush1.bf16.msra.mxu0 0
  %307 = vmatprep.subr.bf16.mxu0 0
  %308 = vmatpush1.bf16.msra.mxu0 0
  %309 = vmatprep.subr.bf16.mxu0 0
  %310 = vmatpush1.bf16.msra.mxu0 0
  %311 = vmatprep.subr.bf16.mxu0 0
  %312 = vmatpush1.bf16.msra.mxu0 0
  %313 = vmatprep.subr.bf16.mxu0 0
  %314 = vmatpush1.bf16.msra.mxu0 0
  %315 = vmatprep.subr.bf16.mxu0 0
  %316 = vmatpush1.bf16.msra.mxu0 0
  %317 = vmatprep.subr.bf16.mxu0 0
  %318 = vmatpush1.bf16.msra.mxu0 0
  %319 = vmatprep.subr.bf16.mxu0 0
  %320 = vmatpush1.bf16.msra.mxu0 0
  %321 = vmatprep.subr.bf16.mxu0 0
  %322 = vmatpush1.bf16.msra.mxu0 0
  %323 = vmatprep.subr.bf16.mxu0 0
  %324 = vmatpush1.bf16.msra.mxu0 0
  %325 = vmatprep.subr.bf16.mxu0 0
  %326 = vmatpush1.bf16.msra.mxu0 0
  %327 = vmatprep.mubr.bf16.mxu0 0
  %328 = vmatmul.mubr.bf16.gmra.mrb[0].mxu0 %v272
  %v329 = vpop.f32.mrb[0].mxu0
  %v330 = vadd.f32 0.0, %v329
  %v331 = vpop.f32.mrb[0].mxu0
  %v332 = vpop.f32.mrb[0].mxu0
  %v333 = vadd.f32 0.0, %v332
  %v334 = vpop.f32.mrb[0].mxu0
  %335 = vmatprep.mubr.bf16.mxu0 0
  %336 = vmatmul.mubr.bf16.gmra.mrb[0].mxu0 %v275
  %v337 = vpop.f32.mrb[0].mxu0
  %v338 = vadd.f32 0.0, %v337
  %v339 = vpop.f32.mrb[0].mxu0
  %v340 = vpop.f32.mrb[0].mxu0
  %v341 = vadd.f32 0.0, %v340
  %v342 = vpop.f32.mrb[0].mxu0
  %343 = vmatprep.mubr.bf16.mxu0 0
  %344 = vmatmul.mubr.bf16.gmra.mrb[0].mxu0 %v278
  %v345 = vpop.f32.mrb[0].mxu0
  %v346 = vadd.f32 0.0, %v345
  %v347 = vpop.f32.mrb[0].mxu0
  %v348 = vpop.f32.mrb[0].mxu0
  %v349 = vadd.f32 0.0, %v348
  %v350 = vpop.f32.mrb[0].mxu0
  %351 = vmatprep.mubr.bf16.mxu0 0
  %352 = vmatmul.mubr.bf16.gmra.mrb[0].mxu0 %v281
  %v353 = vpop.f32.mrb[0].mxu0
  %v354 = vadd.f32 0.0, %v353
  %v355 = vpop.f32.mrb[0].mxu0
  %v356 = vpop.f32.mrb[0].mxu0
  %v357 = vadd.f32 0.0, %v356
  %v358 = vpop.f32.mrb[0].mxu0
  %359 = vmatprep.mubr.bf16.mxu0 0
  %360 = vmatmul.mubr.bf16.gmra.mrb[0].mxu0 %v284
  %v361 = vpop.f32.mrb[0].mxu0
  %v362 = vadd.f32 0.0, %v361
  %v363 = vpop.f32.mrb[0].mxu0
  %v364 = vpop.f32.mrb[0].mxu0
  %v365 = vadd.f32 0.0, %v364
  %v366 = vpop.f32.mrb[0].mxu0
  %367 = vmatprep.mubr.bf16.mxu0 0
  %368 = vmatmul.mubr.bf16.gmra.mrb[0].mxu0 %v287
  %v369 = vpop.f32.mrb[0].mxu0
  %v370 = vadd.f32 0.0, %v369
  %v371 = vpop.f32.mrb[0].mxu0
  %v372 = vpop.f32.mrb[0].mxu0
  %v373 = vadd.f32 0.0, %v372
  %v374 = vpop.f32.mrb[0].mxu0
  %375 = vmatprep.mubr.bf16.mxu0 0
  %376 = vmatmul.mubr.bf16.gmra.mrb[0].mxu0 %v290
  %v377 = vpop.f32.mrb[0].mxu0
  %v378 = vadd.f32 0.0, %v377
  %v379 = vpop.f32.mrb[0].mxu0
  %v380 = vpop.f32.mrb[0].mxu0
  %v381 = vadd.f32 0.0, %v380
  %v382 = vpop.f32.mrb[0].mxu0
  %383 = vmatprep.mubr.bf16.mxu0 0
  %384 = vmatmul.mubr.bf16.gmra.mrb[0].mxu0 %v293
  %v385 = vpop.f32.mrb[0].mxu0
  %v386 = vadd.f32 0.0, %v385
  %v387 = vpop.f32.mrb[0].mxu0
  %v388 = vpop.f32.mrb[0].mxu0
  %v389 = vadd.f32 0.0, %v388
  %v390 = vpop.f32.mrb[0].mxu0
  %391 = vdwg.mxu0
  %392 = vxpose.xlu0.b32.start [1/16] %v330, 128
  %393 = vxpose.xlu0.b32.cont [2/16] %v333, 128
  %394 = vxpose.xlu0.b32.cont [3/16] %v338, 128
  %395 = vxpose.xlu0.b32.cont [4/16] %v341, 128
  %396 = vxpose.xlu0.b32.cont [5/16] %v346, 128
  %397 = vxpose.xlu0.b32.cont [6/16] %v349, 128
  %398 = vxpose.xlu0.b32.cont [7/16] %v354, 128
  %399 = vxpose.xlu0.b32.cont [8/16] %v357, 128
  %400 = vxpose.xlu0.b32.cont [9/16] %v362, 128
  %401 = vxpose.xlu0.b32.cont [10/16] %v365, 128
  %402 = vxpose.xlu0.b32.cont [11/16] %v370, 128
  %403 = vxpose.xlu0.b32.cont [12/16] %v373, 128
  %404 = vxpose.xlu0.b32.cont [13/16] %v378, 128
  %405 = vxpose.xlu0.b32.cont [14/16] %v381, 128
  %406 = vxpose.xlu0.b32.cont [15/16] %v386, 128
  %407 = vxpose.xlu0.b32.end [16/16] %v389, 128
  %v408 = vpop.trf.xlu0
  %v409 = vpop.trf.xlu0
  %v410 = vpop.trf.xlu0
  %v411 = vpop.trf.xlu0
  %v412 = vpop.trf.xlu0
  %v413 = vpop.trf.xlu0
  %v414 = vpop.trf.xlu0
  %v415 = vpop.trf.xlu0
  %v416 = vpop.trf.xlu0
  %v417 = vpop.trf.xlu0
  %v418 = vpop.trf.xlu0
  %v419 = vpop.trf.xlu0
  %v420 = vpop.trf.xlu0
  %v421 = vpop.trf.xlu0
  %v422 = vpop.trf.xlu0
  %v423 = vpop.trf.xlu0
  %v424 = vld [vmem:[%s4] sm:$0x1]
  %v425 = vlaneseq
  %v426 = vand.u32 %v425, 127
  %428 = vset.pattern.permute.xlu0 4
  %429 = vperm.xlu0 %428, %v330
  %v430 = vpop.permute.xlu0 %429
  %433 = vset.pattern.permute.xlu0 4
  %434 = vperm.xlu0 %433, %v333
  %v435 = vpop.permute.xlu0 %434
  %438 = vset.pattern.permute.xlu0 4
  %439 = vperm.xlu0 %438, %v338
  %v440 = vpop.permute.xlu0 %439
  %443 = vset.pattern.permute.xlu0 4
  %444 = vperm.xlu0 %443, %v341
  %v445 = vpop.permute.xlu0 %444
  %448 = vset.pattern.permute.xlu0 4
  %449 = vperm.xlu0 %448, %v346
  %v450 = vpop.permute.xlu0 %449
  %453 = vset.pattern.permute.xlu0 4
  %454 = vperm.xlu0 %453, %v349
  %v455 = vpop.permute.xlu0 %454
  %458 = vset.pattern.permute.xlu0 4
  %459 = vperm.xlu0 %458, %v354
  %v460 = vpop.permute.xlu0 %459
  %463 = vset.pattern.permute.xlu0 4
  %464 = vperm.xlu0 %463, %v357
  %v465 = vpop.permute.xlu0 %464
  %468 = vset.pattern.permute.xlu0 4
  %469 = vperm.xlu0 %468, %v362
  %v470 = vpop.permute.xlu0 %469
  %473 = vset.pattern.permute.xlu0 4
  %474 = vperm.xlu0 %473, %v365
  %v475 = vpop.permute.xlu0 %474
  %478 = vset.pattern.permute.xlu0 4
  %479 = vperm.xlu0 %478, %v370
  %v480 = vpop.permute.xlu0 %479
  %483 = vset.pattern.permute.xlu0 4
  %484 = vperm.xlu0 %483, %v373
  %v485 = vpop.permute.xlu0 %484
  %488 = vset.pattern.permute.xlu0 4
  %489 = vperm.xlu0 %488, %v378
  %v490 = vpop.permute.xlu0 %489
  %493 = vset.pattern.permute.xlu0 4
  %494 = vperm.xlu0 %493, %v381
  %v495 = vpop.permute.xlu0 %494
  %498 = vset.pattern.permute.xlu0 4
  %499 = vperm.xlu0 %498, %v386
  %v500 = vpop.permute.xlu0 %499
  %503 = vset.pattern.permute.xlu0 4
  %504 = vperm.xlu0 %503, %v389
  %v505 = vpop.permute.xlu0 %504
  %v507 = vlaneseq
  %v508 = vshrl.u32 %v507, 7
  %v509 = vsub.s32 0, %v508
  %v510 = vrot.slane %v408, %v509
  %v511 = vadd.f32 %v430, %v510
  %v512 = vadd.f32 %v435, %v510
  %v513 = vadd.f32 %v440, %v510
  %v514 = vadd.f32 %v445, %v510
  %v515 = vadd.f32 %v450, %v510
  %v516 = vadd.f32 %v455, %v510
  %v517 = vadd.f32 %v460, %v510
  %v518 = vadd.f32 %v465, %v510
  %v519 = vadd.f32 %v470, %v510
  %v520 = vadd.f32 %v475, %v510
  %v521 = vadd.f32 %v480, %v510
  %v522 = vadd.f32 %v485, %v510
  %v523 = vadd.f32 %v490, %v510
  %v524 = vadd.f32 %v495, %v510
  %v525 = vadd.f32 %v500, %v510
  %v526 = vadd.f32 %v505, %v510
  %vm527 = vcmp.gt.f32.partialorder %v511, 0.0
  %vm528 = vcmp.gt.f32.partialorder %v512, 0.0
  %vm529 = vcmp.gt.f32.partialorder %v513, 0.0
  %vm530 = vcmp.gt.f32.partialorder %v514, 0.0
  %vm531 = vcmp.gt.f32.partialorder %v515, 0.0
  %vm532 = vcmp.gt.f32.partialorder %v516, 0.0
  %vm533 = vcmp.gt.f32.partialorder %v517, 0.0
  %vm534 = vcmp.gt.f32.partialorder %v518, 0.0
  %vm535 = vcmp.gt.f32.partialorder %v519, 0.0
  %vm536 = vcmp.gt.f32.partialorder %v520, 0.0
  %vm537 = vcmp.gt.f32.partialorder %v521, 0.0
  %vm538 = vcmp.gt.f32.partialorder %v522, 0.0
  %vm539 = vcmp.gt.f32.partialorder %v523, 0.0
  %vm540 = vcmp.gt.f32.partialorder %v524, 0.0
  %vm541 = vcmp.gt.f32.partialorder %v525, 0.0
  %vm542 = vcmp.gt.f32.partialorder %v526, 0.0
  %v543 = vmul.f32 %v511, 0.2
  %v544 = vmul.f32 %v512, 0.2
  %v545 = vmul.f32 %v513, 0.2
  %v546 = vmul.f32 %v514, 0.2
  %v547 = vmul.f32 %v515, 0.2
  %v548 = vmul.f32 %v516, 0.2
  %v549 = vmul.f32 %v517, 0.2
  %v550 = vmul.f32 %v518, 0.2
  %v551 = vmul.f32 %v519, 0.2
  %v552 = vmul.f32 %v520, 0.2
  %v553 = vmul.f32 %v521, 0.2
  %v554 = vmul.f32 %v522, 0.2
  %v555 = vmul.f32 %v523, 0.2
  %v556 = vmul.f32 %v524, 0.2
  %v557 = vmul.f32 %v525, 0.2
  %v558 = vmul.f32 %v526, 0.2
  %v559 = vsel %vm527, %v511, %v543
  %v560 = vsel %vm528, %v512, %v544
  %v561 = vsel %vm529, %v513, %v545
  %v562 = vsel %vm530, %v514, %v546
  %v563 = vsel %vm531, %v515, %v547
  %v564 = vsel %vm532, %v516, %v548
  %v565 = vsel %vm533, %v517, %v549
  %v566 = vsel %vm534, %v518, %v550
  %v567 = vsel %vm535, %v519, %v551
  %v568 = vsel %vm536, %v520, %v552
  %v569 = vsel %vm537, %v521, %v553
  %v570 = vsel %vm538, %v522, %v554
  %v571 = vsel %vm539, %v523, %v555
  %v572 = vsel %vm540, %v524, %v556
  %v573 = vsel %vm541, %v525, %v557
  %v574 = vsel %vm542, %v526, %v558
  %v575 = vadd.f32 %v559, %v82
  %v576 = vadd.f32 %v560, %v83
  %v577 = vadd.f32 %v561, %v84
  %v578 = vadd.f32 %v562, %v85
  %v579 = vadd.f32 %v563, %v86
  %v580 = vadd.f32 %v564, %v87
  %v581 = vadd.f32 %v565, %v88
  %v582 = vadd.f32 %v566, %v89
  %v583 = vadd.f32 %v567, %v90
  %v584 = vadd.f32 %v568, %v91
  %v585 = vadd.f32 %v569, %v92
  %v586 = vadd.f32 %v570, %v93
  %v587 = vadd.f32 %v571, %v94
  %v588 = vadd.f32 %v572, %v95
  %v589 = vadd.f32 %v573, %v96
  %v590 = vadd.f32 %v574, %v97
  %591 = vmax.xlane.f32.xlu0 %v575
  %v592 = vpop.xlane.xlu0 %591
  %593 = vmax.xlane.f32.xlu0 %v576
  %v594 = vpop.xlane.xlu0 %593
  %595 = vmax.xlane.f32.xlu0 %v577
  %v596 = vpop.xlane.xlu0 %595
  %597 = vmax.xlane.f32.xlu0 %v578
  %v598 = vpop.xlane.xlu0 %597
  %599 = vmax.xlane.f32.xlu0 %v579
  %v600 = vpop.xlane.xlu0 %599
  %601 = vmax.xlane.f32.xlu0 %v580
  %v602 = vpop.xlane.xlu0 %601
  %603 = vmax.xlane.f32.xlu0 %v581
  %v604 = vpop.xlane.xlu0 %603
  %605 = vmax.xlane.f32.xlu0 %v582
  %v606 = vpop.xlane.xlu0 %605
  %607 = vmax.xlane.f32.xlu0 %v583
  %v608 = vpop.xlane.xlu0 %607
  %609 = vmax.xlane.f32.xlu0 %v584
  %v610 = vpop.xlane.xlu0 %609
  %611 = vmax.xlane.f32.xlu0 %v585
  %v612 = vpop.xlane.xlu0 %611
  %613 = vmax.xlane.f32.xlu0 %v586
  %v614 = vpop.xlane.xlu0 %613
  %615 = vmax.xlane.f32.xlu0 %v587
  %v616 = vpop.xlane.xlu0 %615
  %617 = vmax.xlane.f32.xlu0 %v588
  %v618 = vpop.xlane.xlu0 %617
  %619 = vmax.xlane.f32.xlu0 %v589
  %v620 = vpop.xlane.xlu0 %619
  %621 = vmax.xlane.f32.xlu0 %v590
  %v622 = vpop.xlane.xlu0 %621
  %v623 = vsub.f32 %v575, %v592
  %v624 = vsub.f32 %v576, %v594
  %v625 = vsub.f32 %v577, %v596
  %v626 = vsub.f32 %v578, %v598
  %v627 = vsub.f32 %v579, %v600
  %v628 = vsub.f32 %v580, %v602
  %v629 = vsub.f32 %v581, %v604
  %v630 = vsub.f32 %v582, %v606
  %v631 = vsub.f32 %v583, %v608
  %v632 = vsub.f32 %v584, %v610
  %v633 = vsub.f32 %v585, %v612
  %v634 = vsub.f32 %v586, %v614
  %v635 = vsub.f32 %v587, %v616
  %v636 = vsub.f32 %v588, %v618
  %v637 = vsub.f32 %v589, %v620
  %v638 = vsub.f32 %v590, %v622
  %v639 = vmul.f32 %v623, 1.442695
  %v640 = vpow.pop %v639
  %v641 = vmul.f32 %v624, 1.442695
  %v642 = vpow.pop %v641
  %v643 = vmul.f32 %v625, 1.442695
  %v644 = vpow.pop %v643
  %v645 = vmul.f32 %v626, 1.442695
  %v646 = vpow.pop %v645
  %v647 = vmul.f32 %v627, 1.442695
  %v648 = vpow.pop %v647
  %v649 = vmul.f32 %v628, 1.442695
  %v650 = vpow.pop %v649
  %v651 = vmul.f32 %v629, 1.442695
  %v652 = vpow.pop %v651
  %v653 = vmul.f32 %v630, 1.442695
  %v654 = vpow.pop %v653
  %v655 = vmul.f32 %v631, 1.442695
  %v656 = vpow.pop %v655
  %v657 = vmul.f32 %v632, 1.442695
  %v658 = vpow.pop %v657
  %v659 = vmul.f32 %v633, 1.442695
  %v660 = vpow.pop %v659
  %v661 = vmul.f32 %v634, 1.442695
  %v662 = vpow.pop %v661
  %v663 = vmul.f32 %v635, 1.442695
  %v664 = vpow.pop %v663
  %v665 = vmul.f32 %v636, 1.442695
  %v666 = vpow.pop %v665
  %v667 = vmul.f32 %v637, 1.442695
  %v668 = vpow.pop %v667
  %v669 = vmul.f32 %v638, 1.442695
  %v670 = vpow.pop %v669
  %671 = vadd.xlane.f32.xlu0 %v640
  %v672 = vpop.xlane.xlu0 %671
  %673 = vadd.xlane.f32.xlu0 %v642
  %v674 = vpop.xlane.xlu0 %673
  %675 = vadd.xlane.f32.xlu0 %v644
  %v676 = vpop.xlane.xlu0 %675
  %677 = vadd.xlane.f32.xlu0 %v646
  %v678 = vpop.xlane.xlu0 %677
  %679 = vadd.xlane.f32.xlu0 %v648
  %v680 = vpop.xlane.xlu0 %679
  %681 = vadd.xlane.f32.xlu0 %v650
  %v682 = vpop.xlane.xlu0 %681
  %683 = vadd.xlane.f32.xlu0 %v652
  %v684 = vpop.xlane.xlu0 %683
  %685 = vadd.xlane.f32.xlu0 %v654
  %v686 = vpop.xlane.xlu0 %685
  %687 = vadd.xlane.f32.xlu0 %v656
  %v688 = vpop.xlane.xlu0 %687
  %689 = vadd.xlane.f32.xlu0 %v658
  %v690 = vpop.xlane.xlu0 %689
  %691 = vadd.xlane.f32.xlu0 %v660
  %v692 = vpop.xlane.xlu0 %691
  %693 = vadd.xlane.f32.xlu0 %v662
  %v694 = vpop.xlane.xlu0 %693
  %695 = vadd.xlane.f32.xlu0 %v664
  %v696 = vpop.xlane.xlu0 %695
  %697 = vadd.xlane.f32.xlu0 %v666
  %v698 = vpop.xlane.xlu0 %697
  %699 = vadd.xlane.f32.xlu0 %v668
  %v700 = vpop.xlane.xlu0 %699
  %701 = vadd.xlane.f32.xlu0 %v670
  %v702 = vpop.xlane.xlu0 %701
  %v703 = vrcp.pop %v672
  %v704 = vrcp.pop %v674
  %v705 = vrcp.pop %v676
  %v706 = vrcp.pop %v678
  %v707 = vrcp.pop %v680
  %v708 = vrcp.pop %v682
  %v709 = vrcp.pop %v684
  %v710 = vrcp.pop %v686
  %v711 = vrcp.pop %v688
  %v712 = vrcp.pop %v690
  %v713 = vrcp.pop %v692
  %v714 = vrcp.pop %v694
  %v715 = vrcp.pop %v696
  %v716 = vrcp.pop %v698
  %v717 = vrcp.pop %v700
  %v718 = vrcp.pop %v702
  %v719 = vmul.f32 %v640, %v703
  %v720 = vmul.f32 %v642, %v704
  %v721 = vmul.f32 %v644, %v705
  %v722 = vmul.f32 %v646, %v706
  %v723 = vmul.f32 %v648, %v707
  %v724 = vmul.f32 %v650, %v708
  %v725 = vmul.f32 %v652, %v709
  %v726 = vmul.f32 %v654, %v710
  %v727 = vmul.f32 %v656, %v711
  %v728 = vmul.f32 %v658, %v712
  %v729 = vmul.f32 %v660, %v713
  %v730 = vmul.f32 %v662, %v714
  %v731 = vmul.f32 %v664, %v715
  %v732 = vmul.f32 %v666, %v716
  %v733 = vmul.f32 %v668, %v717
  %v734 = vmul.f32 %v670, %v718
  %v735 = vpack.c.bf16 %v720, %v719
  %v736 = vpack.c.bf16 %v722, %v721
  %v737 = vpack.c.bf16 %v724, %v723
  %v738 = vpack.c.bf16 %v726, %v725
  %v739 = vpack.c.bf16 %v728, %v727
  %v740 = vpack.c.bf16 %v730, %v729
  %v741 = vpack.c.bf16 %v732, %v731
  %v742 = vpack.c.bf16 %v734, %v733
  %743 = vmatprep.subr.bf16.mxu0 0
  %744 = vmatpush1.bf16.msra.mxu0 %v256
  %745 = vmatprep.subr.bf16.mxu0 0
  %746 = vmatpush1.bf16.msra.mxu0 %v257
  %747 = vmatprep.subr.bf16.mxu0 0
  %748 = vmatpush1.bf16.msra.mxu0 %v258
  %749 = vmatprep.subr.bf16.mxu0 0
  %750 = vmatpush1.bf16.msra.mxu0 %v259
  %751 = vmatprep.subr.bf16.mxu0 0
  %752 = vmatpush1.bf16.msra.mxu0 %v260
  %753 = vmatprep.subr.bf16.mxu0 0
  %754 = vmatpush1.bf16.msra.mxu0 %v261
  %755 = vmatprep.subr.bf16.mxu0 0
  %756 = vmatpush1.bf16.msra.mxu0 %v262
  %757 = vmatprep.subr.bf16.mxu0 0
  %758 = vmatpush1.bf16.msra.mxu0 %v263
  %759 = vmatprep.subr.bf16.mxu0 0
  %760 = vmatpush1.bf16.msra.mxu0 0
  %761 = vmatprep.subr.bf16.mxu0 0
  %762 = vmatpush1.bf16.msra.mxu0 0
  %763 = vmatprep.subr.bf16.mxu0 0
  %764 = vmatpush1.bf16.msra.mxu0 0
  %765 = vmatprep.subr.bf16.mxu0 0
  %766 = vmatpush1.bf16.msra.mxu0 0
  %767 = vmatprep.subr.bf16.mxu0 0
  %768 = vmatpush1.bf16.msra.mxu0 0
  %769 = vmatprep.subr.bf16.mxu0 0
  %770 = vmatpush1.bf16.msra.mxu0 0
  %771 = vmatprep.subr.bf16.mxu0 0
  %772 = vmatpush1.bf16.msra.mxu0 0
  %773 = vmatprep.subr.bf16.mxu0 0
  %774 = vmatpush1.bf16.msra.mxu0 0
  %775 = vmatprep.mubr.bf16.mxu0 0
  %776 = vmatmul.mubr.bf16.gmra.mrb[0].mxu0 %v735
  %v777 = vpop.f32.mrb[0].mxu0
  %v778 = vadd.f32 0.0, %v777
  %v779 = vpop.f32.mrb[0].mxu0
  %v780 = vpop.f32.mrb[0].mxu0
  %v781 = vadd.f32 0.0, %v780
  %v782 = vpop.f32.mrb[0].mxu0
  %783 = vmatprep.mubr.bf16.mxu0 0
  %784 = vmatmul.mubr.bf16.gmra.mrb[0].mxu0 %v736
  %v785 = vpop.f32.mrb[0].mxu0
  %v786 = vadd.f32 0.0, %v785
  %v787 = vpop.f32.mrb[0].mxu0
  %v788 = vpop.f32.mrb[0].mxu0
  %v789 = vadd.f32 0.0, %v788
  %v790 = vpop.f32.mrb[0].mxu0
  %791 = vmatprep.mubr.bf16.mxu0 0
  %792 = vmatmul.mubr.bf16.gmra.mrb[0].mxu0 %v737
  %v793 = vpop.f32.mrb[0].mxu0
  %v794 = vadd.f32 0.0, %v793
  %v795 = vpop.f32.mrb[0].mxu0
  %v796 = vpop.f32.mrb[0].mxu0
  %v797 = vadd.f32 0.0, %v796
  %v798 = vpop.f32.mrb[0].mxu0
  %799 = vmatprep.mubr.bf16.mxu0 0
  %800 = vmatmul.mubr.bf16.gmra.mrb[0].mxu0 %v738
  %v801 = vpop.f32.mrb[0].mxu0
  %v802 = vadd.f32 0.0, %v801
  %v803 = vpop.f32.mrb[0].mxu0
  %v804 = vpop.f32.mrb[0].mxu0
  %v805 = vadd.f32 0.0, %v804
  %v806 = vpop.f32.mrb[0].mxu0
  %807 = vmatprep.mubr.bf16.mxu0 0
  %808 = vmatmul.mubr.bf16.gmra.mrb[0].mxu0 %v739
  %v809 = vpop.f32.mrb[0].mxu0
  %v810 = vadd.f32 0.0, %v809
  %v811 = vpop.f32.mrb[0].mxu0
  %v812 = vpop.f32.mrb[0].mxu0
  %v813 = vadd.f32 0.0, %v812
  %v814 = vpop.f32.mrb[0].mxu0
  %815 = vmatprep.mubr.bf16.mxu0 0
  %816 = vmatmul.mubr.bf16.gmra.mrb[0].mxu0 %v740
  %v817 = vpop.f32.mrb[0].mxu0
  %v818 = vadd.f32 0.0, %v817
  %v819 = vpop.f32.mrb[0].mxu0
  %v820 = vpop.f32.mrb[0].mxu0
  %v821 = vadd.f32 0.0, %v820
  %v822 = vpop.f32.mrb[0].mxu0
  %823 = vmatprep.mubr.bf16.mxu0 0
  %824 = vmatmul.mubr.bf16.gmra.mrb[0].mxu0 %v741
  %v825 = vpop.f32.mrb[0].mxu0
  %v826 = vadd.f32 0.0, %v825
  %v827 = vpop.f32.mrb[0].mxu0
  %v828 = vpop.f32.mrb[0].mxu0
  %v829 = vadd.f32 0.0, %v828
  %v830 = vpop.f32.mrb[0].mxu0
  %831 = vmatprep.mubr.bf16.mxu0 0
  %832 = vmatmul.mubr.bf16.gmra.mrb[0].mxu0 %v742
  %v833 = vpop.f32.mrb[0].mxu0
  %v834 = vadd.f32 0.0, %v833
  %v835 = vpop.f32.mrb[0].mxu0
  %v836 = vpop.f32.mrb[0].mxu0
  %v837 = vadd.f32 0.0, %v836
  %v838 = vpop.f32.mrb[0].mxu0
  %839 = vdwg.mxu0
  %840 = vset.pattern.permute.xlu0 5
  %841 = vperm.xlu0 %840, %v330
  %v842 = vpop.permute.xlu0 %841
  %844 = vset.pattern.permute.xlu0 5
  %845 = vperm.xlu0 %844, %v333
  %v846 = vpop.permute.xlu0 %845
  %848 = vset.pattern.permute.xlu0 5
  %849 = vperm.xlu0 %848, %v338
  %v850 = vpop.permute.xlu0 %849
  %852 = vset.pattern.permute.xlu0 5
  %853 = vperm.xlu0 %852, %v341
  %v854 = vpop.permute.xlu0 %853
  %856 = vset.pattern.permute.xlu0 5
  %857 = vperm.xlu0 %856, %v346
  %v858 = vpop.permute.xlu0 %857
  %860 = vset.pattern.permute.xlu0 5
  %861 = vperm.xlu0 %860, %v349
  %v862 = vpop.permute.xlu0 %861
  %864 = vset.pattern.permute.xlu0 5
  %865 = vperm.xlu0 %864, %v354
  %v866 = vpop.permute.xlu0 %865
  %868 = vset.pattern.permute.xlu0 5
  %869 = vperm.xlu0 %868, %v357
  %v870 = vpop.permute.xlu0 %869
  %872 = vset.pattern.permute.xlu0 5
  %873 = vperm.xlu0 %872, %v362
  %v874 = vpop.permute.xlu0 %873
  %876 = vset.pattern.permute.xlu0 5
  %877 = vperm.xlu0 %876, %v365
  %v878 = vpop.permute.xlu0 %877
  %880 = vset.pattern.permute.xlu0 5
  %881 = vperm.xlu0 %880, %v370
  %v882 = vpop.permute.xlu0 %881
  %884 = vset.pattern.permute.xlu0 5
  %885 = vperm.xlu0 %884, %v373
  %v886 = vpop.permute.xlu0 %885
  %888 = vset.pattern.permute.xlu0 5
  %889 = vperm.xlu0 %888, %v378
  %v890 = vpop.permute.xlu0 %889
  %892 = vset.pattern.permute.xlu0 5
  %893 = vperm.xlu0 %892, %v381
  %v894 = vpop.permute.xlu0 %893
  %896 = vset.pattern.permute.xlu0 5
  %897 = vperm.xlu0 %896, %v386
  %v898 = vpop.permute.xlu0 %897
  %900 = vset.pattern.permute.xlu0 5
  %901 = vperm.xlu0 %900, %v389
  %v902 = vpop.permute.xlu0 %901
  %v904 = vlaneseq
  %v905 = vshrl.u32 %v904, 7
  %v906 = vsub.s32 1, %v905
  %v907 = vrot.slane %v408, %v906
  %v908 = vadd.f32 %v842, %v907
  %v909 = vadd.f32 %v846, %v907
  %v910 = vadd.f32 %v850, %v907
  %v911 = vadd.f32 %v854, %v907
  %v912 = vadd.f32 %v858, %v907
  %v913 = vadd.f32 %v862, %v907
  %v914 = vadd.f32 %v866, %v907
  %v915 = vadd.f32 %v870, %v907
  %v916 = vadd.f32 %v874, %v907
  %v917 = vadd.f32 %v878, %v907
  %v918 = vadd.f32 %v882, %v907
  %v919 = vadd.f32 %v886, %v907
  %v920 = vadd.f32 %v890, %v907
  %v921 = vadd.f32 %v894, %v907
  %v922 = vadd.f32 %v898, %v907
  %v923 = vadd.f32 %v902, %v907
  %vm924 = vcmp.gt.f32.partialorder %v908, 0.0
  %vm925 = vcmp.gt.f32.partialorder %v909, 0.0
  %vm926 = vcmp.gt.f32.partialorder %v910, 0.0
  %vm927 = vcmp.gt.f32.partialorder %v911, 0.0
  %vm928 = vcmp.gt.f32.partialorder %v912, 0.0
  %vm929 = vcmp.gt.f32.partialorder %v913, 0.0
  %vm930 = vcmp.gt.f32.partialorder %v914, 0.0
  %vm931 = vcmp.gt.f32.partialorder %v915, 0.0
  %vm932 = vcmp.gt.f32.partialorder %v916, 0.0
  %vm933 = vcmp.gt.f32.partialorder %v917, 0.0
  %vm934 = vcmp.gt.f32.partialorder %v918, 0.0
  %vm935 = vcmp.gt.f32.partialorder %v919, 0.0
  %vm936 = vcmp.gt.f32.partialorder %v920, 0.0
  %vm937 = vcmp.gt.f32.partialorder %v921, 0.0
  %vm938 = vcmp.gt.f32.partialorder %v922, 0.0
  %vm939 = vcmp.gt.f32.partialorder %v923, 0.0
  %v940 = vmul.f32 %v908, 0.2
  %v941 = vmul.f32 %v909, 0.2
  %v942 = vmul.f32 %v910, 0.2
  %v943 = vmul.f32 %v911, 0.2
  %v944 = vmul.f32 %v912, 0.2
  %v945 = vmul.f32 %v913, 0.2
  %v946 = vmul.f32 %v914, 0.2
  %v947 = vmul.f32 %v915, 0.2
  %v948 = vmul.f32 %v916, 0.2
  %v949 = vmul.f32 %v917, 0.2
  %v950 = vmul.f32 %v918, 0.2
  %v951 = vmul.f32 %v919, 0.2
  %v952 = vmul.f32 %v920, 0.2
  %v953 = vmul.f32 %v921, 0.2
  %v954 = vmul.f32 %v922, 0.2
  %v955 = vmul.f32 %v923, 0.2
  %v956 = vsel %vm924, %v908, %v940
  %v957 = vsel %vm925, %v909, %v941
  %v958 = vsel %vm926, %v910, %v942
  %v959 = vsel %vm927, %v911, %v943
  %v960 = vsel %vm928, %v912, %v944
  %v961 = vsel %vm929, %v913, %v945
  %v962 = vsel %vm930, %v914, %v946
  %v963 = vsel %vm931, %v915, %v947
  %v964 = vsel %vm932, %v916, %v948
  %v965 = vsel %vm933, %v917, %v949
  %v966 = vsel %vm934, %v918, %v950
  %v967 = vsel %vm935, %v919, %v951
  %v968 = vsel %vm936, %v920, %v952
  %v969 = vsel %vm937, %v921, %v953
  %v970 = vsel %vm938, %v922, %v954
  %v971 = vsel %vm939, %v923, %v955
  %v972 = vadd.f32 %v956, %v82
  %v973 = vadd.f32 %v957, %v83
  %v974 = vadd.f32 %v958, %v84
  %v975 = vadd.f32 %v959, %v85
  %v976 = vadd.f32 %v960, %v86
  %v977 = vadd.f32 %v961, %v87
  %v978 = vadd.f32 %v962, %v88
  %v979 = vadd.f32 %v963, %v89
  %v980 = vadd.f32 %v964, %v90
  %v981 = vadd.f32 %v965, %v91
  %v982 = vadd.f32 %v966, %v92
  %v983 = vadd.f32 %v967, %v93
  %v984 = vadd.f32 %v968, %v94
  %v985 = vadd.f32 %v969, %v95
  %v986 = vadd.f32 %v970, %v96
  %v987 = vadd.f32 %v971, %v97
  %988 = vmax.xlane.f32.xlu0 %v972
  %v989 = vpop.xlane.xlu0 %988
  %990 = vmax.xlane.f32.xlu0 %v973
  %v991 = vpop.xlane.xlu0 %990
  %992 = vmax.xlane.f32.xlu0 %v974
  %v993 = vpop.xlane.xlu0 %992
  %994 = vmax.xlane.f32.xlu0 %v975
  %v995 = vpop.xlane.xlu0 %994
  %996 = vmax.xlane.f32.xlu0 %v976
  %v997 = vpop.xlane.xlu0 %996
  %998 = vmax.xlane.f32.xlu0 %v977
  %v999 = vpop.xlane.xlu0 %998
  %1000 = vmax.xlane.f32.xlu0 %v978
  %v1001 = vpop.xlane.xlu0 %1000
  %1002 = vmax.xlane.f32.xlu0 %v979
  %v1003 = vpop.xlane.xlu0 %1002
  %1004 = vmax.xlane.f32.xlu0 %v980
  %v1005 = vpop.xlane.xlu0 %1004
  %1006 = vmax.xlane.f32.xlu0 %v981
  %v1007 = vpop.xlane.xlu0 %1006
  %1008 = vmax.xlane.f32.xlu0 %v982
  %v1009 = vpop.xlane.xlu0 %1008
  %1010 = vmax.xlane.f32.xlu0 %v983
  %v1011 = vpop.xlane.xlu0 %1010
  %1012 = vmax.xlane.f32.xlu0 %v984
  %v1013 = vpop.xlane.xlu0 %1012
  %1014 = vmax.xlane.f32.xlu0 %v985
  %v1015 = vpop.xlane.xlu0 %1014
  %1016 = vmax.xlane.f32.xlu0 %v986
  %v1017 = vpop.xlane.xlu0 %1016
  %1018 = vmax.xlane.f32.xlu0 %v987
  %v1019 = vpop.xlane.xlu0 %1018
  %v1020 = vsub.f32 %v972, %v989
  %v1021 = vsub.f32 %v973, %v991
  %v1022 = vsub.f32 %v974, %v993
  %v1023 = vsub.f32 %v975, %v995
  %v1024 = vsub.f32 %v976, %v997
  %v1025 = vsub.f32 %v977, %v999
  %v1026 = vsub.f32 %v978, %v1001
  %v1027 = vsub.f32 %v979, %v1003
  %v1028 = vsub.f32 %v980, %v1005
  %v1029 = vsub.f32 %v981, %v1007
  %v1030 = vsub.f32 %v982, %v1009
  %v1031 = vsub.f32 %v983, %v1011
  %v1032 = vsub.f32 %v984, %v1013
  %v1033 = vsub.f32 %v985, %v1015
  %v1034 = vsub.f32 %v986, %v1017
  %v1035 = vsub.f32 %v987, %v1019
  %v1036 = vmul.f32 %v1020, 1.442695
  %v1037 = vpow.pop %v1036
  %v1038 = vmul.f32 %v1021, 1.442695
  %v1039 = vpow.pop %v1038
  %v1040 = vmul.f32 %v1022, 1.442695
  %v1041 = vpow.pop %v1040
  %v1042 = vmul.f32 %v1023, 1.442695
  %v1043 = vpow.pop %v1042
  %v1044 = vmul.f32 %v1024, 1.442695
  %v1045 = vpow.pop %v1044
  %v1046 = vmul.f32 %v1025, 1.442695
  %v1047 = vpow.pop %v1046
  %v1048 = vmul.f32 %v1026, 1.442695
  %v1049 = vpow.pop %v1048
  %v1050 = vmul.f32 %v1027, 1.442695
  %v1051 = vpow.pop %v1050
  %v1052 = vmul.f32 %v1028, 1.442695
  %v1053 = vpow.pop %v1052
  %v1054 = vmul.f32 %v1029, 1.442695
  %v1055 = vpow.pop %v1054
  %v1056 = vmul.f32 %v1030, 1.442695
  %v1057 = vpow.pop %v1056
  %v1058 = vmul.f32 %v1031, 1.442695
  %v1059 = vpow.pop %v1058
  %v1060 = vmul.f32 %v1032, 1.442695
  %v1061 = vpow.pop %v1060
  %v1062 = vmul.f32 %v1033, 1.442695
  %v1063 = vpow.pop %v1062
  %v1064 = vmul.f32 %v1034, 1.442695
  %v1065 = vpow.pop %v1064
  %v1066 = vmul.f32 %v1035, 1.442695
  %v1067 = vpow.pop %v1066
  %1068 = vadd.xlane.f32.xlu0 %v1037
  %v1069 = vpop.xlane.xlu0 %1068
  %1070 = vadd.xlane.f32.xlu0 %v1039
  %v1071 = vpop.xlane.xlu0 %1070
  %1072 = vadd.xlane.f32.xlu0 %v1041
  %v1073 = vpop.xlane.xlu0 %1072
  %1074 = vadd.xlane.f32.xlu0 %v1043
  %v1075 = vpop.xlane.xlu0 %1074
  %1076 = vadd.xlane.f32.xlu0 %v1045
  %v1077 = vpop.xlane.xlu0 %1076
  %1078 = vadd.xlane.f32.xlu0 %v1047
  %v1079 = vpop.xlane.xlu0 %1078
  %1080 = vadd.xlane.f32.xlu0 %v1049
  %v1081 = vpop.xlane.xlu0 %1080
  %1082 = vadd.xlane.f32.xlu0 %v1051
  %v1083 = vpop.xlane.xlu0 %1082
  %1084 = vadd.xlane.f32.xlu0 %v1053
  %v1085 = vpop.xlane.xlu0 %1084
  %1086 = vadd.xlane.f32.xlu0 %v1055
  %v1087 = vpop.xlane.xlu0 %1086
  %1088 = vadd.xlane.f32.xlu0 %v1057
  %v1089 = vpop.xlane.xlu0 %1088
  %1090 = vadd.xlane.f32.xlu0 %v1059
  %v1091 = vpop.xlane.xlu0 %1090
  %1092 = vadd.xlane.f32.xlu0 %v1061
  %v1093 = vpop.xlane.xlu0 %1092
  %1094 = vadd.xlane.f32.xlu0 %v1063
  %v1095 = vpop.xlane.xlu0 %1094
  %1096 = vadd.xlane.f32.xlu0 %v1065
  %v1097 = vpop.xlane.xlu0 %1096
  %1098 = vadd.xlane.f32.xlu0 %v1067
  %v1099 = vpop.xlane.xlu0 %1098
  %v1100 = vrcp.pop %v1069
  %v1101 = vrcp.pop %v1071
  %v1102 = vrcp.pop %v1073
  %v1103 = vrcp.pop %v1075
  %v1104 = vrcp.pop %v1077
  %v1105 = vrcp.pop %v1079
  %v1106 = vrcp.pop %v1081
  %v1107 = vrcp.pop %v1083
  %v1108 = vrcp.pop %v1085
  %v1109 = vrcp.pop %v1087
  %v1110 = vrcp.pop %v1089
  %v1111 = vrcp.pop %v1091
  %v1112 = vrcp.pop %v1093
  %v1113 = vrcp.pop %v1095
  %v1114 = vrcp.pop %v1097
  %v1115 = vrcp.pop %v1099
  %v1116 = vmul.f32 %v1037, %v1100
  %v1117 = vmul.f32 %v1039, %v1101
  %v1118 = vmul.f32 %v1041, %v1102
  %v1119 = vmul.f32 %v1043, %v1103
  %v1120 = vmul.f32 %v1045, %v1104
  %v1121 = vmul.f32 %v1047, %v1105
  %v1122 = vmul.f32 %v1049, %v1106
  %v1123 = vmul.f32 %v1051, %v1107
  %v1124 = vmul.f32 %v1053, %v1108
  %v1125 = vmul.f32 %v1055, %v1109
  %v1126 = vmul.f32 %v1057, %v1110
  %v1127 = vmul.f32 %v1059, %v1111
  %v1128 = vmul.f32 %v1061, %v1112
  %v1129 = vmul.f32 %v1063, %v1113
  %v1130 = vmul.f32 %v1065, %v1114
  %v1131 = vmul.f32 %v1067, %v1115
  %v1132 = vpack.c.bf16 %v1117, %v1116
  %v1133 = vpack.c.bf16 %v1119, %v1118
  %v1134 = vpack.c.bf16 %v1121, %v1120
  %v1135 = vpack.c.bf16 %v1123, %v1122
  %v1136 = vpack.c.bf16 %v1125, %v1124
  %v1137 = vpack.c.bf16 %v1127, %v1126
  %v1138 = vpack.c.bf16 %v1129, %v1128
  %v1139 = vpack.c.bf16 %v1131, %v1130
  %1140 = vmatprep.subr.bf16.mxu0 0
  %1141 = vmatpush1.bf16.msra.mxu0 %v256
  %1142 = vmatprep.subr.bf16.mxu0 0
  %1143 = vmatpush1.bf16.msra.mxu0 %v257
  %1144 = vmatprep.subr.bf16.mxu0 0
  %1145 = vmatpush1.bf16.msra.mxu0 %v258
  %1146 = vmatprep.subr.bf16.mxu0 0
  %1147 = vmatpush1.bf16.msra.mxu0 %v259
  %1148 = vmatprep.subr.bf16.mxu0 0
  %1149 = vmatpush1.bf16.msra.mxu0 %v260
  %1150 = vmatprep.subr.bf16.mxu0 0
  %1151 = vmatpush1.bf16.msra.mxu0 %v261
  %1152 = vmatprep.subr.bf16.mxu0 0
  %1153 = vmatpush1.bf16.msra.mxu0 %v262
  %1154 = vmatprep.subr.bf16.mxu0 0
  %1155 = vmatpush1.bf16.msra.mxu0 %v263
  %1156 = vmatprep.subr.bf16.mxu0 0
  %1157 = vmatpush1.bf16.msra.mxu0 0
  %1158 = vmatprep.subr.bf16.mxu0 0
  %1159 = vmatpush1.bf16.msra.mxu0 0
  %1160 = vmatprep.subr.bf16.mxu0 0
  %1161 = vmatpush1.bf16.msra.mxu0 0
  %1162 = vmatprep.subr.bf16.mxu0 0
  %1163 = vmatpush1.bf16.msra.mxu0 0
  %1164 = vmatprep.subr.bf16.mxu0 0
  %1165 = vmatpush1.bf16.msra.mxu0 0
  %1166 = vmatprep.subr.bf16.mxu0 0
  %1167 = vmatpush1.bf16.msra.mxu0 0
  %1168 = vmatprep.subr.bf16.mxu0 0
  %1169 = vmatpush1.bf16.msra.mxu0 0
  %1170 = vmatprep.subr.bf16.mxu0 0
  %1171 = vmatpush1.bf16.msra.mxu0 0
  %1172 = vmatprep.mubr.bf16.mxu0 0
  %1173 = vmatmul.mubr.bf16.gmra.mrb[0].mxu0 %v1132
  %v1174 = vpop.f32.mrb[0].mxu0
  %v1175 = vadd.f32 0.0, %v1174
  %v1176 = vpop.f32.mrb[0].mxu0
  %v1177 = vpop.f32.mrb[0].mxu0
  %v1178 = vadd.f32 0.0, %v1177
  %v1179 = vpop.f32.mrb[0].mxu0
  %1180 = vmatprep.mubr.bf16.mxu0 0
  %1181 = vmatmul.mubr.bf16.gmra.mrb[0].mxu0 %v1133
  %v1182 = vpop.f32.mrb[0].mxu0
  %v1183 = vadd.f32 0.0, %v1182
  %v1184 = vpop.f32.mrb[0].mxu0
  %v1185 = vpop.f32.mrb[0].mxu0
  %v1186 = vadd.f32 0.0, %v1185
  %v1187 = vpop.f32.mrb[0].mxu0
  %1188 = vmatprep.mubr.bf16.mxu0 0
  %1189 = vmatmul.mubr.bf16.gmra.mrb[0].mxu0 %v1134
  %v1190 = vpop.f32.mrb[0].mxu0
  %v1191 = vadd.f32 0.0, %v1190
  %v1192 = vpop.f32.mrb[0].mxu0
  %v1193 = vpop.f32.mrb[0].mxu0
  %v1194 = vadd.f32 0.0, %v1193
  %v1195 = vpop.f32.mrb[0].mxu0
  %1196 = vmatprep.mubr.bf16.mxu0 0
  %1197 = vmatmul.mubr.bf16.gmra.mrb[0].mxu0 %v1135
  %v1198 = vpop.f32.mrb[0].mxu0
  %v1199 = vadd.f32 0.0, %v1198
  %v1200 = vpop.f32.mrb[0].mxu0
  %v1201 = vpop.f32.mrb[0].mxu0
  %v1202 = vadd.f32 0.0, %v1201
  %v1203 = vpop.f32.mrb[0].mxu0
  %1204 = vmatprep.mubr.bf16.mxu0 0
  %1205 = vmatmul.mubr.bf16.gmra.mrb[0].mxu0 %v1136
  %v1206 = vpop.f32.mrb[0].mxu0
  %v1207 = vadd.f32 0.0, %v1206
  %v1208 = vpop.f32.mrb[0].mxu0
  %v1209 = vpop.f32.mrb[0].mxu0
  %v1210 = vadd.f32 0.0, %v1209
  %v1211 = vpop.f32.mrb[0].mxu0
  %1212 = vmatprep.mubr.bf16.mxu0 0
  %1213 = vmatmul.mubr.bf16.gmra.mrb[0].mxu0 %v1137
  %v1214 = vpop.f32.mrb[0].mxu0
  %v1215 = vadd.f32 0.0, %v1214
  %v1216 = vpop.f32.mrb[0].mxu0
  %v1217 = vpop.f32.mrb[0].mxu0
  %v1218 = vadd.f32 0.0, %v1217
  %v1219 = vpop.f32.mrb[0].mxu0
  %1220 = vmatprep.mubr.bf16.mxu0 0
  %1221 = vmatmul.mubr.bf16.gmra.mrb[0].mxu0 %v1138
  %v1222 = vpop.f32.mrb[0].mxu0
  %v1223 = vadd.f32 0.0, %v1222
  %v1224 = vpop.f32.mrb[0].mxu0
  %v1225 = vpop.f32.mrb[0].mxu0
  %v1226 = vadd.f32 0.0, %v1225
  %v1227 = vpop.f32.mrb[0].mxu0
  %1228 = vmatprep.mubr.bf16.mxu0 0
  %1229 = vmatmul.mubr.bf16.gmra.mrb[0].mxu0 %v1139
  %v1230 = vpop.f32.mrb[0].mxu0
  %v1231 = vadd.f32 0.0, %v1230
  %v1232 = vpop.f32.mrb[0].mxu0
  %v1233 = vpop.f32.mrb[0].mxu0
  %v1234 = vadd.f32 0.0, %v1233
  %v1235 = vpop.f32.mrb[0].mxu0
  %1236 = vdwg.mxu0
  %vm1237 = vcmp.ge.s32.totalorder %v426, 8
  %vm1238 = vcmp.lt.s32.totalorder %v426, 16
  %vm1239 = vmand %vm1237, %vm1238
  %v1240 = vsel %vm1239, 1, 0
  %vm1241 = vcmp.eq.s32.totalorder %v1240, 1
  %v1242 = vsel %vm1241, %v1175, %v778
  %v1243 = vsel %vm1241, %v1178, %v781
  %v1244 = vsel %vm1241, %v1183, %v786
  %v1245 = vsel %vm1241, %v1186, %v789
  %v1246 = vsel %vm1241, %v1191, %v794
  %v1247 = vsel %vm1241, %v1194, %v797
  %v1248 = vsel %vm1241, %v1199, %v802
  %v1249 = vsel %vm1241, %v1202, %v805
  %v1250 = vsel %vm1241, %v1207, %v810
  %v1251 = vsel %vm1241, %v1210, %v813
  %v1252 = vsel %vm1241, %v1215, %v818
  %v1253 = vsel %vm1241, %v1218, %v821
  %v1254 = vsel %vm1241, %v1223, %v826
  %v1255 = vsel %vm1241, %v1226, %v829
  %v1256 = vsel %vm1241, %v1231, %v834
  %v1257 = vsel %vm1241, %v1234, %v837
  %1258 = vset.pattern.permute.xlu0 6
  %1259 = vperm.xlu0 %1258, %v330
  %v1260 = vpop.permute.xlu0 %1259
  %1262 = vset.pattern.permute.xlu0 6
  %1263 = vperm.xlu0 %1262, %v333
  %v1264 = vpop.permute.xlu0 %1263
  %1266 = vset.pattern.permute.xlu0 6
  %1267 = vperm.xlu0 %1266, %v338
  %v1268 = vpop.permute.xlu0 %1267
  %1270 = vset.pattern.permute.xlu0 6
  %1271 = vperm.xlu0 %1270, %v341
  %v1272 = vpop.permute.xlu0 %1271
  %1274 = vset.pattern.permute.xlu0 6
  %1275 = vperm.xlu0 %1274, %v346
  %v1276 = vpop.permute.xlu0 %1275
  %1278 = vset.pattern.permute.xlu0 6
  %1279 = vperm.xlu0 %1278, %v349
  %v1280 = vpop.permute.xlu0 %1279
  %1282 = vset.pattern.permute.xlu0 6
  %1283 = vperm.xlu0 %1282, %v354
  %v1284 = vpop.permute.xlu0 %1283
  %1286 = vset.pattern.permute.xlu0 6
  %1287 = vperm.xlu0 %1286, %v357
  %v1288 = vpop.permute.xlu0 %1287
  %1290 = vset.pattern.permute.xlu0 6
  %1291 = vperm.xlu0 %1290, %v362
  %v1292 = vpop.permute.xlu0 %1291
  %1294 = vset.pattern.permute.xlu0 6
  %1295 = vperm.xlu0 %1294, %v365
  %v1296 = vpop.permute.xlu0 %1295
  %1298 = vset.pattern.permute.xlu0 6
  %1299 = vperm.xlu0 %1298, %v370
  %v1300 = vpop.permute.xlu0 %1299
  %1302 = vset.pattern.permute.xlu0 6
  %1303 = vperm.xlu0 %1302, %v373
  %v1304 = vpop.permute.xlu0 %1303
  %1306 = vset.pattern.permute.xlu0 6
  %1307 = vperm.xlu0 %1306, %v378
  %v1308 = vpop.permute.xlu0 %1307
  %1310 = vset.pattern.permute.xlu0 6
  %1311 = vperm.xlu0 %1310, %v381
  %v1312 = vpop.permute.xlu0 %1311
  %1314 = vset.pattern.permute.xlu0 6
  %1315 = vperm.xlu0 %1314, %v386
  %v1316 = vpop.permute.xlu0 %1315
  %1318 = vset.pattern.permute.xlu0 6
  %1319 = vperm.xlu0 %1318, %v389
  %v1320 = vpop.permute.xlu0 %1319
  %v1322 = vlaneseq
  %v1323 = vshrl.u32 %v1322, 7
  %v1324 = vsub.s32 2, %v1323
  %v1325 = vrot.slane %v408, %v1324
  %v1326 = vadd.f32 %v1260, %v1325
  %v1327 = vadd.f32 %v1264, %v1325
  %v1328 = vadd.f32 %v1268, %v1325
  %v1329 = vadd.f32 %v1272, %v1325
  %v1330 = vadd.f32 %v1276, %v1325
  %v1331 = vadd.f32 %v1280, %v1325
  %v1332 = vadd.f32 %v1284, %v1325
  %v1333 = vadd.f32 %v1288, %v1325
  %v1334 = vadd.f32 %v1292, %v1325
  %v1335 = vadd.f32 %v1296, %v1325
  %v1336 = vadd.f32 %v1300, %v1325
  %v1337 = vadd.f32 %v1304, %v1325
  %v1338 = vadd.f32 %v1308, %v1325
  %v1339 = vadd.f32 %v1312, %v1325
  %v1340 = vadd.f32 %v1316, %v1325
  %v1341 = vadd.f32 %v1320, %v1325
  %vm1342 = vcmp.gt.f32.partialorder %v1326, 0.0
  %vm1343 = vcmp.gt.f32.partialorder %v1327, 0.0
  %vm1344 = vcmp.gt.f32.partialorder %v1328, 0.0
  %vm1345 = vcmp.gt.f32.partialorder %v1329, 0.0
  %vm1346 = vcmp.gt.f32.partialorder %v1330, 0.0
  %vm1347 = vcmp.gt.f32.partialorder %v1331, 0.0
  %vm1348 = vcmp.gt.f32.partialorder %v1332, 0.0
  %vm1349 = vcmp.gt.f32.partialorder %v1333, 0.0
  %vm1350 = vcmp.gt.f32.partialorder %v1334, 0.0
  %vm1351 = vcmp.gt.f32.partialorder %v1335, 0.0
  %vm1352 = vcmp.gt.f32.partialorder %v1336, 0.0
  %vm1353 = vcmp.gt.f32.partialorder %v1337, 0.0
  %vm1354 = vcmp.gt.f32.partialorder %v1338, 0.0
  %vm1355 = vcmp.gt.f32.partialorder %v1339, 0.0
  %vm1356 = vcmp.gt.f32.partialorder %v1340, 0.0
  %vm1357 = vcmp.gt.f32.partialorder %v1341, 0.0
  %v1358 = vmul.f32 %v1326, 0.2
  %v1359 = vmul.f32 %v1327, 0.2
  %v1360 = vmul.f32 %v1328, 0.2
  %v1361 = vmul.f32 %v1329, 0.2
  %v1362 = vmul.f32 %v1330, 0.2
  %v1363 = vmul.f32 %v1331, 0.2
  %v1364 = vmul.f32 %v1332, 0.2
  %v1365 = vmul.f32 %v1333, 0.2
  %v1366 = vmul.f32 %v1334, 0.2
  %v1367 = vmul.f32 %v1335, 0.2
  %v1368 = vmul.f32 %v1336, 0.2
  %v1369 = vmul.f32 %v1337, 0.2
  %v1370 = vmul.f32 %v1338, 0.2
  %v1371 = vmul.f32 %v1339, 0.2
  %v1372 = vmul.f32 %v1340, 0.2
  %v1373 = vmul.f32 %v1341, 0.2
  %v1374 = vsel %vm1342, %v1326, %v1358
  %v1375 = vsel %vm1343, %v1327, %v1359
  %v1376 = vsel %vm1344, %v1328, %v1360
  %v1377 = vsel %vm1345, %v1329, %v1361
  %v1378 = vsel %vm1346, %v1330, %v1362
  %v1379 = vsel %vm1347, %v1331, %v1363
  %v1380 = vsel %vm1348, %v1332, %v1364
  %v1381 = vsel %vm1349, %v1333, %v1365
  %v1382 = vsel %vm1350, %v1334, %v1366
  %v1383 = vsel %vm1351, %v1335, %v1367
  %v1384 = vsel %vm1352, %v1336, %v1368
  %v1385 = vsel %vm1353, %v1337, %v1369
  %v1386 = vsel %vm1354, %v1338, %v1370
  %v1387 = vsel %vm1355, %v1339, %v1371
  %v1388 = vsel %vm1356, %v1340, %v1372
  %v1389 = vsel %vm1357, %v1341, %v1373
  %v1390 = vadd.f32 %v1374, %v82
  %v1391 = vadd.f32 %v1375, %v83
  %v1392 = vadd.f32 %v1376, %v84
  %v1393 = vadd.f32 %v1377, %v85
  %v1394 = vadd.f32 %v1378, %v86
  %v1395 = vadd.f32 %v1379, %v87
  %v1396 = vadd.f32 %v1380, %v88
  %v1397 = vadd.f32 %v1381, %v89
  %v1398 = vadd.f32 %v1382, %v90
  %v1399 = vadd.f32 %v1383, %v91
  %v1400 = vadd.f32 %v1384, %v92
  %v1401 = vadd.f32 %v1385, %v93
  %v1402 = vadd.f32 %v1386, %v94
  %v1403 = vadd.f32 %v1387, %v95
  %v1404 = vadd.f32 %v1388, %v96
  %v1405 = vadd.f32 %v1389, %v97
  %1406 = vmax.xlane.f32.xlu0 %v1390
  %v1407 = vpop.xlane.xlu0 %1406
  %1408 = vmax.xlane.f32.xlu0 %v1391
  %v1409 = vpop.xlane.xlu0 %1408
  %1410 = vmax.xlane.f32.xlu0 %v1392
  %v1411 = vpop.xlane.xlu0 %1410
  %1412 = vmax.xlane.f32.xlu0 %v1393
  %v1413 = vpop.xlane.xlu0 %1412
  %1414 = vmax.xlane.f32.xlu0 %v1394
  %v1415 = vpop.xlane.xlu0 %1414
  %1416 = vmax.xlane.f32.xlu0 %v1395
  %v1417 = vpop.xlane.xlu0 %1416
  %1418 = vmax.xlane.f32.xlu0 %v1396
  %v1419 = vpop.xlane.xlu0 %1418
  %1420 = vmax.xlane.f32.xlu0 %v1397
  %v1421 = vpop.xlane.xlu0 %1420
  %1422 = vmax.xlane.f32.xlu0 %v1398
  %v1423 = vpop.xlane.xlu0 %1422
  %1424 = vmax.xlane.f32.xlu0 %v1399
  %v1425 = vpop.xlane.xlu0 %1424
  %1426 = vmax.xlane.f32.xlu0 %v1400
  %v1427 = vpop.xlane.xlu0 %1426
  %1428 = vmax.xlane.f32.xlu0 %v1401
  %v1429 = vpop.xlane.xlu0 %1428
  %1430 = vmax.xlane.f32.xlu0 %v1402
  %v1431 = vpop.xlane.xlu0 %1430
  %1432 = vmax.xlane.f32.xlu0 %v1403
  %v1433 = vpop.xlane.xlu0 %1432
  %1434 = vmax.xlane.f32.xlu0 %v1404
  %v1435 = vpop.xlane.xlu0 %1434
  %1436 = vmax.xlane.f32.xlu0 %v1405
  %v1437 = vpop.xlane.xlu0 %1436
  %v1438 = vsub.f32 %v1390, %v1407
  %v1439 = vsub.f32 %v1391, %v1409
  %v1440 = vsub.f32 %v1392, %v1411
  %v1441 = vsub.f32 %v1393, %v1413
  %v1442 = vsub.f32 %v1394, %v1415
  %v1443 = vsub.f32 %v1395, %v1417
  %v1444 = vsub.f32 %v1396, %v1419
  %v1445 = vsub.f32 %v1397, %v1421
  %v1446 = vsub.f32 %v1398, %v1423
  %v1447 = vsub.f32 %v1399, %v1425
  %v1448 = vsub.f32 %v1400, %v1427
  %v1449 = vsub.f32 %v1401, %v1429
  %v1450 = vsub.f32 %v1402, %v1431
  %v1451 = vsub.f32 %v1403, %v1433
  %v1452 = vsub.f32 %v1404, %v1435
  %v1453 = vsub.f32 %v1405, %v1437
  %v1454 = vmul.f32 %v1438, 1.442695
  %v1455 = vpow.pop %v1454
  %v1456 = vmul.f32 %v1439, 1.442695
  %v1457 = vpow.pop %v1456
  %v1458 = vmul.f32 %v1440, 1.442695
  %v1459 = vpow.pop %v1458
  %v1460 = vmul.f32 %v1441, 1.442695
  %v1461 = vpow.pop %v1460
  %v1462 = vmul.f32 %v1442, 1.442695
  %v1463 = vpow.pop %v1462
  %v1464 = vmul.f32 %v1443, 1.442695
  %v1465 = vpow.pop %v1464
  %v1466 = vmul.f32 %v1444, 1.442695
  %v1467 = vpow.pop %v1466
  %v1468 = vmul.f32 %v1445, 1.442695
  %v1469 = vpow.pop %v1468
  %v1470 = vmul.f32 %v1446, 1.442695
  %v1471 = vpow.pop %v1470
  %v1472 = vmul.f32 %v1447, 1.442695
  %v1473 = vpow.pop %v1472
  %v1474 = vmul.f32 %v1448, 1.442695
  %v1475 = vpow.pop %v1474
  %v1476 = vmul.f32 %v1449, 1.442695
  %v1477 = vpow.pop %v1476
  %v1478 = vmul.f32 %v1450, 1.442695
  %v1479 = vpow.pop %v1478
  %v1480 = vmul.f32 %v1451, 1.442695
  %v1481 = vpow.pop %v1480
  %v1482 = vmul.f32 %v1452, 1.442695
  %v1483 = vpow.pop %v1482
  %v1484 = vmul.f32 %v1453, 1.442695
  %v1485 = vpow.pop %v1484
  %1486 = vadd.xlane.f32.xlu0 %v1455
  %v1487 = vpop.xlane.xlu0 %1486
  %1488 = vadd.xlane.f32.xlu0 %v1457
  %v1489 = vpop.xlane.xlu0 %1488
  %1490 = vadd.xlane.f32.xlu0 %v1459
  %v1491 = vpop.xlane.xlu0 %1490
  %1492 = vadd.xlane.f32.xlu0 %v1461
  %v1493 = vpop.xlane.xlu0 %1492
  %1494 = vadd.xlane.f32.xlu0 %v1463
  %v1495 = vpop.xlane.xlu0 %1494
  %1496 = vadd.xlane.f32.xlu0 %v1465
  %v1497 = vpop.xlane.xlu0 %1496
  %1498 = vadd.xlane.f32.xlu0 %v1467
  %v1499 = vpop.xlane.xlu0 %1498
  %1500 = vadd.xlane.f32.xlu0 %v1469
  %v1501 = vpop.xlane.xlu0 %1500
  %1502 = vadd.xlane.f32.xlu0 %v1471
  %v1503 = vpop.xlane.xlu0 %1502
  %1504 = vadd.xlane.f32.xlu0 %v1473
  %v1505 = vpop.xlane.xlu0 %1504
  %1506 = vadd.xlane.f32.xlu0 %v1475
  %v1507 = vpop.xlane.xlu0 %1506
  %1508 = vadd.xlane.f32.xlu0 %v1477
  %v1509 = vpop.xlane.xlu0 %1508
  %1510 = vadd.xlane.f32.xlu0 %v1479
  %v1511 = vpop.xlane.xlu0 %1510
  %1512 = vadd.xlane.f32.xlu0 %v1481
  %v1513 = vpop.xlane.xlu0 %1512
  %1514 = vadd.xlane.f32.xlu0 %v1483
  %v1515 = vpop.xlane.xlu0 %1514
  %1516 = vadd.xlane.f32.xlu0 %v1485
  %v1517 = vpop.xlane.xlu0 %1516
  %v1518 = vrcp.pop %v1487
  %v1519 = vrcp.pop %v1489
  %v1520 = vrcp.pop %v1491
  %v1521 = vrcp.pop %v1493
  %v1522 = vrcp.pop %v1495
  %v1523 = vrcp.pop %v1497
  %v1524 = vrcp.pop %v1499
  %v1525 = vrcp.pop %v1501
  %v1526 = vrcp.pop %v1503
  %v1527 = vrcp.pop %v1505
  %v1528 = vrcp.pop %v1507
  %v1529 = vrcp.pop %v1509
  %v1530 = vrcp.pop %v1511
  %v1531 = vrcp.pop %v1513
  %v1532 = vrcp.pop %v1515
  %v1533 = vrcp.pop %v1517
  %v1534 = vmul.f32 %v1455, %v1518
  %v1535 = vmul.f32 %v1457, %v1519
  %v1536 = vmul.f32 %v1459, %v1520
  %v1537 = vmul.f32 %v1461, %v1521
  %v1538 = vmul.f32 %v1463, %v1522
  %v1539 = vmul.f32 %v1465, %v1523
  %v1540 = vmul.f32 %v1467, %v1524
  %v1541 = vmul.f32 %v1469, %v1525
  %v1542 = vmul.f32 %v1471, %v1526
  %v1543 = vmul.f32 %v1473, %v1527
  %v1544 = vmul.f32 %v1475, %v1528
  %v1545 = vmul.f32 %v1477, %v1529
  %v1546 = vmul.f32 %v1479, %v1530
  %v1547 = vmul.f32 %v1481, %v1531
  %v1548 = vmul.f32 %v1483, %v1532
  %v1549 = vmul.f32 %v1485, %v1533
  %v1550 = vpack.c.bf16 %v1535, %v1534
  %v1551 = vpack.c.bf16 %v1537, %v1536
  %v1552 = vpack.c.bf16 %v1539, %v1538
  %v1553 = vpack.c.bf16 %v1541, %v1540
  %v1554 = vpack.c.bf16 %v1543, %v1542
  %v1555 = vpack.c.bf16 %v1545, %v1544
  %v1556 = vpack.c.bf16 %v1547, %v1546
  %v1557 = vpack.c.bf16 %v1549, %v1548
  %1558 = vmatprep.subr.bf16.mxu0 0
  %1559 = vmatpush1.bf16.msra.mxu0 %v256
  %1560 = vmatprep.subr.bf16.mxu0 0
  %1561 = vmatpush1.bf16.msra.mxu0 %v257
  %1562 = vmatprep.subr.bf16.mxu0 0
  %1563 = vmatpush1.bf16.msra.mxu0 %v258
  %1564 = vmatprep.subr.bf16.mxu0 0
  %1565 = vmatpush1.bf16.msra.mxu0 %v259
  %1566 = vmatprep.subr.bf16.mxu0 0
  %1567 = vmatpush1.bf16.msra.mxu0 %v260
  %1568 = vmatprep.subr.bf16.mxu0 0
  %1569 = vmatpush1.bf16.msra.mxu0 %v261
  %1570 = vmatprep.subr.bf16.mxu0 0
  %1571 = vmatpush1.bf16.msra.mxu0 %v262
  %1572 = vmatprep.subr.bf16.mxu0 0
  %1573 = vmatpush1.bf16.msra.mxu0 %v263
  %1574 = vmatprep.subr.bf16.mxu0 0
  %1575 = vmatpush1.bf16.msra.mxu0 0
  %1576 = vmatprep.subr.bf16.mxu0 0
  %1577 = vmatpush1.bf16.msra.mxu0 0
  %1578 = vmatprep.subr.bf16.mxu0 0
  %1579 = vmatpush1.bf16.msra.mxu0 0
  %1580 = vmatprep.subr.bf16.mxu0 0
  %1581 = vmatpush1.bf16.msra.mxu0 0
  %1582 = vmatprep.subr.bf16.mxu0 0
  %1583 = vmatpush1.bf16.msra.mxu0 0
  %1584 = vmatprep.subr.bf16.mxu0 0
  %1585 = vmatpush1.bf16.msra.mxu0 0
  %1586 = vmatprep.subr.bf16.mxu0 0
  %1587 = vmatpush1.bf16.msra.mxu0 0
  %1588 = vmatprep.subr.bf16.mxu0 0
  %1589 = vmatpush1.bf16.msra.mxu0 0
  %1590 = vmatprep.mubr.bf16.mxu0 0
  %1591 = vmatmul.mubr.bf16.gmra.mrb[0].mxu0 %v1550
  %v1592 = vpop.f32.mrb[0].mxu0
  %v1593 = vadd.f32 0.0, %v1592
  %v1594 = vpop.f32.mrb[0].mxu0
  %v1595 = vpop.f32.mrb[0].mxu0
  %v1596 = vadd.f32 0.0, %v1595
  %v1597 = vpop.f32.mrb[0].mxu0
  %1598 = vmatprep.mubr.bf16.mxu0 0
  %1599 = vmatmul.mubr.bf16.gmra.mrb[0].mxu0 %v1551
  %v1600 = vpop.f32.mrb[0].mxu0
  %v1601 = vadd.f32 0.0, %v1600
  %v1602 = vpop.f32.mrb[0].mxu0
  %v1603 = vpop.f32.mrb[0].mxu0
  %v1604 = vadd.f32 0.0, %v1603
  %v1605 = vpop.f32.mrb[0].mxu0
  %1606 = vmatprep.mubr.bf16.mxu0 0
  %1607 = vmatmul.mubr.bf16.gmra.mrb[0].mxu0 %v1552
  %v1608 = vpop.f32.mrb[0].mxu0
  %v1609 = vadd.f32 0.0, %v1608
  %v1610 = vpop.f32.mrb[0].mxu0
  %v1611 = vpop.f32.mrb[0].mxu0
  %v1612 = vadd.f32 0.0, %v1611
  %v1613 = vpop.f32.mrb[0].mxu0
  %1614 = vmatprep.mubr.bf16.mxu0 0
  %1615 = vmatmul.mubr.bf16.gmra.mrb[0].mxu0 %v1553
  %v1616 = vpop.f32.mrb[0].mxu0
  %v1617 = vadd.f32 0.0, %v1616
  %v1618 = vpop.f32.mrb[0].mxu0
  %v1619 = vpop.f32.mrb[0].mxu0
  %v1620 = vadd.f32 0.0, %v1619
  %v1621 = vpop.f32.mrb[0].mxu0
  %1622 = vmatprep.mubr.bf16.mxu0 0
  %1623 = vmatmul.mubr.bf16.gmra.mrb[0].mxu0 %v1554
  %v1624 = vpop.f32.mrb[0].mxu0
  %v1625 = vadd.f32 0.0, %v1624
  %v1626 = vpop.f32.mrb[0].mxu0
  %v1627 = vpop.f32.mrb[0].mxu0
  %v1628 = vadd.f32 0.0, %v1627
  %v1629 = vpop.f32.mrb[0].mxu0
  %1630 = vmatprep.mubr.bf16.mxu0 0
  %1631 = vmatmul.mubr.bf16.gmra.mrb[0].mxu0 %v1555
  %v1632 = vpop.f32.mrb[0].mxu0
  %v1633 = vadd.f32 0.0, %v1632
  %v1634 = vpop.f32.mrb[0].mxu0
  %v1635 = vpop.f32.mrb[0].mxu0
  %v1636 = vadd.f32 0.0, %v1635
  %v1637 = vpop.f32.mrb[0].mxu0
  %1638 = vmatprep.mubr.bf16.mxu0 0
  %1639 = vmatmul.mubr.bf16.gmra.mrb[0].mxu0 %v1556
  %v1640 = vpop.f32.mrb[0].mxu0
  %v1641 = vadd.f32 0.0, %v1640
  %v1642 = vpop.f32.mrb[0].mxu0
  %v1643 = vpop.f32.mrb[0].mxu0
  %v1644 = vadd.f32 0.0, %v1643
  %v1645 = vpop.f32.mrb[0].mxu0
  %1646 = vmatprep.mubr.bf16.mxu0 0
  %1647 = vmatmul.mubr.bf16.gmra.mrb[0].mxu0 %v1557
  %v1648 = vpop.f32.mrb[0].mxu0
  %v1649 = vadd.f32 0.0, %v1648
  %v1650 = vpop.f32.mrb[0].mxu0
  %v1651 = vpop.f32.mrb[0].mxu0
  %v1652 = vadd.f32 0.0, %v1651
  %v1653 = vpop.f32.mrb[0].mxu0
  %1654 = vdwg.mxu0
  %vm1655 = vcmp.ge.s32.totalorder %v426, 16
  %vm1656 = vcmp.lt.s32.totalorder %v426, 24
  %vm1657 = vmand %vm1655, %vm1656
  %v1658 = vsel %vm1657, 1, 0
  %vm1659 = vcmp.eq.s32.totalorder %v1658, 1
  %v1660 = vsel %vm1659, %v1593, %v1242
  %v1661 = vsel %vm1659, %v1596, %v1243
  %v1662 = vsel %vm1659, %v1601, %v1244
  %v1663 = vsel %vm1659, %v1604, %v1245
  %v1664 = vsel %vm1659, %v1609, %v1246
  %v1665 = vsel %vm1659, %v1612, %v1247
  %v1666 = vsel %vm1659, %v1617, %v1248
  %v1667 = vsel %vm1659, %v1620, %v1249
  %v1668 = vsel %vm1659, %v1625, %v1250
  %v1669 = vsel %vm1659, %v1628, %v1251
  %v1670 = vsel %vm1659, %v1633, %v1252
  %v1671 = vsel %vm1659, %v1636, %v1253
  %v1672 = vsel %vm1659, %v1641, %v1254
  %v1673 = vsel %vm1659, %v1644, %v1255
  %v1674 = vsel %vm1659, %v1649, %v1256
  %v1675 = vsel %vm1659, %v1652, %v1257
  %1676 = vset.pattern.permute.xlu0 7
  %1677 = vperm.xlu0 %1676, %v330
  %v1678 = vpop.permute.xlu0 %1677
  %1680 = vset.pattern.permute.xlu0 7
  %1681 = vperm.xlu0 %1680, %v333
  %v1682 = vpop.permute.xlu0 %1681
  %1684 = vset.pattern.permute.xlu0 7
  %1685 = vperm.xlu0 %1684, %v338
  %v1686 = vpop.permute.xlu0 %1685
  %1688 = vset.pattern.permute.xlu0 7
  %1689 = vperm.xlu0 %1688, %v341
  %v1690 = vpop.permute.xlu0 %1689
  %1692 = vset.pattern.permute.xlu0 7
  %1693 = vperm.xlu0 %1692, %v346
  %v1694 = vpop.permute.xlu0 %1693
  %1696 = vset.pattern.permute.xlu0 7
  %1697 = vperm.xlu0 %1696, %v349
  %v1698 = vpop.permute.xlu0 %1697
  %1700 = vset.pattern.permute.xlu0 7
  %1701 = vperm.xlu0 %1700, %v354
  %v1702 = vpop.permute.xlu0 %1701
  %1704 = vset.pattern.permute.xlu0 7
  %1705 = vperm.xlu0 %1704, %v357
  %v1706 = vpop.permute.xlu0 %1705
  %1708 = vset.pattern.permute.xlu0 7
  %1709 = vperm.xlu0 %1708, %v362
  %v1710 = vpop.permute.xlu0 %1709
  %1712 = vset.pattern.permute.xlu0 7
  %1713 = vperm.xlu0 %1712, %v365
  %v1714 = vpop.permute.xlu0 %1713
  %1716 = vset.pattern.permute.xlu0 7
  %1717 = vperm.xlu0 %1716, %v370
  %v1718 = vpop.permute.xlu0 %1717
  %1720 = vset.pattern.permute.xlu0 7
  %1721 = vperm.xlu0 %1720, %v373
  %v1722 = vpop.permute.xlu0 %1721
  %1724 = vset.pattern.permute.xlu0 7
  %1725 = vperm.xlu0 %1724, %v378
  %v1726 = vpop.permute.xlu0 %1725
  %1728 = vset.pattern.permute.xlu0 7
  %1729 = vperm.xlu0 %1728, %v381
  %v1730 = vpop.permute.xlu0 %1729
  %1732 = vset.pattern.permute.xlu0 7
  %1733 = vperm.xlu0 %1732, %v386
  %v1734 = vpop.permute.xlu0 %1733
  %1736 = vset.pattern.permute.xlu0 7
  %1737 = vperm.xlu0 %1736, %v389
  %v1738 = vpop.permute.xlu0 %1737
  %v1740 = vlaneseq
  %v1741 = vshrl.u32 %v1740, 7
  %v1742 = vsub.s32 3, %v1741
  %v1743 = vrot.slane %v408, %v1742
  %v1744 = vadd.f32 %v1678, %v1743
  %v1745 = vadd.f32 %v1682, %v1743
  %v1746 = vadd.f32 %v1686, %v1743
  %v1747 = vadd.f32 %v1690, %v1743
  %v1748 = vadd.f32 %v1694, %v1743
  %v1749 = vadd.f32 %v1698, %v1743
  %v1750 = vadd.f32 %v1702, %v1743
  %v1751 = vadd.f32 %v1706, %v1743
  %v1752 = vadd.f32 %v1710, %v1743
  %v1753 = vadd.f32 %v1714, %v1743
  %v1754 = vadd.f32 %v1718, %v1743
  %v1755 = vadd.f32 %v1722, %v1743
  %v1756 = vadd.f32 %v1726, %v1743
  %v1757 = vadd.f32 %v1730, %v1743
  %v1758 = vadd.f32 %v1734, %v1743
  %v1759 = vadd.f32 %v1738, %v1743
  %vm1760 = vcmp.gt.f32.partialorder %v1744, 0.0
  %vm1761 = vcmp.gt.f32.partialorder %v1745, 0.0
  %vm1762 = vcmp.gt.f32.partialorder %v1746, 0.0
  %vm1763 = vcmp.gt.f32.partialorder %v1747, 0.0
  %vm1764 = vcmp.gt.f32.partialorder %v1748, 0.0
  %vm1765 = vcmp.gt.f32.partialorder %v1749, 0.0
  %vm1766 = vcmp.gt.f32.partialorder %v1750, 0.0
  %vm1767 = vcmp.gt.f32.partialorder %v1751, 0.0
  %vm1768 = vcmp.gt.f32.partialorder %v1752, 0.0
  %vm1769 = vcmp.gt.f32.partialorder %v1753, 0.0
  %vm1770 = vcmp.gt.f32.partialorder %v1754, 0.0
  %vm1771 = vcmp.gt.f32.partialorder %v1755, 0.0
  %vm1772 = vcmp.gt.f32.partialorder %v1756, 0.0
  %vm1773 = vcmp.gt.f32.partialorder %v1757, 0.0
  %vm1774 = vcmp.gt.f32.partialorder %v1758, 0.0
  %vm1775 = vcmp.gt.f32.partialorder %v1759, 0.0
  %v1776 = vmul.f32 %v1744, 0.2
  %v1777 = vmul.f32 %v1745, 0.2
  %v1778 = vmul.f32 %v1746, 0.2
  %v1779 = vmul.f32 %v1747, 0.2
  %v1780 = vmul.f32 %v1748, 0.2
  %v1781 = vmul.f32 %v1749, 0.2
  %v1782 = vmul.f32 %v1750, 0.2
  %v1783 = vmul.f32 %v1751, 0.2
  %v1784 = vmul.f32 %v1752, 0.2
  %v1785 = vmul.f32 %v1753, 0.2
  %v1786 = vmul.f32 %v1754, 0.2
  %v1787 = vmul.f32 %v1755, 0.2
  %v1788 = vmul.f32 %v1756, 0.2
  %v1789 = vmul.f32 %v1757, 0.2
  %v1790 = vmul.f32 %v1758, 0.2
  %v1791 = vmul.f32 %v1759, 0.2
  %v1792 = vsel %vm1760, %v1744, %v1776
  %v1793 = vsel %vm1761, %v1745, %v1777
  %v1794 = vsel %vm1762, %v1746, %v1778
  %v1795 = vsel %vm1763, %v1747, %v1779
  %v1796 = vsel %vm1764, %v1748, %v1780
  %v1797 = vsel %vm1765, %v1749, %v1781
  %v1798 = vsel %vm1766, %v1750, %v1782
  %v1799 = vsel %vm1767, %v1751, %v1783
  %v1800 = vsel %vm1768, %v1752, %v1784
  %v1801 = vsel %vm1769, %v1753, %v1785
  %v1802 = vsel %vm1770, %v1754, %v1786
  %v1803 = vsel %vm1771, %v1755, %v1787
  %v1804 = vsel %vm1772, %v1756, %v1788
  %v1805 = vsel %vm1773, %v1757, %v1789
  %v1806 = vsel %vm1774, %v1758, %v1790
  %v1807 = vsel %vm1775, %v1759, %v1791
  %v1808 = vadd.f32 %v1792, %v82
  %v1809 = vadd.f32 %v1793, %v83
  %v1810 = vadd.f32 %v1794, %v84
  %v1811 = vadd.f32 %v1795, %v85
  %v1812 = vadd.f32 %v1796, %v86
  %v1813 = vadd.f32 %v1797, %v87
  %v1814 = vadd.f32 %v1798, %v88
  %v1815 = vadd.f32 %v1799, %v89
  %v1816 = vadd.f32 %v1800, %v90
  %v1817 = vadd.f32 %v1801, %v91
  %v1818 = vadd.f32 %v1802, %v92
  %v1819 = vadd.f32 %v1803, %v93
  %v1820 = vadd.f32 %v1804, %v94
  %v1821 = vadd.f32 %v1805, %v95
  %v1822 = vadd.f32 %v1806, %v96
  %v1823 = vadd.f32 %v1807, %v97
  %1824 = vmax.xlane.f32.xlu0 %v1808
  %v1825 = vpop.xlane.xlu0 %1824
  %1826 = vmax.xlane.f32.xlu0 %v1809
  %v1827 = vpop.xlane.xlu0 %1826
  %1828 = vmax.xlane.f32.xlu0 %v1810
  %v1829 = vpop.xlane.xlu0 %1828
  %1830 = vmax.xlane.f32.xlu0 %v1811
  %v1831 = vpop.xlane.xlu0 %1830
  %1832 = vmax.xlane.f32.xlu0 %v1812
  %v1833 = vpop.xlane.xlu0 %1832
  %1834 = vmax.xlane.f32.xlu0 %v1813
  %v1835 = vpop.xlane.xlu0 %1834
  %1836 = vmax.xlane.f32.xlu0 %v1814
  %v1837 = vpop.xlane.xlu0 %1836
  %1838 = vmax.xlane.f32.xlu0 %v1815
  %v1839 = vpop.xlane.xlu0 %1838
  %1840 = vmax.xlane.f32.xlu0 %v1816
  %v1841 = vpop.xlane.xlu0 %1840
  %1842 = vmax.xlane.f32.xlu0 %v1817
  %v1843 = vpop.xlane.xlu0 %1842
  %1844 = vmax.xlane.f32.xlu0 %v1818
  %v1845 = vpop.xlane.xlu0 %1844
  %1846 = vmax.xlane.f32.xlu0 %v1819
  %v1847 = vpop.xlane.xlu0 %1846
  %1848 = vmax.xlane.f32.xlu0 %v1820
  %v1849 = vpop.xlane.xlu0 %1848
  %1850 = vmax.xlane.f32.xlu0 %v1821
  %v1851 = vpop.xlane.xlu0 %1850
  %1852 = vmax.xlane.f32.xlu0 %v1822
  %v1853 = vpop.xlane.xlu0 %1852
  %1854 = vmax.xlane.f32.xlu0 %v1823
  %v1855 = vpop.xlane.xlu0 %1854
  %v1856 = vsub.f32 %v1808, %v1825
  %v1857 = vsub.f32 %v1809, %v1827
  %v1858 = vsub.f32 %v1810, %v1829
  %v1859 = vsub.f32 %v1811, %v1831
  %v1860 = vsub.f32 %v1812, %v1833
  %v1861 = vsub.f32 %v1813, %v1835
  %v1862 = vsub.f32 %v1814, %v1837
  %v1863 = vsub.f32 %v1815, %v1839
  %v1864 = vsub.f32 %v1816, %v1841
  %v1865 = vsub.f32 %v1817, %v1843
  %v1866 = vsub.f32 %v1818, %v1845
  %v1867 = vsub.f32 %v1819, %v1847
  %v1868 = vsub.f32 %v1820, %v1849
  %v1869 = vsub.f32 %v1821, %v1851
  %v1870 = vsub.f32 %v1822, %v1853
  %v1871 = vsub.f32 %v1823, %v1855
  %v1872 = vmul.f32 %v1856, 1.442695
  %v1873 = vpow.pop %v1872
  %v1874 = vmul.f32 %v1857, 1.442695
  %v1875 = vpow.pop %v1874
  %v1876 = vmul.f32 %v1858, 1.442695
  %v1877 = vpow.pop %v1876
  %v1878 = vmul.f32 %v1859, 1.442695
  %v1879 = vpow.pop %v1878
  %v1880 = vmul.f32 %v1860, 1.442695
  %v1881 = vpow.pop %v1880
  %v1882 = vmul.f32 %v1861, 1.442695
  %v1883 = vpow.pop %v1882
  %v1884 = vmul.f32 %v1862, 1.442695
  %v1885 = vpow.pop %v1884
  %v1886 = vmul.f32 %v1863, 1.442695
  %v1887 = vpow.pop %v1886
  %v1888 = vmul.f32 %v1864, 1.442695
  %v1889 = vpow.pop %v1888
  %v1890 = vmul.f32 %v1865, 1.442695
  %v1891 = vpow.pop %v1890
  %v1892 = vmul.f32 %v1866, 1.442695
  %v1893 = vpow.pop %v1892
  %v1894 = vmul.f32 %v1867, 1.442695
  %v1895 = vpow.pop %v1894
  %v1896 = vmul.f32 %v1868, 1.442695
  %v1897 = vpow.pop %v1896
  %v1898 = vmul.f32 %v1869, 1.442695
  %v1899 = vpow.pop %v1898
  %v1900 = vmul.f32 %v1870, 1.442695
  %v1901 = vpow.pop %v1900
  %v1902 = vmul.f32 %v1871, 1.442695
  %v1903 = vpow.pop %v1902
  %1904 = vadd.xlane.f32.xlu0 %v1873
  %v1905 = vpop.xlane.xlu0 %1904
  %1906 = vadd.xlane.f32.xlu0 %v1875
  %v1907 = vpop.xlane.xlu0 %1906
  %1908 = vadd.xlane.f32.xlu0 %v1877
  %v1909 = vpop.xlane.xlu0 %1908
  %1910 = vadd.xlane.f32.xlu0 %v1879
  %v1911 = vpop.xlane.xlu0 %1910
  %1912 = vadd.xlane.f32.xlu0 %v1881
  %v1913 = vpop.xlane.xlu0 %1912
  %1914 = vadd.xlane.f32.xlu0 %v1883
  %v1915 = vpop.xlane.xlu0 %1914
  %1916 = vadd.xlane.f32.xlu0 %v1885
  %v1917 = vpop.xlane.xlu0 %1916
  %1918 = vadd.xlane.f32.xlu0 %v1887
  %v1919 = vpop.xlane.xlu0 %1918
  %1920 = vadd.xlane.f32.xlu0 %v1889
  %v1921 = vpop.xlane.xlu0 %1920
  %1922 = vadd.xlane.f32.xlu0 %v1891
  %v1923 = vpop.xlane.xlu0 %1922
  %1924 = vadd.xlane.f32.xlu0 %v1893
  %v1925 = vpop.xlane.xlu0 %1924
  %1926 = vadd.xlane.f32.xlu0 %v1895
  %v1927 = vpop.xlane.xlu0 %1926
  %1928 = vadd.xlane.f32.xlu0 %v1897
  %v1929 = vpop.xlane.xlu0 %1928
  %1930 = vadd.xlane.f32.xlu0 %v1899
  %v1931 = vpop.xlane.xlu0 %1930
  %1932 = vadd.xlane.f32.xlu0 %v1901
  %v1933 = vpop.xlane.xlu0 %1932
  %1934 = vadd.xlane.f32.xlu0 %v1903
  %v1935 = vpop.xlane.xlu0 %1934
  %v1936 = vrcp.pop %v1905
  %v1937 = vrcp.pop %v1907
  %v1938 = vrcp.pop %v1909
  %v1939 = vrcp.pop %v1911
  %v1940 = vrcp.pop %v1913
  %v1941 = vrcp.pop %v1915
  %v1942 = vrcp.pop %v1917
  %v1943 = vrcp.pop %v1919
  %v1944 = vrcp.pop %v1921
  %v1945 = vrcp.pop %v1923
  %v1946 = vrcp.pop %v1925
  %v1947 = vrcp.pop %v1927
  %v1948 = vrcp.pop %v1929
  %v1949 = vrcp.pop %v1931
  %v1950 = vrcp.pop %v1933
  %v1951 = vrcp.pop %v1935
  %v1952 = vmul.f32 %v1873, %v1936
  %v1953 = vmul.f32 %v1875, %v1937
  %v1954 = vmul.f32 %v1877, %v1938
  %v1955 = vmul.f32 %v1879, %v1939
  %v1956 = vmul.f32 %v1881, %v1940
  %v1957 = vmul.f32 %v1883, %v1941
  %v1958 = vmul.f32 %v1885, %v1942
  %v1959 = vmul.f32 %v1887, %v1943
  %v1960 = vmul.f32 %v1889, %v1944
  %v1961 = vmul.f32 %v1891, %v1945
  %v1962 = vmul.f32 %v1893, %v1946
  %v1963 = vmul.f32 %v1895, %v1947
  %v1964 = vmul.f32 %v1897, %v1948
  %v1965 = vmul.f32 %v1899, %v1949
  %v1966 = vmul.f32 %v1901, %v1950
  %v1967 = vmul.f32 %v1903, %v1951
  %v1968 = vpack.c.bf16 %v1953, %v1952
  %v1969 = vpack.c.bf16 %v1955, %v1954
  %v1970 = vpack.c.bf16 %v1957, %v1956
  %v1971 = vpack.c.bf16 %v1959, %v1958
  %v1972 = vpack.c.bf16 %v1961, %v1960
  %v1973 = vpack.c.bf16 %v1963, %v1962
  %v1974 = vpack.c.bf16 %v1965, %v1964
  %v1975 = vpack.c.bf16 %v1967, %v1966
  %1976 = vmatprep.subr.bf16.mxu0 0
  %1977 = vmatpush1.bf16.msra.mxu0 %v256
  %1978 = vmatprep.subr.bf16.mxu0 0
  %1979 = vmatpush1.bf16.msra.mxu0 %v257
  %1980 = vmatprep.subr.bf16.mxu0 0
  %1981 = vmatpush1.bf16.msra.mxu0 %v258
  %1982 = vmatprep.subr.bf16.mxu0 0
  %1983 = vmatpush1.bf16.msra.mxu0 %v259
  %1984 = vmatprep.subr.bf16.mxu0 0
  %1985 = vmatpush1.bf16.msra.mxu0 %v260
  %1986 = vmatprep.subr.bf16.mxu0 0
  %1987 = vmatpush1.bf16.msra.mxu0 %v261
  %1988 = vmatprep.subr.bf16.mxu0 0
  %1989 = vmatpush1.bf16.msra.mxu0 %v262
  %1990 = vmatprep.subr.bf16.mxu0 0
  %1991 = vmatpush1.bf16.msra.mxu0 %v263
  %1992 = vmatprep.subr.bf16.mxu0 0
  %1993 = vmatpush1.bf16.msra.mxu0 0
  %1994 = vmatprep.subr.bf16.mxu0 0
  %1995 = vmatpush1.bf16.msra.mxu0 0
  %1996 = vmatprep.subr.bf16.mxu0 0
  %1997 = vmatpush1.bf16.msra.mxu0 0
  %1998 = vmatprep.subr.bf16.mxu0 0
  %1999 = vmatpush1.bf16.msra.mxu0 0
  %2000 = vmatprep.subr.bf16.mxu0 0
  %2001 = vmatpush1.bf16.msra.mxu0 0
  %2002 = vmatprep.subr.bf16.mxu0 0
  %2003 = vmatpush1.bf16.msra.mxu0 0
  %2004 = vmatprep.subr.bf16.mxu0 0
  %2005 = vmatpush1.bf16.msra.mxu0 0
  %2006 = vmatprep.subr.bf16.mxu0 0
  %2007 = vmatpush1.bf16.msra.mxu0 0
  %2008 = vmatprep.mubr.bf16.mxu0 0
  %2009 = vmatmul.mubr.bf16.gmra.mrb[0].mxu0 %v1968
  %v2010 = vpop.f32.mrb[0].mxu0
  %v2011 = vadd.f32 0.0, %v2010
  %v2012 = vpop.f32.mrb[0].mxu0
  %v2013 = vpop.f32.mrb[0].mxu0
  %v2014 = vadd.f32 0.0, %v2013
  %v2015 = vpop.f32.mrb[0].mxu0
  %2016 = vmatprep.mubr.bf16.mxu0 0
  %2017 = vmatmul.mubr.bf16.gmra.mrb[0].mxu0 %v1969
  %v2018 = vpop.f32.mrb[0].mxu0
  %v2019 = vadd.f32 0.0, %v2018
  %v2020 = vpop.f32.mrb[0].mxu0
  %v2021 = vpop.f32.mrb[0].mxu0
  %v2022 = vadd.f32 0.0, %v2021
  %v2023 = vpop.f32.mrb[0].mxu0
  %2024 = vmatprep.mubr.bf16.mxu0 0
  %2025 = vmatmul.mubr.bf16.gmra.mrb[0].mxu0 %v1970
  %v2026 = vpop.f32.mrb[0].mxu0
  %v2027 = vadd.f32 0.0, %v2026
  %v2028 = vpop.f32.mrb[0].mxu0
  %v2029 = vpop.f32.mrb[0].mxu0
  %v2030 = vadd.f32 0.0, %v2029
  %v2031 = vpop.f32.mrb[0].mxu0
  %2032 = vmatprep.mubr.bf16.mxu0 0
  %2033 = vmatmul.mubr.bf16.gmra.mrb[0].mxu0 %v1971
  %v2034 = vpop.f32.mrb[0].mxu0
  %v2035 = vadd.f32 0.0, %v2034
  %v2036 = vpop.f32.mrb[0].mxu0
  %v2037 = vpop.f32.mrb[0].mxu0
  %v2038 = vadd.f32 0.0, %v2037
  %v2039 = vpop.f32.mrb[0].mxu0
  %2040 = vmatprep.mubr.bf16.mxu0 0
  %2041 = vmatmul.mubr.bf16.gmra.mrb[0].mxu0 %v1972
  %v2042 = vpop.f32.mrb[0].mxu0
  %v2043 = vadd.f32 0.0, %v2042
  %v2044 = vpop.f32.mrb[0].mxu0
  %v2045 = vpop.f32.mrb[0].mxu0
  %v2046 = vadd.f32 0.0, %v2045
  %v2047 = vpop.f32.mrb[0].mxu0
  %2048 = vmatprep.mubr.bf16.mxu0 0
  %2049 = vmatmul.mubr.bf16.gmra.mrb[0].mxu0 %v1973
  %v2050 = vpop.f32.mrb[0].mxu0
  %v2051 = vadd.f32 0.0, %v2050
  %v2052 = vpop.f32.mrb[0].mxu0
  %v2053 = vpop.f32.mrb[0].mxu0
  %v2054 = vadd.f32 0.0, %v2053
  %v2055 = vpop.f32.mrb[0].mxu0
  %2056 = vmatprep.mubr.bf16.mxu0 0
  %2057 = vmatmul.mubr.bf16.gmra.mrb[0].mxu0 %v1974
  %v2058 = vpop.f32.mrb[0].mxu0
  %v2059 = vadd.f32 0.0, %v2058
  %v2060 = vpop.f32.mrb[0].mxu0
  %v2061 = vpop.f32.mrb[0].mxu0
  %v2062 = vadd.f32 0.0, %v2061
  %v2063 = vpop.f32.mrb[0].mxu0
  %2064 = vmatprep.mubr.bf16.mxu0 0
  %2065 = vmatmul.mubr.bf16.gmra.mrb[0].mxu0 %v1975
  %v2066 = vpop.f32.mrb[0].mxu0
  %v2067 = vadd.f32 0.0, %v2066
  %v2068 = vpop.f32.mrb[0].mxu0
  %v2069 = vpop.f32.mrb[0].mxu0
  %v2070 = vadd.f32 0.0, %v2069
  %v2071 = vpop.f32.mrb[0].mxu0
  %2072 = vdwg.mxu0
  %vm2073 = vcmp.ge.s32.totalorder %v426, 24
  %vm2074 = vcmp.lt.s32.totalorder %v426, 32
  %vm2075 = vmand %vm2073, %vm2074
  %v2076 = vsel %vm2075, 1, 0
  %vm2077 = vcmp.eq.s32.totalorder %v2076, 1
  %v2078 = vsel %vm2077, %v2011, %v1660
  %v2079 = vsel %vm2077, %v2014, %v1661
  %v2080 = vsel %vm2077, %v2019, %v1662
  %v2081 = vsel %vm2077, %v2022, %v1663
  %v2082 = vsel %vm2077, %v2027, %v1664
  %v2083 = vsel %vm2077, %v2030, %v1665
  %v2084 = vsel %vm2077, %v2035, %v1666
  %v2085 = vsel %vm2077, %v2038, %v1667
  %v2086 = vsel %vm2077, %v2043, %v1668
  %v2087 = vsel %vm2077, %v2046, %v1669
  %v2088 = vsel %vm2077, %v2051, %v1670
  %v2089 = vsel %vm2077, %v2054, %v1671
  %v2090 = vsel %vm2077, %v2059, %v1672
  %v2091 = vsel %vm2077, %v2062, %v1673
  %v2092 = vsel %vm2077, %v2067, %v1674
  %v2093 = vsel %vm2077, %v2070, %v1675
  %v2095 = vlaneseq
  %v2096 = vshrl.u32 %v2095, 7
  %v2097 = vsub.s32 0, %v2096
  %v2098 = vrot.slane %v424, %v2097
  %v2100 = vadd.f32 %v2078, %v2098
  %v2101 = vadd.f32 %v2079, %v2098
  %v2102 = vadd.f32 %v2080, %v2098
  %v2103 = vadd.f32 %v2081, %v2098
  %v2104 = vadd.f32 %v2082, %v2098
  %v2105 = vadd.f32 %v2083, %v2098
  %v2106 = vadd.f32 %v2084, %v2098
  %v2107 = vadd.f32 %v2085, %v2098
  %v2108 = vadd.f32 %v2086, %v2098
  %v2109 = vadd.f32 %v2087, %v2098
  %v2110 = vadd.f32 %v2088, %v2098
  %v2111 = vadd.f32 %v2089, %v2098
  %v2112 = vadd.f32 %v2090, %v2098
  %v2113 = vadd.f32 %v2091, %v2098
  %v2114 = vadd.f32 %v2092, %v2098
  %v2115 = vadd.f32 %v2093, %v2098
  %v2116 = vmax.f32 %v2100, 0.0
  %v2117 = vmax.f32 %v2101, 0.0
  %v2118 = vmax.f32 %v2102, 0.0
  %v2119 = vmax.f32 %v2103, 0.0
  %v2120 = vmax.f32 %v2104, 0.0
  %v2121 = vmax.f32 %v2105, 0.0
  %v2122 = vmax.f32 %v2106, 0.0
  %v2123 = vmax.f32 %v2107, 0.0
  %v2124 = vmax.f32 %v2108, 0.0
  %v2125 = vmax.f32 %v2109, 0.0
  %v2126 = vmax.f32 %v2110, 0.0
  %v2127 = vmax.f32 %v2111, 0.0
  %v2128 = vmax.f32 %v2112, 0.0
  %v2129 = vmax.f32 %v2113, 0.0
  %v2130 = vmax.f32 %v2114, 0.0
  %v2131 = vmax.f32 %v2115, 0.0
  %v2132 = vpack.c.bf16 %v2117, %v2116
  %v2133 = vpack.c.bf16 %v2119, %v2118
  %v2134 = vpack.c.bf16 %v2121, %v2120
  %v2135 = vpack.c.bf16 %v2123, %v2122
  %v2136 = vpack.c.bf16 %v2125, %v2124
  %v2137 = vpack.c.bf16 %v2127, %v2126
  %v2138 = vpack.c.bf16 %v2129, %v2128
  %v2139 = vpack.c.bf16 %v2131, %v2130
  %v2140 = vld [vmem:[%s5] sm:$0xff]
  %v2141 = vld [vmem:[%s5 + $0x8] sm:$0xff]
  %v2142 = vld [vmem:[%s5 + $0x10] sm:$0xff]
  %v2143 = vld [vmem:[%s5 + $0x18] sm:$0xff]
  %v2144 = vpack.c.bf16 %v2141, %v2140
  %v2145 = vpack.c.bf16 %v2143, %v2142
  %v2147 = vsel %vm270, %v2132, 0
  %v2150 = vsel %vm270, %v2133, 0
  %v2153 = vsel %vm270, %v2134, 0
  %v2156 = vsel %vm270, %v2135, 0
  %v2159 = vsel %vm270, %v2136, 0
  %v2162 = vsel %vm270, %v2137, 0
  %v2165 = vsel %vm270, %v2138, 0
  %v2168 = vsel %vm270, %v2139, 0
  %2170 = vmatprep.subr.bf16.mxu0 0
  %2171 = vmatpush1.bf16.msra.mxu0 %v2144
  %2172 = vmatprep.subr.bf16.mxu0 0
  %2173 = vmatpush1.bf16.msra.mxu0 %v2145
  %2174 = vmatprep.subr.bf16.mxu0 0
  %2175 = vmatpush1.bf16.msra.mxu0 0
  %2176 = vmatprep.subr.bf16.mxu0 0
  %2177 = vmatpush1.bf16.msra.mxu0 0
  %2178 = vmatprep.subr.bf16.mxu0 0
  %2179 = vmatpush1.bf16.msra.mxu0 0
  %2180 = vmatprep.subr.bf16.mxu0 0
  %2181 = vmatpush1.bf16.msra.mxu0 0
  %2182 = vmatprep.subr.bf16.mxu0 0
  %2183 = vmatpush1.bf16.msra.mxu0 0
  %2184 = vmatprep.subr.bf16.mxu0 0
  %2185 = vmatpush1.bf16.msra.mxu0 0
  %2186 = vmatprep.subr.bf16.mxu0 0
  %2187 = vmatpush1.bf16.msra.mxu0 0
  %2188 = vmatprep.subr.bf16.mxu0 0
  %2189 = vmatpush1.bf16.msra.mxu0 0
  %2190 = vmatprep.subr.bf16.mxu0 0
  %2191 = vmatpush1.bf16.msra.mxu0 0
  %2192 = vmatprep.subr.bf16.mxu0 0
  %2193 = vmatpush1.bf16.msra.mxu0 0
  %2194 = vmatprep.subr.bf16.mxu0 0
  %2195 = vmatpush1.bf16.msra.mxu0 0
  %2196 = vmatprep.subr.bf16.mxu0 0
  %2197 = vmatpush1.bf16.msra.mxu0 0
  %2198 = vmatprep.subr.bf16.mxu0 0
  %2199 = vmatpush1.bf16.msra.mxu0 0
  %2200 = vmatprep.subr.bf16.mxu0 0
  %2201 = vmatpush1.bf16.msra.mxu0 0
  %2202 = vmatprep.mubr.bf16.mxu0 0
  %2203 = vmatmul.mubr.bf16.gmra.mrb[0].mxu0 %v2147
  %v2204 = vpop.f32.mrb[0].mxu0
  %v2205 = vadd.f32 0.0, %v2204
  %v2206 = vpop.f32.mrb[0].mxu0
  %v2207 = vpop.f32.mrb[0].mxu0
  %v2208 = vadd.f32 0.0, %v2207
  %v2209 = vpop.f32.mrb[0].mxu0
  %2210 = vmatprep.mubr.bf16.mxu0 0
  %2211 = vmatmul.mubr.bf16.gmra.mrb[0].mxu0 %v2150
  %v2212 = vpop.f32.mrb[0].mxu0
  %v2213 = vadd.f32 0.0, %v2212
  %v2214 = vpop.f32.mrb[0].mxu0
  %v2215 = vpop.f32.mrb[0].mxu0
  %v2216 = vadd.f32 0.0, %v2215
  %v2217 = vpop.f32.mrb[0].mxu0
  %2218 = vmatprep.mubr.bf16.mxu0 0
  %2219 = vmatmul.mubr.bf16.gmra.mrb[0].mxu0 %v2153
  %v2220 = vpop.f32.mrb[0].mxu0
  %v2221 = vadd.f32 0.0, %v2220
  %v2222 = vpop.f32.mrb[0].mxu0
  %v2223 = vpop.f32.mrb[0].mxu0
  %v2224 = vadd.f32 0.0, %v2223
  %v2225 = vpop.f32.mrb[0].mxu0
  %2226 = vmatprep.mubr.bf16.mxu0 0
  %2227 = vmatmul.mubr.bf16.gmra.mrb[0].mxu0 %v2156
  %v2228 = vpop.f32.mrb[0].mxu0
  %v2229 = vadd.f32 0.0, %v2228
  %v2230 = vpop.f32.mrb[0].mxu0
  %v2231 = vpop.f32.mrb[0].mxu0
  %v2232 = vadd.f32 0.0, %v2231
  %v2233 = vpop.f32.mrb[0].mxu0
  %2234 = vmatprep.mubr.bf16.mxu0 0
  %2235 = vmatmul.mubr.bf16.gmra.mrb[0].mxu0 %v2159
  %v2236 = vpop.f32.mrb[0].mxu0
  %v2237 = vadd.f32 0.0, %v2236
  %v2238 = vpop.f32.mrb[0].mxu0
  %v2239 = vpop.f32.mrb[0].mxu0
  %v2240 = vadd.f32 0.0, %v2239
  %v2241 = vpop.f32.mrb[0].mxu0
  %2242 = vmatprep.mubr.bf16.mxu0 0
  %2243 = vmatmul.mubr.bf16.gmra.mrb[0].mxu0 %v2162
  %v2244 = vpop.f32.mrb[0].mxu0
  %v2245 = vadd.f32 0.0, %v2244
  %v2246 = vpop.f32.mrb[0].mxu0
  %v2247 = vpop.f32.mrb[0].mxu0
  %v2248 = vadd.f32 0.0, %v2247
  %v2249 = vpop.f32.mrb[0].mxu0
  %2250 = vmatprep.mubr.bf16.mxu0 0
  %2251 = vmatmul.mubr.bf16.gmra.mrb[0].mxu0 %v2165
  %v2252 = vpop.f32.mrb[0].mxu0
  %v2253 = vadd.f32 0.0, %v2252
  %v2254 = vpop.f32.mrb[0].mxu0
  %v2255 = vpop.f32.mrb[0].mxu0
  %v2256 = vadd.f32 0.0, %v2255
  %v2257 = vpop.f32.mrb[0].mxu0
  %2258 = vmatprep.mubr.bf16.mxu0 0
  %2259 = vmatmul.mubr.bf16.gmra.mrb[0].mxu0 %v2168
  %v2260 = vpop.f32.mrb[0].mxu0
  %v2261 = vadd.f32 0.0, %v2260
  %v2262 = vpop.f32.mrb[0].mxu0
  %v2263 = vpop.f32.mrb[0].mxu0
  %v2264 = vadd.f32 0.0, %v2263
  %v2265 = vpop.f32.mrb[0].mxu0
  %2266 = vdwg.mxu0
  %v2267 = vpack.c.bf16 %v2208, %v2205
  %v2268 = vpack.c.bf16 %v2216, %v2213
  %v2269 = vpack.c.bf16 %v2224, %v2221
  %v2270 = vpack.c.bf16 %v2232, %v2229
  %v2271 = vpack.c.bf16 %v2240, %v2237
  %v2272 = vpack.c.bf16 %v2248, %v2245
  %v2273 = vpack.c.bf16 %v2256, %v2253
  %v2274 = vpack.c.bf16 %v2264, %v2261
  %v2275 = vld [vmem:[%s6] sm:$0xff]
  %v2276 = vld [vmem:[%s6 + $0x8] sm:$0xff]
  %v2277 = vld [vmem:[%s6 + $0x10] sm:$0xff]
  %v2278 = vld [vmem:[%s6 + $0x18] sm:$0xff]
  %v2279 = vpack.c.bf16 %v2276, %v2275
  %v2280 = vpack.c.bf16 %v2278, %v2277
  %v2282 = vsel %vm270, %v2267, 0
  %v2285 = vsel %vm270, %v2268, 0
  %v2288 = vsel %vm270, %v2269, 0
  %v2291 = vsel %vm270, %v2270, 0
  %v2294 = vsel %vm270, %v2271, 0
  %v2297 = vsel %vm270, %v2272, 0
  %v2300 = vsel %vm270, %v2273, 0
  %v2303 = vsel %vm270, %v2274, 0
  %2305 = vmatprep.subr.bf16.mxu0 0
  %2306 = vmatpush1.bf16.msra.mxu0 %v2279
  %2307 = vmatprep.subr.bf16.mxu0 0
  %2308 = vmatpush1.bf16.msra.mxu0 %v2280
  %2309 = vmatprep.subr.bf16.mxu0 0
  %2310 = vmatpush1.bf16.msra.mxu0 0
  %2311 = vmatprep.subr.bf16.mxu0 0
  %2312 = vmatpush1.bf16.msra.mxu0 0
  %2313 = vmatprep.subr.bf16.mxu0 0
  %2314 = vmatpush1.bf16.msra.mxu0 0
  %2315 = vmatprep.subr.bf16.mxu0 0
  %2316 = vmatpush1.bf16.msra.mxu0 0
  %2317 = vmatprep.subr.bf16.mxu0 0
  %2318 = vmatpush1.bf16.msra.mxu0 0
  %2319 = vmatprep.subr.bf16.mxu0 0
  %2320 = vmatpush1.bf16.msra.mxu0 0
  %2321 = vmatprep.subr.bf16.mxu0 0
  %2322 = vmatpush1.bf16.msra.mxu0 0
  %2323 = vmatprep.subr.bf16.mxu0 0
  %2324 = vmatpush1.bf16.msra.mxu0 0
  %2325 = vmatprep.subr.bf16.mxu0 0
  %2326 = vmatpush1.bf16.msra.mxu0 0
  %2327 = vmatprep.subr.bf16.mxu0 0
  %2328 = vmatpush1.bf16.msra.mxu0 0
  %2329 = vmatprep.subr.bf16.mxu0 0
  %2330 = vmatpush1.bf16.msra.mxu0 0
  %2331 = vmatprep.subr.bf16.mxu0 0
  %2332 = vmatpush1.bf16.msra.mxu0 0
  %2333 = vmatprep.subr.bf16.mxu0 0
  %2334 = vmatpush1.bf16.msra.mxu0 0
  %2335 = vmatprep.subr.bf16.mxu0 0
  %2336 = vmatpush1.bf16.msra.mxu0 0
  %2337 = vmatprep.mubr.bf16.mxu0 0
  %2338 = vmatmul.mubr.bf16.gmra.mrb[0].mxu0 %v2282
  %v2339 = vpop.f32.mrb[0].mxu0
  %v2340 = vadd.f32 0.0, %v2339
  %v2341 = vpop.f32.mrb[0].mxu0
  %v2342 = vpop.f32.mrb[0].mxu0
  %v2343 = vadd.f32 0.0, %v2342
  %v2344 = vpop.f32.mrb[0].mxu0
  %2345 = vmatprep.mubr.bf16.mxu0 0
  %2346 = vmatmul.mubr.bf16.gmra.mrb[0].mxu0 %v2285
  %v2347 = vpop.f32.mrb[0].mxu0
  %v2348 = vadd.f32 0.0, %v2347
  %v2349 = vpop.f32.mrb[0].mxu0
  %v2350 = vpop.f32.mrb[0].mxu0
  %v2351 = vadd.f32 0.0, %v2350
  %v2352 = vpop.f32.mrb[0].mxu0
  %2353 = vmatprep.mubr.bf16.mxu0 0
  %2354 = vmatmul.mubr.bf16.gmra.mrb[0].mxu0 %v2288
  %v2355 = vpop.f32.mrb[0].mxu0
  %v2356 = vadd.f32 0.0, %v2355
  %v2357 = vpop.f32.mrb[0].mxu0
  %v2358 = vpop.f32.mrb[0].mxu0
  %v2359 = vadd.f32 0.0, %v2358
  %v2360 = vpop.f32.mrb[0].mxu0
  %2361 = vmatprep.mubr.bf16.mxu0 0
  %2362 = vmatmul.mubr.bf16.gmra.mrb[0].mxu0 %v2291
  %v2363 = vpop.f32.mrb[0].mxu0
  %v2364 = vadd.f32 0.0, %v2363
  %v2365 = vpop.f32.mrb[0].mxu0
  %v2366 = vpop.f32.mrb[0].mxu0
  %v2367 = vadd.f32 0.0, %v2366
  %v2368 = vpop.f32.mrb[0].mxu0
  %2369 = vmatprep.mubr.bf16.mxu0 0
  %2370 = vmatmul.mubr.bf16.gmra.mrb[0].mxu0 %v2294
  %v2371 = vpop.f32.mrb[0].mxu0
  %v2372 = vadd.f32 0.0, %v2371
  %v2373 = vpop.f32.mrb[0].mxu0
  %v2374 = vpop.f32.mrb[0].mxu0
  %v2375 = vadd.f32 0.0, %v2374
  %v2376 = vpop.f32.mrb[0].mxu0
  %2377 = vmatprep.mubr.bf16.mxu0 0
  %2378 = vmatmul.mubr.bf16.gmra.mrb[0].mxu0 %v2297
  %v2379 = vpop.f32.mrb[0].mxu0
  %v2380 = vadd.f32 0.0, %v2379
  %v2381 = vpop.f32.mrb[0].mxu0
  %v2382 = vpop.f32.mrb[0].mxu0
  %v2383 = vadd.f32 0.0, %v2382
  %v2384 = vpop.f32.mrb[0].mxu0
  %2385 = vmatprep.mubr.bf16.mxu0 0
  %2386 = vmatmul.mubr.bf16.gmra.mrb[0].mxu0 %v2300
  %v2387 = vpop.f32.mrb[0].mxu0
  %v2388 = vadd.f32 0.0, %v2387
  %v2389 = vpop.f32.mrb[0].mxu0
  %v2390 = vpop.f32.mrb[0].mxu0
  %v2391 = vadd.f32 0.0, %v2390
  %v2392 = vpop.f32.mrb[0].mxu0
  %2393 = vmatprep.mubr.bf16.mxu0 0
  %2394 = vmatmul.mubr.bf16.gmra.mrb[0].mxu0 %v2303
  %v2395 = vpop.f32.mrb[0].mxu0
  %v2396 = vadd.f32 0.0, %v2395
  %v2397 = vpop.f32.mrb[0].mxu0
  %v2398 = vpop.f32.mrb[0].mxu0
  %v2399 = vadd.f32 0.0, %v2398
  %v2400 = vpop.f32.mrb[0].mxu0
  %2401 = vdwg.mxu0
  %2402 = vxpose.xlu0.b32.start [1/16] %v2340, 128
  %2403 = vxpose.xlu0.b32.cont [2/16] %v2343, 128
  %2404 = vxpose.xlu0.b32.cont [3/16] %v2348, 128
  %2405 = vxpose.xlu0.b32.cont [4/16] %v2351, 128
  %2406 = vxpose.xlu0.b32.cont [5/16] %v2356, 128
  %2407 = vxpose.xlu0.b32.cont [6/16] %v2359, 128
  %2408 = vxpose.xlu0.b32.cont [7/16] %v2364, 128
  %2409 = vxpose.xlu0.b32.cont [8/16] %v2367, 128
  %2410 = vxpose.xlu0.b32.cont [9/16] %v2372, 128
  %2411 = vxpose.xlu0.b32.cont [10/16] %v2375, 128
  %2412 = vxpose.xlu0.b32.cont [11/16] %v2380, 128
  %2413 = vxpose.xlu0.b32.cont [12/16] %v2383, 128
  %2414 = vxpose.xlu0.b32.cont [13/16] %v2388, 128
  %2415 = vxpose.xlu0.b32.cont [14/16] %v2391, 128
  %2416 = vxpose.xlu0.b32.cont [15/16] %v2396, 128
  %2417 = vxpose.xlu0.b32.end [16/16] %v2399, 128
  %v2418 = vpop.trf.xlu0
  %v2419 = vpop.trf.xlu0
  %v2420 = vpop.trf.xlu0
  %v2421 = vpop.trf.xlu0
  %v2422 = vpop.trf.xlu0
  %v2423 = vpop.trf.xlu0
  %v2424 = vpop.trf.xlu0
  %v2425 = vpop.trf.xlu0
  %v2426 = vpop.trf.xlu0
  %v2427 = vpop.trf.xlu0
  %v2428 = vpop.trf.xlu0
  %v2429 = vpop.trf.xlu0
  %v2430 = vpop.trf.xlu0
  %v2431 = vpop.trf.xlu0
  %v2432 = vpop.trf.xlu0
  %v2433 = vpop.trf.xlu0
  %v2434 = vld [vmem:[%s7] sm:$0x1]
  %2436 = vset.pattern.permute.xlu0 1
  %2437 = vperm.xlu0 %2436, %v2340
  %v2438 = vpop.permute.xlu0 %2437
  %2441 = vset.pattern.permute.xlu0 1
  %2442 = vperm.xlu0 %2441, %v2343
  %v2443 = vpop.permute.xlu0 %2442
  %2446 = vset.pattern.permute.xlu0 1
  %2447 = vperm.xlu0 %2446, %v2348
  %v2448 = vpop.permute.xlu0 %2447
  %2451 = vset.pattern.permute.xlu0 1
  %2452 = vperm.xlu0 %2451, %v2351
  %v2453 = vpop.permute.xlu0 %2452
  %2456 = vset.pattern.permute.xlu0 1
  %2457 = vperm.xlu0 %2456, %v2356
  %v2458 = vpop.permute.xlu0 %2457
  %2461 = vset.pattern.permute.xlu0 1
  %2462 = vperm.xlu0 %2461, %v2359
  %v2463 = vpop.permute.xlu0 %2462
  %2466 = vset.pattern.permute.xlu0 1
  %2467 = vperm.xlu0 %2466, %v2364
  %v2468 = vpop.permute.xlu0 %2467
  %2471 = vset.pattern.permute.xlu0 1
  %2472 = vperm.xlu0 %2471, %v2367
  %v2473 = vpop.permute.xlu0 %2472
  %2476 = vset.pattern.permute.xlu0 1
  %2477 = vperm.xlu0 %2476, %v2372
  %v2478 = vpop.permute.xlu0 %2477
  %2481 = vset.pattern.permute.xlu0 1
  %2482 = vperm.xlu0 %2481, %v2375
  %v2483 = vpop.permute.xlu0 %2482
  %2486 = vset.pattern.permute.xlu0 1
  %2487 = vperm.xlu0 %2486, %v2380
  %v2488 = vpop.permute.xlu0 %2487
  %2491 = vset.pattern.permute.xlu0 1
  %2492 = vperm.xlu0 %2491, %v2383
  %v2493 = vpop.permute.xlu0 %2492
  %2496 = vset.pattern.permute.xlu0 1
  %2497 = vperm.xlu0 %2496, %v2388
  %v2498 = vpop.permute.xlu0 %2497
  %2501 = vset.pattern.permute.xlu0 1
  %2502 = vperm.xlu0 %2501, %v2391
  %v2503 = vpop.permute.xlu0 %2502
  %2506 = vset.pattern.permute.xlu0 1
  %2507 = vperm.xlu0 %2506, %v2396
  %v2508 = vpop.permute.xlu0 %2507
  %2511 = vset.pattern.permute.xlu0 1
  %2512 = vperm.xlu0 %2511, %v2399
  %v2513 = vpop.permute.xlu0 %2512
  %v2515 = vlaneseq
  %v2516 = vshrl.u32 %v2515, 7
  %v2517 = vsub.s32 0, %v2516
  %v2518 = vrot.slane %v2418, %v2517
  %v2519 = vadd.f32 %v2438, %v2518
  %v2520 = vadd.f32 %v2443, %v2518
  %v2521 = vadd.f32 %v2448, %v2518
  %v2522 = vadd.f32 %v2453, %v2518
  %v2523 = vadd.f32 %v2458, %v2518
  %v2524 = vadd.f32 %v2463, %v2518
  %v2525 = vadd.f32 %v2468, %v2518
  %v2526 = vadd.f32 %v2473, %v2518
  %v2527 = vadd.f32 %v2478, %v2518
  %v2528 = vadd.f32 %v2483, %v2518
  %v2529 = vadd.f32 %v2488, %v2518
  %v2530 = vadd.f32 %v2493, %v2518
  %v2531 = vadd.f32 %v2498, %v2518
  %v2532 = vadd.f32 %v2503, %v2518
  %v2533 = vadd.f32 %v2508, %v2518
  %v2534 = vadd.f32 %v2513, %v2518
  %vm2535 = vcmp.gt.f32.partialorder %v2519, 0.0
  %vm2536 = vcmp.gt.f32.partialorder %v2520, 0.0
  %vm2537 = vcmp.gt.f32.partialorder %v2521, 0.0
  %vm2538 = vcmp.gt.f32.partialorder %v2522, 0.0
  %vm2539 = vcmp.gt.f32.partialorder %v2523, 0.0
  %vm2540 = vcmp.gt.f32.partialorder %v2524, 0.0
  %vm2541 = vcmp.gt.f32.partialorder %v2525, 0.0
  %vm2542 = vcmp.gt.f32.partialorder %v2526, 0.0
  %vm2543 = vcmp.gt.f32.partialorder %v2527, 0.0
  %vm2544 = vcmp.gt.f32.partialorder %v2528, 0.0
  %vm2545 = vcmp.gt.f32.partialorder %v2529, 0.0
  %vm2546 = vcmp.gt.f32.partialorder %v2530, 0.0
  %vm2547 = vcmp.gt.f32.partialorder %v2531, 0.0
  %vm2548 = vcmp.gt.f32.partialorder %v2532, 0.0
  %vm2549 = vcmp.gt.f32.partialorder %v2533, 0.0
  %vm2550 = vcmp.gt.f32.partialorder %v2534, 0.0
  %v2551 = vmul.f32 %v2519, 0.2
  %v2552 = vmul.f32 %v2520, 0.2
  %v2553 = vmul.f32 %v2521, 0.2
  %v2554 = vmul.f32 %v2522, 0.2
  %v2555 = vmul.f32 %v2523, 0.2
  %v2556 = vmul.f32 %v2524, 0.2
  %v2557 = vmul.f32 %v2525, 0.2
  %v2558 = vmul.f32 %v2526, 0.2
  %v2559 = vmul.f32 %v2527, 0.2
  %v2560 = vmul.f32 %v2528, 0.2
  %v2561 = vmul.f32 %v2529, 0.2
  %v2562 = vmul.f32 %v2530, 0.2
  %v2563 = vmul.f32 %v2531, 0.2
  %v2564 = vmul.f32 %v2532, 0.2
  %v2565 = vmul.f32 %v2533, 0.2
  %v2566 = vmul.f32 %v2534, 0.2
  %v2567 = vsel %vm2535, %v2519, %v2551
  %v2568 = vsel %vm2536, %v2520, %v2552
  %v2569 = vsel %vm2537, %v2521, %v2553
  %v2570 = vsel %vm2538, %v2522, %v2554
  %v2571 = vsel %vm2539, %v2523, %v2555
  %v2572 = vsel %vm2540, %v2524, %v2556
  %v2573 = vsel %vm2541, %v2525, %v2557
  %v2574 = vsel %vm2542, %v2526, %v2558
  %v2575 = vsel %vm2543, %v2527, %v2559
  %v2576 = vsel %vm2544, %v2528, %v2560
  %v2577 = vsel %vm2545, %v2529, %v2561
  %v2578 = vsel %vm2546, %v2530, %v2562
  %v2579 = vsel %vm2547, %v2531, %v2563
  %v2580 = vsel %vm2548, %v2532, %v2564
  %v2581 = vsel %vm2549, %v2533, %v2565
  %v2582 = vsel %vm2550, %v2534, %v2566
  %v2583 = vadd.f32 %v2567, %v82
  %v2584 = vadd.f32 %v2568, %v83
  %v2585 = vadd.f32 %v2569, %v84
  %v2586 = vadd.f32 %v2570, %v85
  %v2587 = vadd.f32 %v2571, %v86
  %v2588 = vadd.f32 %v2572, %v87
  %v2589 = vadd.f32 %v2573, %v88
  %v2590 = vadd.f32 %v2574, %v89
  %v2591 = vadd.f32 %v2575, %v90
  %v2592 = vadd.f32 %v2576, %v91
  %v2593 = vadd.f32 %v2577, %v92
  %v2594 = vadd.f32 %v2578, %v93
  %v2595 = vadd.f32 %v2579, %v94
  %v2596 = vadd.f32 %v2580, %v95
  %v2597 = vadd.f32 %v2581, %v96
  %v2598 = vadd.f32 %v2582, %v97
  %2599 = vmax.xlane.f32.xlu0 %v2583
  %v2600 = vpop.xlane.xlu0 %2599
  %2601 = vmax.xlane.f32.xlu0 %v2584
  %v2602 = vpop.xlane.xlu0 %2601
  %2603 = vmax.xlane.f32.xlu0 %v2585
  %v2604 = vpop.xlane.xlu0 %2603
  %2605 = vmax.xlane.f32.xlu0 %v2586
  %v2606 = vpop.xlane.xlu0 %2605
  %2607 = vmax.xlane.f32.xlu0 %v2587
  %v2608 = vpop.xlane.xlu0 %2607
  %2609 = vmax.xlane.f32.xlu0 %v2588
  %v2610 = vpop.xlane.xlu0 %2609
  %2611 = vmax.xlane.f32.xlu0 %v2589
  %v2612 = vpop.xlane.xlu0 %2611
  %2613 = vmax.xlane.f32.xlu0 %v2590
  %v2614 = vpop.xlane.xlu0 %2613
  %2615 = vmax.xlane.f32.xlu0 %v2591
  %v2616 = vpop.xlane.xlu0 %2615
  %2617 = vmax.xlane.f32.xlu0 %v2592
  %v2618 = vpop.xlane.xlu0 %2617
  %2619 = vmax.xlane.f32.xlu0 %v2593
  %v2620 = vpop.xlane.xlu0 %2619
  %2621 = vmax.xlane.f32.xlu0 %v2594
  %v2622 = vpop.xlane.xlu0 %2621
  %2623 = vmax.xlane.f32.xlu0 %v2595
  %v2624 = vpop.xlane.xlu0 %2623
  %2625 = vmax.xlane.f32.xlu0 %v2596
  %v2626 = vpop.xlane.xlu0 %2625
  %2627 = vmax.xlane.f32.xlu0 %v2597
  %v2628 = vpop.xlane.xlu0 %2627
  %2629 = vmax.xlane.f32.xlu0 %v2598
  %v2630 = vpop.xlane.xlu0 %2629
  %v2631 = vsub.f32 %v2583, %v2600
  %v2632 = vsub.f32 %v2584, %v2602
  %v2633 = vsub.f32 %v2585, %v2604
  %v2634 = vsub.f32 %v2586, %v2606
  %v2635 = vsub.f32 %v2587, %v2608
  %v2636 = vsub.f32 %v2588, %v2610
  %v2637 = vsub.f32 %v2589, %v2612
  %v2638 = vsub.f32 %v2590, %v2614
  %v2639 = vsub.f32 %v2591, %v2616
  %v2640 = vsub.f32 %v2592, %v2618
  %v2641 = vsub.f32 %v2593, %v2620
  %v2642 = vsub.f32 %v2594, %v2622
  %v2643 = vsub.f32 %v2595, %v2624
  %v2644 = vsub.f32 %v2596, %v2626
  %v2645 = vsub.f32 %v2597, %v2628
  %v2646 = vsub.f32 %v2598, %v2630
  %v2647 = vmul.f32 %v2631, 1.442695
  %v2648 = vpow.pop %v2647
  %v2649 = vmul.f32 %v2632, 1.442695
  %v2650 = vpow.pop %v2649
  %v2651 = vmul.f32 %v2633, 1.442695
  %v2652 = vpow.pop %v2651
  %v2653 = vmul.f32 %v2634, 1.442695
  %v2654 = vpow.pop %v2653
  %v2655 = vmul.f32 %v2635, 1.442695
  %v2656 = vpow.pop %v2655
  %v2657 = vmul.f32 %v2636, 1.442695
  %v2658 = vpow.pop %v2657
  %v2659 = vmul.f32 %v2637, 1.442695
  %v2660 = vpow.pop %v2659
  %v2661 = vmul.f32 %v2638, 1.442695
  %v2662 = vpow.pop %v2661
  %v2663 = vmul.f32 %v2639, 1.442695
  %v2664 = vpow.pop %v2663
  %v2665 = vmul.f32 %v2640, 1.442695
  %v2666 = vpow.pop %v2665
  %v2667 = vmul.f32 %v2641, 1.442695
  %v2668 = vpow.pop %v2667
  %v2669 = vmul.f32 %v2642, 1.442695
  %v2670 = vpow.pop %v2669
  %v2671 = vmul.f32 %v2643, 1.442695
  %v2672 = vpow.pop %v2671
  %v2673 = vmul.f32 %v2644, 1.442695
  %v2674 = vpow.pop %v2673
  %v2675 = vmul.f32 %v2645, 1.442695
  %v2676 = vpow.pop %v2675
  %v2677 = vmul.f32 %v2646, 1.442695
  %v2678 = vpow.pop %v2677
  %2679 = vadd.xlane.f32.xlu0 %v2648
  %v2680 = vpop.xlane.xlu0 %2679
  %2681 = vadd.xlane.f32.xlu0 %v2650
  %v2682 = vpop.xlane.xlu0 %2681
  %2683 = vadd.xlane.f32.xlu0 %v2652
  %v2684 = vpop.xlane.xlu0 %2683
  %2685 = vadd.xlane.f32.xlu0 %v2654
  %v2686 = vpop.xlane.xlu0 %2685
  %2687 = vadd.xlane.f32.xlu0 %v2656
  %v2688 = vpop.xlane.xlu0 %2687
  %2689 = vadd.xlane.f32.xlu0 %v2658
  %v2690 = vpop.xlane.xlu0 %2689
  %2691 = vadd.xlane.f32.xlu0 %v2660
  %v2692 = vpop.xlane.xlu0 %2691
  %2693 = vadd.xlane.f32.xlu0 %v2662
  %v2694 = vpop.xlane.xlu0 %2693
  %2695 = vadd.xlane.f32.xlu0 %v2664
  %v2696 = vpop.xlane.xlu0 %2695
  %2697 = vadd.xlane.f32.xlu0 %v2666
  %v2698 = vpop.xlane.xlu0 %2697
  %2699 = vadd.xlane.f32.xlu0 %v2668
  %v2700 = vpop.xlane.xlu0 %2699
  %2701 = vadd.xlane.f32.xlu0 %v2670
  %v2702 = vpop.xlane.xlu0 %2701
  %2703 = vadd.xlane.f32.xlu0 %v2672
  %v2704 = vpop.xlane.xlu0 %2703
  %2705 = vadd.xlane.f32.xlu0 %v2674
  %v2706 = vpop.xlane.xlu0 %2705
  %2707 = vadd.xlane.f32.xlu0 %v2676
  %v2708 = vpop.xlane.xlu0 %2707
  %2709 = vadd.xlane.f32.xlu0 %v2678
  %v2710 = vpop.xlane.xlu0 %2709
  %v2711 = vrcp.pop %v2680
  %v2712 = vrcp.pop %v2682
  %v2713 = vrcp.pop %v2684
  %v2714 = vrcp.pop %v2686
  %v2715 = vrcp.pop %v2688
  %v2716 = vrcp.pop %v2690
  %v2717 = vrcp.pop %v2692
  %v2718 = vrcp.pop %v2694
  %v2719 = vrcp.pop %v2696
  %v2720 = vrcp.pop %v2698
  %v2721 = vrcp.pop %v2700
  %v2722 = vrcp.pop %v2702
  %v2723 = vrcp.pop %v2704
  %v2724 = vrcp.pop %v2706
  %v2725 = vrcp.pop %v2708
  %v2726 = vrcp.pop %v2710
  %v2727 = vmul.f32 %v2648, %v2711
  %v2728 = vmul.f32 %v2650, %v2712
  %v2729 = vmul.f32 %v2652, %v2713
  %v2730 = vmul.f32 %v2654, %v2714
  %v2731 = vmul.f32 %v2656, %v2715
  %v2732 = vmul.f32 %v2658, %v2716
  %v2733 = vmul.f32 %v2660, %v2717
  %v2734 = vmul.f32 %v2662, %v2718
  %v2735 = vmul.f32 %v2664, %v2719
  %v2736 = vmul.f32 %v2666, %v2720
  %v2737 = vmul.f32 %v2668, %v2721
  %v2738 = vmul.f32 %v2670, %v2722
  %v2739 = vmul.f32 %v2672, %v2723
  %v2740 = vmul.f32 %v2674, %v2724
  %v2741 = vmul.f32 %v2676, %v2725
  %v2742 = vmul.f32 %v2678, %v2726
  %v2743 = vpack.c.bf16 %v2728, %v2727
  %v2744 = vpack.c.bf16 %v2730, %v2729
  %v2745 = vpack.c.bf16 %v2732, %v2731
  %v2746 = vpack.c.bf16 %v2734, %v2733
  %v2747 = vpack.c.bf16 %v2736, %v2735
  %v2748 = vpack.c.bf16 %v2738, %v2737
  %v2749 = vpack.c.bf16 %v2740, %v2739
  %v2750 = vpack.c.bf16 %v2742, %v2741
  %v2752 = vlaneseq
  %v2753 = vshrl.u32 %v2752, 7
  %v2754 = vsub.s32 0, %v2753
  %v2755 = vrot.slane %v2434, %v2754
  %2757 = vmatprep.subr.bf16.mxu0 0
  %2758 = vmatpush1.bf16.msra.mxu0 %v2267
  %2759 = vmatprep.subr.bf16.mxu0 0
  %2760 = vmatpush1.bf16.msra.mxu0 %v2268
  %2761 = vmatprep.subr.bf16.mxu0 0
  %2762 = vmatpush1.bf16.msra.mxu0 %v2269
  %2763 = vmatprep.subr.bf16.mxu0 0
  %2764 = vmatpush1.bf16.msra.mxu0 %v2270
  %2765 = vmatprep.subr.bf16.mxu0 0
  %2766 = vmatpush1.bf16.msra.mxu0 %v2271
  %2767 = vmatprep.subr.bf16.mxu0 0
  %2768 = vmatpush1.bf16.msra.mxu0 %v2272
  %2769 = vmatprep.subr.bf16.mxu0 0
  %2770 = vmatpush1.bf16.msra.mxu0 %v2273
  %2771 = vmatprep.subr.bf16.mxu0 0
  %2772 = vmatpush1.bf16.msra.mxu0 %v2274
  %2773 = vmatprep.subr.bf16.mxu0 0
  %2774 = vmatpush1.bf16.msra.mxu0 0
  %2775 = vmatprep.subr.bf16.mxu0 0
  %2776 = vmatpush1.bf16.msra.mxu0 0
  %2777 = vmatprep.subr.bf16.mxu0 0
  %2778 = vmatpush1.bf16.msra.mxu0 0
  %2779 = vmatprep.subr.bf16.mxu0 0
  %2780 = vmatpush1.bf16.msra.mxu0 0
  %2781 = vmatprep.subr.bf16.mxu0 0
  %2782 = vmatpush1.bf16.msra.mxu0 0
  %2783 = vmatprep.subr.bf16.mxu0 0
  %2784 = vmatpush1.bf16.msra.mxu0 0
  %2785 = vmatprep.subr.bf16.mxu0 0
  %2786 = vmatpush1.bf16.msra.mxu0 0
  %2787 = vmatprep.subr.bf16.mxu0 0
  %2788 = vmatpush1.bf16.msra.mxu0 0
  %2789 = vmatprep.mubr.bf16.mxu0 0
  %2790 = vmatmul.mubr.bf16.gmra.mrb[0].mxu0 %v2743
  %v2791 = vpop.f32.mrb[0].mxu0
  %v2792 = vadd.f32 %v2755, %v2791
  %v2793 = vpop.f32.mrb[0].mxu0
  %v2794 = vpop.f32.mrb[0].mxu0
  %v2795 = vadd.f32 %v2755, %v2794
  %v2796 = vpop.f32.mrb[0].mxu0
  %2797 = vmatprep.mubr.bf16.mxu0 0
  %2798 = vmatmul.mubr.bf16.gmra.mrb[0].mxu0 %v2744
  %v2799 = vpop.f32.mrb[0].mxu0
  %v2800 = vadd.f32 %v2755, %v2799
  %v2801 = vpop.f32.mrb[0].mxu0
  %v2802 = vpop.f32.mrb[0].mxu0
  %v2803 = vadd.f32 %v2755, %v2802
  %v2804 = vpop.f32.mrb[0].mxu0
  %2805 = vmatprep.mubr.bf16.mxu0 0
  %2806 = vmatmul.mubr.bf16.gmra.mrb[0].mxu0 %v2745
  %v2807 = vpop.f32.mrb[0].mxu0
  %v2808 = vadd.f32 %v2755, %v2807
  %v2809 = vpop.f32.mrb[0].mxu0
  %v2810 = vpop.f32.mrb[0].mxu0
  %v2811 = vadd.f32 %v2755, %v2810
  %v2812 = vpop.f32.mrb[0].mxu0
  %2813 = vmatprep.mubr.bf16.mxu0 0
  %2814 = vmatmul.mubr.bf16.gmra.mrb[0].mxu0 %v2746
  %v2815 = vpop.f32.mrb[0].mxu0
  %v2816 = vadd.f32 %v2755, %v2815
  %v2817 = vpop.f32.mrb[0].mxu0
  %v2818 = vpop.f32.mrb[0].mxu0
  %v2819 = vadd.f32 %v2755, %v2818
  %v2820 = vpop.f32.mrb[0].mxu0
  %2821 = vmatprep.mubr.bf16.mxu0 0
  %2822 = vmatmul.mubr.bf16.gmra.mrb[0].mxu0 %v2747
  %v2823 = vpop.f32.mrb[0].mxu0
  %v2824 = vadd.f32 %v2755, %v2823
  %v2825 = vpop.f32.mrb[0].mxu0
  %v2826 = vpop.f32.mrb[0].mxu0
  %v2827 = vadd.f32 %v2755, %v2826
  %v2828 = vpop.f32.mrb[0].mxu0
  %2829 = vmatprep.mubr.bf16.mxu0 0
  %2830 = vmatmul.mubr.bf16.gmra.mrb[0].mxu0 %v2748
  %v2831 = vpop.f32.mrb[0].mxu0
  %v2832 = vadd.f32 %v2755, %v2831
  %v2833 = vpop.f32.mrb[0].mxu0
  %v2834 = vpop.f32.mrb[0].mxu0
  %v2835 = vadd.f32 %v2755, %v2834
  %v2836 = vpop.f32.mrb[0].mxu0
  %2837 = vmatprep.mubr.bf16.mxu0 0
  %2838 = vmatmul.mubr.bf16.gmra.mrb[0].mxu0 %v2749
  %v2839 = vpop.f32.mrb[0].mxu0
  %v2840 = vadd.f32 %v2755, %v2839
  %v2841 = vpop.f32.mrb[0].mxu0
  %v2842 = vpop.f32.mrb[0].mxu0
  %v2843 = vadd.f32 %v2755, %v2842
  %v2844 = vpop.f32.mrb[0].mxu0
  %2845 = vmatprep.mubr.bf16.mxu0 0
  %2846 = vmatmul.mubr.bf16.gmra.mrb[0].mxu0 %v2750
  %v2847 = vpop.f32.mrb[0].mxu0
  %v2848 = vadd.f32 %v2755, %v2847
  %v2849 = vpop.f32.mrb[0].mxu0
  %v2850 = vpop.f32.mrb[0].mxu0
  %v2851 = vadd.f32 %v2755, %v2850
  %v2852 = vpop.f32.mrb[0].mxu0
  %2853 = vdwg.mxu0
  %2854 = vst.msk [vmem:[%s8] sm:$0xff] %vm270, %v2792
  %2855 = vst.msk [vmem:[%s8 + $0x8] sm:$0xff] %vm270, %v2795
  %2856 = vst.msk [vmem:[%s8 + $0x10] sm:$0xff] %vm270, %v2800
  %2857 = vst.msk [vmem:[%s8 + $0x18] sm:$0xff] %vm270, %v2803
  %2858 = vst.msk [vmem:[%s8 + $0x20] sm:$0xff] %vm270, %v2808
  %2859 = vst.msk [vmem:[%s8 + $0x28] sm:$0xff] %vm270, %v2811
  %2860 = vst.msk [vmem:[%s8 + $0x30] sm:$0xff] %vm270, %v2816
  %2861 = vst.msk [vmem:[%s8 + $0x38] sm:$0xff] %vm270, %v2819
  %2862 = vst.msk [vmem:[%s8 + $0x40] sm:$0xff] %vm270, %v2824
  %2863 = vst.msk [vmem:[%s8 + $0x48] sm:$0xff] %vm270, %v2827
  %2864 = vst.msk [vmem:[%s8 + $0x50] sm:$0xff] %vm270, %v2832
  %2865 = vst.msk [vmem:[%s8 + $0x58] sm:$0xff] %vm270, %v2835
  %2866 = vst.msk [vmem:[%s8 + $0x60] sm:$0xff] %vm270, %v2840
  %2867 = vst.msk [vmem:[%s8 + $0x68] sm:$0xff] %vm270, %v2843
  %2868 = vst.msk [vmem:[%s8 + $0x70] sm:$0xff] %vm270, %v2848
  %2869 = vst.msk [vmem:[%s8 + $0x78] sm:$0xff] %vm270, %v2851
  // Predicated region
  $region34: #{tpu_custom_call.1} parent=0 // pred_check
    _
  $region35: #{tpu_custom_call.1} parent=0 // pred_check_branch
    %2871 = sbr.rel (0) target = $region37
  $region36: #{tpu_custom_call.1} parent=0 // pred_region
    _
  $region37: #{tpu_custom_call.1} parent=0 // pred_fallthru
    _
  // Predicated region
  $region38: #{tpu_custom_call.1} parent=0 // pred_check
    _
  $region39: #{tpu_custom_call.1} parent=0 // pred_check_branch
    %2873 = sbr.rel (0) target = $region41
  $region40: #{tpu_custom_call.1} parent=0 // pred_region
    _
  $region41: #{tpu_custom_call.1} parent=0 // pred_fallthru
    _

</llo_original>
